<compile_context>
chip_gen: v7x
topology: tpu7x:2x2x1
jax: 0.10.0
libtpu: 0.0.40
codegen_flags: <defaults>
</compile_context>

<pallas_src>
import functools

import jax
import jax.numpy as jnp
from jax.experimental import pallas as pl
from jax.experimental.pallas import tpu as pltpu


def _fused_convlstm_kernel(x_ref, w_ref, b_ref, out_h_ref, out_c_ref,
                           xh_ref, c_ref, col_ref, *,
                           K, H, W, halo, num_layers, cpad):
    """One grid point = one (batch, step, layer) ConvLSTMCell update.

    x_ref  : (1, Hp, Wp, Cpad)      padded input frame of this batch element
    w_ref  : (L, KK2C, 4*Cpad)      packed im2col conv weights (bf16, resident)
    b_ref  : (L, 1, 4*Cpad)         gate biases
    out_h_ref/out_c_ref             per-step last-layer h / last-layer c
    xh_ref : (L+1, Hp, Wp, Cpad)    slab 0 = padded input, slab l+1 = layer l's
                                    padded hidden state (VMEM, persists)
    c_ref  : (L, H*W, Cpad)         cell states (VMEM, persists)
    col_ref: (H*W, KK2C)            bf16 im2col slab (tail columns stay zero)
    """
    s = pl.program_id(1)
    l = pl.program_id(2)

    # ---- per-batch-element init: zero h/c state (+ conv halos), stage input --
    @pl.when(jnp.logical_and(s == 0, l == 0))
    def _init():
        xh_ref[...] = jnp.zeros_like(xh_ref)
        c_ref[...] = jnp.zeros_like(c_ref)
        col_ref[...] = jnp.zeros_like(col_ref)   # keep padded K-columns at 0
        xh_ref[0] = x_ref[0]                     # padded input frame -> slab 0

    # ---- im2col: all K*K taps of the layer input (slab l) and of the layer's
    #      own hidden state (slab l+1) -> one (H*W, 2*K*K*Cpad) bf16 slab. -----
    col = 0
    for base in (l, l + 1):
        for kh in range(K):
            for kw in range(K):
                patch = xh_ref[pl.ds(base, 1), pl.ds(kh, H), pl.ds(kw, W), :]
                col_ref[:, col:col + cpad] = (
                    patch.reshape(H * W, cpad).astype(jnp.bfloat16))
                col += cpad

    # ---- all 4 gates in a single MXU matmul, f32 accumulation ---------------
    gates = jnp.dot(col_ref[...], w_ref[l],
                    preferred_element_type=jnp.float32)
    gates = gates + b_ref[l]

    c_prev = c_ref[l]
    gi = gates[:, 0 * cpad:1 * cpad]
    gf = gates[:, 1 * cpad:2 * cpad]
    gc = gates[:, 2 * cpad:3 * cpad]
    go = gates[:, 3 * cpad:4 * cpad]

    # Peephole terms omitted: Wci/Wcf/Wco are zero-initialized in init_hidden()
    # and never trained in this forward pass, so they contribute exactly zero.
    i_t = jax.nn.sigmoid(gi)
    f_t = jax.nn.sigmoid(gf)
    c_new = f_t * c_prev + i_t * jnp.tanh(gc)
    o_t = jax.nn.sigmoid(go)
    h_new = o_t * jnp.tanh(c_new)

    c_ref[l] = c_new
    h_img = h_new.reshape(H, W, cpad)
    # write the new hidden state into the interior of this layer's padded slab
    xh_ref[pl.ds(l + 1, 1), pl.ds(halo, H), pl.ds(halo, W), :] = h_img[None]

    # last layer: emit this step's output h (and the running cell state)
    @pl.when(l == num_layers - 1)
    def _emit():
        out_h_ref[0] = h_img
        out_c_ref[0] = c_new.reshape(H, W, cpad)


def _pack_params(params, input_channels, hidden_channels, kernel_size,
                 cpad, kk2c):
    """Stack all layers' conv weights into one zero-padded, bf16, im2col-ready
    tensor: W_all[l] : (kk2c, 4*cpad). Row order: (x-taps | h-taps) x (kh, kw,
    cin); column order: (gate, cout). Zero padding keeps padded channels at 0."""
    K = kernel_size
    L = len(hidden_channels)
    g4 = 4 * cpad
    rows = 2 * K * K * cpad
    in_chans = [input_channels] + list(hidden_channels)
    w_all = jnp.zeros((L, kk2c, g4), jnp.float32)
    b_all = jnp.zeros((L, 1, g4), jnp.float32)
    for lyr, prm in enumerate(params):
        cin = in_chans[lyr]
        ch = hidden_channels[lyr]
        wx = prm["wx"].reshape(K, K, cin, 4, ch)
        wx = jnp.pad(wx, ((0, 0), (0, 0), (0, cpad - cin),
                          (0, 0), (0, cpad - ch)))
        wx = wx.reshape(K * K * cpad, g4)
        wh = prm["wh"].reshape(K, K, ch, 4, ch)
        wh = jnp.pad(wh, ((0, 0), (0, 0), (0, cpad - ch),
                          (0, 0), (0, cpad - ch)))
        wh = wh.reshape(K * K * cpad, g4)
        w_all = w_all.at[lyr, :rows, :].set(jnp.concatenate([wx, wh], axis=0))
        b = jnp.pad(prm["bias"].reshape(1, 4, ch),
                    ((0, 0), (0, 0), (0, cpad - ch)))
        b_all = b_all.at[lyr].set(b.reshape(1, g4))
    # bf16 operands: MXU-native on v5e/v6e/v7x; gate math stays f32.
    return w_all.astype(jnp.bfloat16), b_all


def convlstm_forward(input_matrix, params, hidden_channels, kernel_size,
                     step, effective_step):
    """Mirrors ConvLSTM.forward. input_matrix: (B, H, W, Cin) NHWC float32.
    Returns (outputs, (last_h, last_c)) like the PyTorch module."""
    B, H, W, Cin = input_matrix.shape
    L = len(hidden_channels)
    K = kernel_size
    halo = (K - 1) // 2        # 'same' conv, odd K (as in the PyTorch module)
    # common channel width, lane-friendly (4*cpad is a multiple of 128)
    cpad = max([Cin] + list(hidden_channels))
    cpad = ((cpad + 31) // 32) * 32
    Hp, Wp = H + 2 * halo, W + 2 * halo
    g4 = 4 * cpad
    kk2c = ((2 * K * K * cpad + 127) // 128) * 128   # MXU/lane-aligned K dim

    w_all, b_all = _pack_params(params, Cin, list(hidden_channels), K,
                                cpad, kk2c)

    # one-time spatial + channel zero pad of the step-invariant input frame;
    # hidden-state padding is done in-kernel (halo zeroed once per batch elem).
    x_pad = jnp.pad(input_matrix,
                    ((0, 0), (halo, halo), (halo, halo), (0, cpad - Cin)))

    kernel = functools.partial(_fused_convlstm_kernel, K=K, H=H, W=W,
                               halo=halo, num_layers=L, cpad=cpad)

    grid_spec = pltpu.PrefetchScalarGridSpec(
        num_scalar_prefetch=0,
        grid=(B, step, L),                       # layer innermost, then step
        in_specs=[
            # padded input frame: re-fetched only when the batch index changes
            pl.BlockSpec((1, Hp, Wp, cpad), lambda b, s, l: (b, 0, 0, 0)),
            # all layers' packed weights / biases: DMA'd once, VMEM-resident
            pl.BlockSpec((L, kk2c, g4), lambda b, s, l: (0, 0, 0)),
            pl.BlockSpec((L, 1, g4), lambda b, s, l: (0, 0, 0)),
        ],
        out_specs=[
            # last-layer h for every step; leading dim flattened to step*B
            pl.BlockSpec((1, H, W, cpad), lambda b, s, l: (s * B + b, 0, 0, 0)),
            # last-layer c (overwritten each step; final step's value survives)
            pl.BlockSpec((1, H, W, cpad), lambda b, s, l: (b, 0, 0, 0)),
        ],
        scratch_shapes=[
            # slab 0 = padded input; slab l+1 = layer l's padded hidden state
            pltpu.VMEM((L + 1, Hp, Wp, cpad), jnp.float32),
            pltpu.VMEM((L, H * W, cpad), jnp.float32),       # cell states
            pltpu.VMEM((H * W, kk2c), jnp.bfloat16),         # im2col slab
        ],
    )

    h_flat, c_last = pl.pallas_call(
        kernel,
        grid_spec=grid_spec,
        out_shape=(
            jax.ShapeDtypeStruct((step * B, H, W, cpad), jnp.float32),
            jax.ShapeDtypeStruct((B, H, W, cpad), jnp.float32),
        ),
        compiler_params=pltpu.CompilerParams(
            dimension_semantics=("parallel", "arbitrary", "arbitrary")),
    )(x_pad, w_all, b_all)

    ch_last = hidden_channels[-1]
    h_all = h_flat.reshape(step, B, H, W, cpad)[..., :ch_last]
    outputs = [h_all[s] for s in effective_step if 0 <= s < step]
    last_h = h_all[step - 1]
    last_c = c_last[..., :ch_last]
    return outputs, (last_h, last_c)


def init_convlstm_params(key, input_channels, hidden_channels, kernel_size):
    """Deterministic init; shapes match the PyTorch module's convs. Gates are
    stacked (i, f, c, o) along the conv output-channel dim; only the x-convs
    carry a bias, exactly like the reference. Peephole tensors (Wci/Wcf/Wco)
    are zero in init_hidden() and therefore not materialized here."""
    in_chans = [input_channels] + list(hidden_channels)
    params = []
    for layer, ch in enumerate(hidden_channels):
        cin = in_chans[layer]
        key, kx, kh, kb = jax.random.split(key, 4)
        wx = 0.1 * jax.random.normal(
            kx, (kernel_size, kernel_size, cin, 4 * ch), jnp.float32)
        wh = 0.1 * jax.random.normal(
            kh, (kernel_size, kernel_size, ch, 4 * ch), jnp.float32)
        bias = 0.1 * jax.random.normal(kb, (1, 4 * ch), jnp.float32)
        params.append(dict(wx=wx, wh=wh, bias=bias))
    return params


def _reference_forward(x, params, hidden_channels, kernel_size, step,
                       effective_step):
    """Pure-JAX (lax.conv) reference mirroring the PyTorch forward."""
    def conv(inp, w):
        return jax.lax.conv_general_dilated(
            inp, w, window_strides=(1, 1), padding="SAME",
            dimension_numbers=("NHWC", "HWIO", "NHWC"))

    B, H, W, _ = x.shape
    internal = []
    outputs = []
    xx = x
    for s in range(step):
        xx = x
        for i, ch in enumerate(hidden_channels):
            if s == 0:
                internal.append((jnp.zeros((B, H, W, ch), jnp.float32),
                                 jnp.zeros((B, H, W, ch), jnp.float32)))
            h, c = internal[i]
            prm = params[i]
            gates = (conv(xx, prm["wx"]) + conv(h, prm["wh"])
                     + prm["bias"].reshape(1, 1, 1, -1))
            gi, gf, gc, go = (gates[..., k * ch:(k + 1) * ch] for k in range(4))
            i_t = jax.nn.sigmoid(gi)
            f_t = jax.nn.sigmoid(gf)
            cc = f_t * c + i_t * jnp.tanh(gc)
            o_t = jax.nn.sigmoid(go)
            xx = o_t * jnp.tanh(cc)
            internal[i] = (xx, cc)
        if s in effective_step:
            outputs.append(xx)
    return outputs, (xx, internal[-1][1])


if __name__ == "__main__":
    batch = 2
    input_channels = 4
    hidden_channels = [32, 32]     # hidden_channels % 2 == 0
    kernel_size = 3
    height = width = 16
    step = 2
    effective_step = [1]

    key = jax.random.PRNGKey(0)
    key, kin = jax.random.split(key)
    # layout: NHWC (equivalent PyTorch reference input would be NCHW (2,4,16,16))
    x = jax.random.normal(kin, (batch, height, width, input_channels),
                          jnp.float32)
    params = init_convlstm_params(key, input_channels, hidden_channels,
                                  kernel_size)

    fwd = jax.jit(functools.partial(
        convlstm_forward, hidden_channels=tuple(hidden_channels),
        kernel_size=kernel_size, step=step,
        effective_step=tuple(effective_step)))
    outputs, (last_h, last_c) = fwd(x, params)

    for o in outputs:
        jax.block_until_ready(o)
    jax.block_until_ready(last_h)
    jax.block_until_ready(last_c)

    assert last_h.shape == (batch, height, width, hidden_channels[-1])
    assert last_c.shape == (batch, height, width, hidden_channels[-1])
    assert len(outputs) == len(effective_step)

    # Numerical check against a pure-JAX (lax.conv) reference of the module
    # (loose tolerance: kernel uses bf16 MXU operands with f32 accumulation).
    ref_outputs, (ref_h, ref_c) = _reference_forward(
        x, params, hidden_channels, kernel_size, step, effective_step)
    err = max(
        float(jnp.max(jnp.abs(outputs[0] - ref_outputs[0]))),
        float(jnp.max(jnp.abs(last_h - ref_h))),
        float(jnp.max(jnp.abs(last_c - ref_c))),
    )
    assert err < 5e-2, f"mismatch vs reference: max abs err {err}"

    print("KERNEL_OK")
</pallas_src>

<mosaic_0001>
module attributes {stable_mosaic.version = 11 : i64} {
  func.func @_fused_convlstm_kernel(%arg0: i32, %arg1: i32, %arg2: i32, %arg3: memref<1x18x18x32xf32, #tpu.memory_space<vmem>>, %arg4: memref<2x640x128xbf16, #tpu.memory_space<vmem>>, %arg5: memref<2x1x128xf32, #tpu.memory_space<vmem>>, %arg6: memref<1x16x16x32xf32, #tpu.memory_space<vmem>>, %arg7: memref<1x16x16x32xf32, #tpu.memory_space<vmem>>, %arg8: memref<3x18x18x32xf32, #tpu.memory_space<vmem>>, %arg9: memref<2x256x32xf32, #tpu.memory_space<vmem>>, %arg10: memref<256x640xbf16, #tpu.memory_space<vmem>>) attributes {dimension_semantics = [#tpu.dimension_semantics<parallel>, #tpu.dimension_semantics<arbitrary>, #tpu.dimension_semantics<arbitrary>], iteration_bounds = array<i64: 2, 2, 2>, scalar_prefetch = 0 : i64, scratch_operands = 3 : i64, tpu.core_type = #tpu.core_type<tc>, window_params = [{transform_indices = @transform_0, window_bounds = array<i64: 1, 18, 18, 32>}, {pipeline_mode = #tpu.pipeline_mode<synchronous>, transform_indices = @transform_1, window_bounds = array<i64: 2, 640, 128>}, {pipeline_mode = #tpu.pipeline_mode<synchronous>, transform_indices = @transform_2, window_bounds = array<i64: 2, 1, 128>}, {transform_indices = @transform_3, window_bounds = array<i64: 1, 16, 16, 32>}, {transform_indices = @transform_4, window_bounds = array<i64: 1, 16, 16, 32>}]} {
    %c0_i32 = arith.constant 0 : i32
    %0 = arith.cmpi eq, %arg1, %c0_i32 : i32
    %c0_i32_0 = arith.constant 0 : i32
    %1 = arith.cmpi eq, %arg2, %c0_i32_0 : i32
    %2 = arith.andi %0, %1 : i1
    %3 = arith.extui %2 : i1 to i32
    %c0_i32_1 = arith.constant 0 : i32
    %4 = arith.cmpi ne, %3, %c0_i32_1 : i32
    scf.if %4 {
      %cst_91 = arith.constant 0.000000e+00 : f32
      %146 = vector.broadcast %cst_91 : f32 to vector<3x18x18x32xf32>
      %c0_92 = arith.constant 0 : index
      %c0_93 = arith.constant 0 : index
      %c0_94 = arith.constant 0 : index
      %c0_95 = arith.constant 0 : index
      %147 = vector.load %arg8[%c0_92, %c0_93, %c0_94, %c0_95] : memref<3x18x18x32xf32, #tpu.memory_space<vmem>>, vector<3x18x18x32xf32>
      tpu.vector_store %arg8[%c0_92, %c0_93, %c0_94, %c0_95], %146 {strides = array<i32>} : memref<3x18x18x32xf32, #tpu.memory_space<vmem>>, vector<3x18x18x32xf32>,
      %cst_96 = arith.constant 0.000000e+00 : f32
      %148 = vector.broadcast %cst_96 : f32 to vector<2x256x32xf32>
      %c0_97 = arith.constant 0 : index
      %c0_98 = arith.constant 0 : index
      %c0_99 = arith.constant 0 : index
      %149 = vector.load %arg9[%c0_97, %c0_98, %c0_99] : memref<2x256x32xf32, #tpu.memory_space<vmem>>, vector<2x256x32xf32>
      tpu.vector_store %arg9[%c0_97, %c0_98, %c0_99], %148 {strides = array<i32>} : memref<2x256x32xf32, #tpu.memory_space<vmem>>, vector<2x256x32xf32>,
      %cst_100 = arith.constant 0.000000e+00 : bf16
      %150 = vector.broadcast %cst_100 : bf16 to vector<256x640xbf16>
      %c0_101 = arith.constant 0 : index
      %c0_102 = arith.constant 0 : index
      %151 = vector.load %arg10[%c0_101, %c0_102] : memref<256x640xbf16, #tpu.memory_space<vmem>>, vector<256x640xbf16>
      tpu.vector_store %arg10[%c0_101, %c0_102], %150 {strides = array<i32>} : memref<256x640xbf16, #tpu.memory_space<vmem>>, vector<256x640xbf16>,
      %c0_103 = arith.constant 0 : index
      %c0_104 = arith.constant 0 : index
      %c0_105 = arith.constant 0 : index
      %c0_106 = arith.constant 0 : index
      %152 = vector.load %arg3[%c0_103, %c0_104, %c0_105, %c0_106] : memref<1x18x18x32xf32, #tpu.memory_space<vmem>>, vector<1x18x18x32xf32>
      %153 = vector.shape_cast %152 : vector<1x18x18x32xf32> to vector<18x18x32xf32>
      %c0_107 = arith.constant 0 : index
      %c0_108 = arith.constant 0 : index
      %c0_109 = arith.constant 0 : index
      %c0_110 = arith.constant 0 : index
      %154 = vector.load %arg8[%c0_107, %c0_108, %c0_109, %c0_110] : memref<3x18x18x32xf32, #tpu.memory_space<vmem>>, vector<1x18x18x32xf32>
      %155 = vector.shape_cast %154 : vector<1x18x18x32xf32> to vector<18x18x32xf32>
      %156 = vector.shape_cast %153 : vector<18x18x32xf32> to vector<1x18x18x32xf32>
      tpu.vector_store %arg8[%c0_107, %c0_108, %c0_109, %c0_110], %156 {strides = array<i32>} : memref<3x18x18x32xf32, #tpu.memory_space<vmem>>, vector<1x18x18x32xf32>,
    } else {
    }
    %c1_i32 = arith.constant 1 : i32
    %5 = arith.addi %arg2, %c1_i32 : i32
    %6 = arith.index_cast %arg2 : i32 to index
    %c0 = arith.constant 0 : index
    %c0_2 = arith.constant 0 : index
    %c0_3 = arith.constant 0 : index
    %7 = vector.load %arg8[%6, %c0, %c0_2, %c0_3] : memref<3x18x18x32xf32, #tpu.memory_space<vmem>>, vector<1x16x16x32xf32>
    %8 = vector.shape_cast %7 : vector<1x16x16x32xf32> to vector<256x32xf32>
    %9 = arith.truncf %8 : vector<256x32xf32> to vector<256x32xbf16>
    %c0_4 = arith.constant 0 : index
    %c0_5 = arith.constant 0 : index
    %10 = vector.load %arg10[%c0_4, %c0_5] : memref<256x640xbf16, #tpu.memory_space<vmem>>, vector<256x32xbf16>
    tpu.vector_store %arg10[%c0_4, %c0_5], %9 {strides = array<i32>} : memref<256x640xbf16, #tpu.memory_space<vmem>>, vector<256x32xbf16>,
    %11 = arith.index_cast %arg2 : i32 to index
    %c0_6 = arith.constant 0 : index
    %c1 = arith.constant 1 : index
    %c0_7 = arith.constant 0 : index
    %12 = vector.load %arg8[%11, %c0_6, %c1, %c0_7] : memref<3x18x18x32xf32, #tpu.memory_space<vmem>>, vector<1x16x16x32xf32>
    %13 = vector.shape_cast %12 : vector<1x16x16x32xf32> to vector<256x32xf32>
    %14 = arith.truncf %13 : vector<256x32xf32> to vector<256x32xbf16>
    %c0_8 = arith.constant 0 : index
    %c32 = arith.constant 32 : index
    %15 = vector.load %arg10[%c0_8, %c32] : memref<256x640xbf16, #tpu.memory_space<vmem>>, vector<256x32xbf16>
    tpu.vector_store %arg10[%c0_8, %c32], %14 {strides = array<i32>} : memref<256x640xbf16, #tpu.memory_space<vmem>>, vector<256x32xbf16>,
    %16 = arith.index_cast %arg2 : i32 to index
    %c0_9 = arith.constant 0 : index
    %c2 = arith.constant 2 : index
    %c0_10 = arith.constant 0 : index
    %17 = vector.load %arg8[%16, %c0_9, %c2, %c0_10] : memref<3x18x18x32xf32, #tpu.memory_space<vmem>>, vector<1x16x16x32xf32>
    %18 = vector.shape_cast %17 : vector<1x16x16x32xf32> to vector<256x32xf32>
    %19 = arith.truncf %18 : vector<256x32xf32> to vector<256x32xbf16>
    %c0_11 = arith.constant 0 : index
    %c64 = arith.constant 64 : index
    %20 = vector.load %arg10[%c0_11, %c64] : memref<256x640xbf16, #tpu.memory_space<vmem>>, vector<256x32xbf16>
    tpu.vector_store %arg10[%c0_11, %c64], %19 {strides = array<i32>} : memref<256x640xbf16, #tpu.memory_space<vmem>>, vector<256x32xbf16>,
    %21 = arith.index_cast %arg2 : i32 to index
    %c1_12 = arith.constant 1 : index
    %c0_13 = arith.constant 0 : index
    %c0_14 = arith.constant 0 : index
    %22 = vector.load %arg8[%21, %c1_12, %c0_13, %c0_14] : memref<3x18x18x32xf32, #tpu.memory_space<vmem>>, vector<1x16x16x32xf32>
    %23 = vector.shape_cast %22 : vector<1x16x16x32xf32> to vector<256x32xf32>
    %24 = arith.truncf %23 : vector<256x32xf32> to vector<256x32xbf16>
    %c0_15 = arith.constant 0 : index
    %c96 = arith.constant 96 : index
    %25 = vector.load %arg10[%c0_15, %c96] : memref<256x640xbf16, #tpu.memory_space<vmem>>, vector<256x32xbf16>
    tpu.vector_store %arg10[%c0_15, %c96], %24 {strides = array<i32>} : memref<256x640xbf16, #tpu.memory_space<vmem>>, vector<256x32xbf16>,
    %26 = arith.index_cast %arg2 : i32 to index
    %c1_16 = arith.constant 1 : index
    %c1_17 = arith.constant 1 : index
    %c0_18 = arith.constant 0 : index
    %27 = vector.load %arg8[%26, %c1_16, %c1_17, %c0_18] : memref<3x18x18x32xf32, #tpu.memory_space<vmem>>, vector<1x16x16x32xf32>
    %28 = vector.shape_cast %27 : vector<1x16x16x32xf32> to vector<256x32xf32>
    %29 = arith.truncf %28 : vector<256x32xf32> to vector<256x32xbf16>
    %c0_19 = arith.constant 0 : index
    %c128 = arith.constant 128 : index
    %30 = vector.load %arg10[%c0_19, %c128] : memref<256x640xbf16, #tpu.memory_space<vmem>>, vector<256x32xbf16>
    tpu.vector_store %arg10[%c0_19, %c128], %29 {strides = array<i32>} : memref<256x640xbf16, #tpu.memory_space<vmem>>, vector<256x32xbf16>,
    %31 = arith.index_cast %arg2 : i32 to index
    %c1_20 = arith.constant 1 : index
    %c2_21 = arith.constant 2 : index
    %c0_22 = arith.constant 0 : index
    %32 = vector.load %arg8[%31, %c1_20, %c2_21, %c0_22] : memref<3x18x18x32xf32, #tpu.memory_space<vmem>>, vector<1x16x16x32xf32>
    %33 = vector.shape_cast %32 : vector<1x16x16x32xf32> to vector<256x32xf32>
    %34 = arith.truncf %33 : vector<256x32xf32> to vector<256x32xbf16>
    %c0_23 = arith.constant 0 : index
    %c160 = arith.constant 160 : index
    %35 = vector.load %arg10[%c0_23, %c160] : memref<256x640xbf16, #tpu.memory_space<vmem>>, vector<256x32xbf16>
    tpu.vector_store %arg10[%c0_23, %c160], %34 {strides = array<i32>} : memref<256x640xbf16, #tpu.memory_space<vmem>>, vector<256x32xbf16>,
    %36 = arith.index_cast %arg2 : i32 to index
    %c2_24 = arith.constant 2 : index
    %c0_25 = arith.constant 0 : index
    %c0_26 = arith.constant 0 : index
    %37 = vector.load %arg8[%36, %c2_24, %c0_25, %c0_26] : memref<3x18x18x32xf32, #tpu.memory_space<vmem>>, vector<1x16x16x32xf32>
    %38 = vector.shape_cast %37 : vector<1x16x16x32xf32> to vector<256x32xf32>
    %39 = arith.truncf %38 : vector<256x32xf32> to vector<256x32xbf16>
    %c0_27 = arith.constant 0 : index
    %c192 = arith.constant 192 : index
    %40 = vector.load %arg10[%c0_27, %c192] : memref<256x640xbf16, #tpu.memory_space<vmem>>, vector<256x32xbf16>
    tpu.vector_store %arg10[%c0_27, %c192], %39 {strides = array<i32>} : memref<256x640xbf16, #tpu.memory_space<vmem>>, vector<256x32xbf16>,
    %41 = arith.index_cast %arg2 : i32 to index
    %c2_28 = arith.constant 2 : index
    %c1_29 = arith.constant 1 : index
    %c0_30 = arith.constant 0 : index
    %42 = vector.load %arg8[%41, %c2_28, %c1_29, %c0_30] : memref<3x18x18x32xf32, #tpu.memory_space<vmem>>, vector<1x16x16x32xf32>
    %43 = vector.shape_cast %42 : vector<1x16x16x32xf32> to vector<256x32xf32>
    %44 = arith.truncf %43 : vector<256x32xf32> to vector<256x32xbf16>
    %c0_31 = arith.constant 0 : index
    %c224 = arith.constant 224 : index
    %45 = vector.load %arg10[%c0_31, %c224] : memref<256x640xbf16, #tpu.memory_space<vmem>>, vector<256x32xbf16>
    tpu.vector_store %arg10[%c0_31, %c224], %44 {strides = array<i32>} : memref<256x640xbf16, #tpu.memory_space<vmem>>, vector<256x32xbf16>,
    %46 = arith.index_cast %arg2 : i32 to index
    %c2_32 = arith.constant 2 : index
    %c2_33 = arith.constant 2 : index
    %c0_34 = arith.constant 0 : index
    %47 = vector.load %arg8[%46, %c2_32, %c2_33, %c0_34] : memref<3x18x18x32xf32, #tpu.memory_space<vmem>>, vector<1x16x16x32xf32>
    %48 = vector.shape_cast %47 : vector<1x16x16x32xf32> to vector<256x32xf32>
    %49 = arith.truncf %48 : vector<256x32xf32> to vector<256x32xbf16>
    %c0_35 = arith.constant 0 : index
    %c256 = arith.constant 256 : index
    %50 = vector.load %arg10[%c0_35, %c256] : memref<256x640xbf16, #tpu.memory_space<vmem>>, vector<256x32xbf16>
    tpu.vector_store %arg10[%c0_35, %c256], %49 {strides = array<i32>} : memref<256x640xbf16, #tpu.memory_space<vmem>>, vector<256x32xbf16>,
    %51 = arith.index_cast %5 : i32 to index
    %c0_36 = arith.constant 0 : index
    %c0_37 = arith.constant 0 : index
    %c0_38 = arith.constant 0 : index
    %52 = vector.load %arg8[%51, %c0_36, %c0_37, %c0_38] : memref<3x18x18x32xf32, #tpu.memory_space<vmem>>, vector<1x16x16x32xf32>
    %53 = vector.shape_cast %52 : vector<1x16x16x32xf32> to vector<256x32xf32>
    %54 = arith.truncf %53 : vector<256x32xf32> to vector<256x32xbf16>
    %c0_39 = arith.constant 0 : index
    %c288 = arith.constant 288 : index
    %55 = vector.load %arg10[%c0_39, %c288] : memref<256x640xbf16, #tpu.memory_space<vmem>>, vector<256x32xbf16>
    tpu.vector_store %arg10[%c0_39, %c288], %54 {strides = array<i32>} : memref<256x640xbf16, #tpu.memory_space<vmem>>, vector<256x32xbf16>,
    %56 = arith.index_cast %5 : i32 to index
    %c0_40 = arith.constant 0 : index
    %c1_41 = arith.constant 1 : index
    %c0_42 = arith.constant 0 : index
    %57 = vector.load %arg8[%56, %c0_40, %c1_41, %c0_42] : memref<3x18x18x32xf32, #tpu.memory_space<vmem>>, vector<1x16x16x32xf32>
    %58 = vector.shape_cast %57 : vector<1x16x16x32xf32> to vector<256x32xf32>
    %59 = arith.truncf %58 : vector<256x32xf32> to vector<256x32xbf16>
    %c0_43 = arith.constant 0 : index
    %c320 = arith.constant 320 : index
    %60 = vector.load %arg10[%c0_43, %c320] : memref<256x640xbf16, #tpu.memory_space<vmem>>, vector<256x32xbf16>
    tpu.vector_store %arg10[%c0_43, %c320], %59 {strides = array<i32>} : memref<256x640xbf16, #tpu.memory_space<vmem>>, vector<256x32xbf16>,
    %61 = arith.index_cast %5 : i32 to index
    %c0_44 = arith.constant 0 : index
    %c2_45 = arith.constant 2 : index
    %c0_46 = arith.constant 0 : index
    %62 = vector.load %arg8[%61, %c0_44, %c2_45, %c0_46] : memref<3x18x18x32xf32, #tpu.memory_space<vmem>>, vector<1x16x16x32xf32>
    %63 = vector.shape_cast %62 : vector<1x16x16x32xf32> to vector<256x32xf32>
    %64 = arith.truncf %63 : vector<256x32xf32> to vector<256x32xbf16>
    %c0_47 = arith.constant 0 : index
    %c352 = arith.constant 352 : index
    %65 = vector.load %arg10[%c0_47, %c352] : memref<256x640xbf16, #tpu.memory_space<vmem>>, vector<256x32xbf16>
    tpu.vector_store %arg10[%c0_47, %c352], %64 {strides = array<i32>} : memref<256x640xbf16, #tpu.memory_space<vmem>>, vector<256x32xbf16>,
    %66 = arith.index_cast %5 : i32 to index
    %c1_48 = arith.constant 1 : index
    %c0_49 = arith.constant 0 : index
    %c0_50 = arith.constant 0 : index
    %67 = vector.load %arg8[%66, %c1_48, %c0_49, %c0_50] : memref<3x18x18x32xf32, #tpu.memory_space<vmem>>, vector<1x16x16x32xf32>
    %68 = vector.shape_cast %67 : vector<1x16x16x32xf32> to vector<256x32xf32>
    %69 = arith.truncf %68 : vector<256x32xf32> to vector<256x32xbf16>
    %c0_51 = arith.constant 0 : index
    %c384 = arith.constant 384 : index
    %70 = vector.load %arg10[%c0_51, %c384] : memref<256x640xbf16, #tpu.memory_space<vmem>>, vector<256x32xbf16>
    tpu.vector_store %arg10[%c0_51, %c384], %69 {strides = array<i32>} : memref<256x640xbf16, #tpu.memory_space<vmem>>, vector<256x32xbf16>,
    %71 = arith.index_cast %5 : i32 to index
    %c1_52 = arith.constant 1 : index
    %c1_53 = arith.constant 1 : index
    %c0_54 = arith.constant 0 : index
    %72 = vector.load %arg8[%71, %c1_52, %c1_53, %c0_54] : memref<3x18x18x32xf32, #tpu.memory_space<vmem>>, vector<1x16x16x32xf32>
    %73 = vector.shape_cast %72 : vector<1x16x16x32xf32> to vector<256x32xf32>
    %74 = arith.truncf %73 : vector<256x32xf32> to vector<256x32xbf16>
    %c0_55 = arith.constant 0 : index
    %c416 = arith.constant 416 : index
    %75 = vector.load %arg10[%c0_55, %c416] : memref<256x640xbf16, #tpu.memory_space<vmem>>, vector<256x32xbf16>
    tpu.vector_store %arg10[%c0_55, %c416], %74 {strides = array<i32>} : memref<256x640xbf16, #tpu.memory_space<vmem>>, vector<256x32xbf16>,
    %76 = arith.index_cast %5 : i32 to index
    %c1_56 = arith.constant 1 : index
    %c2_57 = arith.constant 2 : index
    %c0_58 = arith.constant 0 : index
    %77 = vector.load %arg8[%76, %c1_56, %c2_57, %c0_58] : memref<3x18x18x32xf32, #tpu.memory_space<vmem>>, vector<1x16x16x32xf32>
    %78 = vector.shape_cast %77 : vector<1x16x16x32xf32> to vector<256x32xf32>
    %79 = arith.truncf %78 : vector<256x32xf32> to vector<256x32xbf16>
    %c0_59 = arith.constant 0 : index
    %c448 = arith.constant 448 : index
    %80 = vector.load %arg10[%c0_59, %c448] : memref<256x640xbf16, #tpu.memory_space<vmem>>, vector<256x32xbf16>
    tpu.vector_store %arg10[%c0_59, %c448], %79 {strides = array<i32>} : memref<256x640xbf16, #tpu.memory_space<vmem>>, vector<256x32xbf16>,
    %81 = arith.index_cast %5 : i32 to index
    %c2_60 = arith.constant 2 : index
    %c0_61 = arith.constant 0 : index
    %c0_62 = arith.constant 0 : index
    %82 = vector.load %arg8[%81, %c2_60, %c0_61, %c0_62] : memref<3x18x18x32xf32, #tpu.memory_space<vmem>>, vector<1x16x16x32xf32>
    %83 = vector.shape_cast %82 : vector<1x16x16x32xf32> to vector<256x32xf32>
    %84 = arith.truncf %83 : vector<256x32xf32> to vector<256x32xbf16>
    %c0_63 = arith.constant 0 : index
    %c480 = arith.constant 480 : index
    %85 = vector.load %arg10[%c0_63, %c480] : memref<256x640xbf16, #tpu.memory_space<vmem>>, vector<256x32xbf16>
    tpu.vector_store %arg10[%c0_63, %c480], %84 {strides = array<i32>} : memref<256x640xbf16, #tpu.memory_space<vmem>>, vector<256x32xbf16>,
    %86 = arith.index_cast %5 : i32 to index
    %c2_64 = arith.constant 2 : index
    %c1_65 = arith.constant 1 : index
    %c0_66 = arith.constant 0 : index
    %87 = vector.load %arg8[%86, %c2_64, %c1_65, %c0_66] : memref<3x18x18x32xf32, #tpu.memory_space<vmem>>, vector<1x16x16x32xf32>
    %88 = vector.shape_cast %87 : vector<1x16x16x32xf32> to vector<256x32xf32>
    %89 = arith.truncf %88 : vector<256x32xf32> to vector<256x32xbf16>
    %c0_67 = arith.constant 0 : index
    %c512 = arith.constant 512 : index
    %90 = vector.load %arg10[%c0_67, %c512] : memref<256x640xbf16, #tpu.memory_space<vmem>>, vector<256x32xbf16>
    tpu.vector_store %arg10[%c0_67, %c512], %89 {strides = array<i32>} : memref<256x640xbf16, #tpu.memory_space<vmem>>, vector<256x32xbf16>,
    %91 = arith.index_cast %5 : i32 to index
    %c2_68 = arith.constant 2 : index
    %c2_69 = arith.constant 2 : index
    %c0_70 = arith.constant 0 : index
    %92 = vector.load %arg8[%91, %c2_68, %c2_69, %c0_70] : memref<3x18x18x32xf32, #tpu.memory_space<vmem>>, vector<1x16x16x32xf32>
    %93 = vector.shape_cast %92 : vector<1x16x16x32xf32> to vector<256x32xf32>
    %94 = arith.truncf %93 : vector<256x32xf32> to vector<256x32xbf16>
    %c0_71 = arith.constant 0 : index
    %c544 = arith.constant 544 : index
    %95 = vector.load %arg10[%c0_71, %c544] : memref<256x640xbf16, #tpu.memory_space<vmem>>, vector<256x32xbf16>
    tpu.vector_store %arg10[%c0_71, %c544], %94 {strides = array<i32>} : memref<256x640xbf16, #tpu.memory_space<vmem>>, vector<256x32xbf16>,
    %c0_72 = arith.constant 0 : index
    %c0_73 = arith.constant 0 : index
    %96 = vector.load %arg10[%c0_72, %c0_73] : memref<256x640xbf16, #tpu.memory_space<vmem>>, vector<256x640xbf16>
    %97 = arith.index_cast %arg2 : i32 to index
    %c0_74 = arith.constant 0 : index
    %c0_75 = arith.constant 0 : index
    %98 = vector.load %arg4[%97, %c0_74, %c0_75] : memref<2x640x128xbf16, #tpu.memory_space<vmem>>, vector<1x640x128xbf16>
    %99 = vector.shape_cast %98 : vector<1x640x128xbf16> to vector<640x128xbf16>
    %cst = arith.constant dense<0.000000e+00> : vector<256x128xf32>
    %100 = tpu.matmul %96, %99, %cst {dimension_numbers = #tpu.dot_dimension_numbers<[1], [0], [0], [1], [0, 0, 1, 1], [], []>} : vector<256x640xbf16>, vector<640x128xbf16>, vector<256x128xf32> -> vector<256x128xf32>
    %101 = arith.index_cast %arg2 : i32 to index
    %c0_76 = arith.constant 0 : index
    %c0_77 = arith.constant 0 : index
    %102 = vector.load %arg5[%101, %c0_76, %c0_77] : memref<2x1x128xf32, #tpu.memory_space<vmem>>, vector<1x1x128xf32>
    %103 = vector.shape_cast %102 : vector<1x1x128xf32> to vector<1x128xf32>
    %104 = vector.broadcast %103 : vector<1x128xf32> to vector<256x128xf32>
    %105 = arith.addf %100, %104 : vector<256x128xf32>
    %106 = arith.index_cast %arg2 : i32 to index
    %c0_78 = arith.constant 0 : index
    %c0_79 = arith.constant 0 : index
    %107 = vector.load %arg9[%106, %c0_78, %c0_79] : memref<2x256x32xf32, #tpu.memory_space<vmem>>, vector<1x256x32xf32>
    %108 = vector.shape_cast %107 : vector<1x256x32xf32> to vector<256x32xf32>
    %109 = vector.extract_strided_slice %105 {offsets = [0, 0], sizes = [256, 32], strides = [1, 1]} : vector<256x128xf32> to vector<256x32xf32>
    %110 = vector.extract_strided_slice %105 {offsets = [0, 32], sizes = [256, 32], strides = [1, 1]} : vector<256x128xf32> to vector<256x32xf32>
    %111 = vector.extract_strided_slice %105 {offsets = [0, 64], sizes = [256, 32], strides = [1, 1]} : vector<256x128xf32> to vector<256x32xf32>
    %112 = vector.extract_strided_slice %105 {offsets = [0, 96], sizes = [256, 32], strides = [1, 1]} : vector<256x128xf32> to vector<256x32xf32>
    %113 = arith.negf %109 : vector<256x32xf32>
    %114 = math.exp %113 : vector<256x32xf32>
    %cst_80 = arith.constant 1.000000e+00 : f32
    %115 = vector.broadcast %cst_80 : f32 to vector<256x32xf32>
    %116 = arith.addf %115, %114 : vector<256x32xf32>
    %117 = arith.divf %115, %116 : vector<256x32xf32>
    %118 = arith.negf %110 : vector<256x32xf32>
    %119 = math.exp %118 : vector<256x32xf32>
    %cst_81 = arith.constant 1.000000e+00 : f32
    %120 = vector.broadcast %cst_81 : f32 to vector<256x32xf32>
    %121 = arith.addf %120, %119 : vector<256x32xf32>
    %122 = arith.divf %120, %121 : vector<256x32xf32>
    %123 = arith.mulf %122, %108 : vector<256x32xf32>
    %124 = math.tanh %111 : vector<256x32xf32>
    %125 = arith.mulf %117, %124 : vector<256x32xf32>
    %126 = arith.addf %123, %125 : vector<256x32xf32>
    %127 = arith.negf %112 : vector<256x32xf32>
    %128 = math.exp %127 : vector<256x32xf32>
    %cst_82 = arith.constant 1.000000e+00 : f32
    %129 = vector.broadcast %cst_82 : f32 to vector<256x32xf32>
    %130 = arith.addf %129, %128 : vector<256x32xf32>
    %131 = arith.divf %129, %130 : vector<256x32xf32>
    %132 = math.tanh %126 : vector<256x32xf32>
    %133 = arith.mulf %131, %132 : vector<256x32xf32>
    %134 = arith.index_cast %arg2 : i32 to index
    %c0_83 = arith.constant 0 : index
    %c0_84 = arith.constant 0 : index
    %135 = vector.load %arg9[%134, %c0_83, %c0_84] : memref<2x256x32xf32, #tpu.memory_space<vmem>>, vector<1x256x32xf32>
    %136 = vector.shape_cast %135 : vector<1x256x32xf32> to vector<256x32xf32>
    %137 = vector.shape_cast %126 : vector<256x32xf32> to vector<1x256x32xf32>
    tpu.vector_store %arg9[%134, %c0_83, %c0_84], %137 {strides = array<i32>} : memref<2x256x32xf32, #tpu.memory_space<vmem>>, vector<1x256x32xf32>,
    %138 = vector.shape_cast %133 : vector<256x32xf32> to vector<16x16x32xf32>
    %139 = vector.shape_cast %138 : vector<16x16x32xf32> to vector<1x16x16x32xf32>
    %c1_i32_85 = arith.constant 1 : i32
    %140 = arith.addi %arg2, %c1_i32_85 : i32
    %141 = arith.index_cast %140 : i32 to index
    %c1_86 = arith.constant 1 : index
    %c1_87 = arith.constant 1 : index
    %c0_88 = arith.constant 0 : index
    %142 = vector.load %arg8[%141, %c1_86, %c1_87, %c0_88] : memref<3x18x18x32xf32, #tpu.memory_space<vmem>>, vector<1x16x16x32xf32>
    tpu.vector_store %arg8[%141, %c1_86, %c1_87, %c0_88], %139 {strides = array<i32>} : memref<3x18x18x32xf32, #tpu.memory_space<vmem>>, vector<1x16x16x32xf32>,
    %c1_i32_89 = arith.constant 1 : i32
    %143 = arith.cmpi eq, %arg2, %c1_i32_89 : i32
    %144 = arith.extui %143 : i1 to i32
    %c0_i32_90 = arith.constant 0 : i32
    %145 = arith.cmpi ne, %144, %c0_i32_90 : i32
    scf.if %145 {
      %c0_91 = arith.constant 0 : index
      %c0_92 = arith.constant 0 : index
      %c0_93 = arith.constant 0 : index
      %c0_94 = arith.constant 0 : index
      %146 = vector.load %arg6[%c0_91, %c0_92, %c0_93, %c0_94] : memref<1x16x16x32xf32, #tpu.memory_space<vmem>>, vector<1x16x16x32xf32>
      %147 = vector.shape_cast %146 : vector<1x16x16x32xf32> to vector<16x16x32xf32>
      %148 = vector.shape_cast %138 : vector<16x16x32xf32> to vector<1x16x16x32xf32>
      tpu.vector_store %arg6[%c0_91, %c0_92, %c0_93, %c0_94], %148 {strides = array<i32>} : memref<1x16x16x32xf32, #tpu.memory_space<vmem>>, vector<1x16x16x32xf32>,
      %149 = vector.shape_cast %126 : vector<256x32xf32> to vector<16x16x32xf32>
      %c0_95 = arith.constant 0 : index
      %c0_96 = arith.constant 0 : index
      %c0_97 = arith.constant 0 : index
      %c0_98 = arith.constant 0 : index
      %150 = vector.load %arg7[%c0_95, %c0_96, %c0_97, %c0_98] : memref<1x16x16x32xf32, #tpu.memory_space<vmem>>, vector<1x16x16x32xf32>
      %151 = vector.shape_cast %150 : vector<1x16x16x32xf32> to vector<16x16x32xf32>
      %152 = vector.shape_cast %149 : vector<16x16x32xf32> to vector<1x16x16x32xf32>
      tpu.vector_store %arg7[%c0_95, %c0_96, %c0_97, %c0_98], %152 {strides = array<i32>} : memref<1x16x16x32xf32, #tpu.memory_space<vmem>>, vector<1x16x16x32xf32>,
    } else {
    }
    return
  }
  func.func @transform_0(%arg0: i32, %arg1: i32, %arg2: i32) -> (i32, i32, i32, i32) {
    %c0_i32 = arith.constant 0 : i32
    %c0_i32_0 = arith.constant 0 : i32
    %c0_i32_1 = arith.constant 0 : i32
    %c0_i32_2 = arith.constant 0 : i32
    return %arg0, %c0_i32, %c0_i32_0, %c0_i32_1 : i32, i32, i32, i32
  }
  func.func @transform_1(%arg0: i32, %arg1: i32, %arg2: i32) -> (i32, i32, i32) {
    %c0_i32 = arith.constant 0 : i32
    %c0_i32_0 = arith.constant 0 : i32
    %c0_i32_1 = arith.constant 0 : i32
    %c0_i32_2 = arith.constant 0 : i32
    return %c0_i32, %c0_i32_0, %c0_i32_1 : i32, i32, i32
  }
  func.func @transform_2(%arg0: i32, %arg1: i32, %arg2: i32) -> (i32, i32, i32) {
    %c0_i32 = arith.constant 0 : i32
    %c0_i32_0 = arith.constant 0 : i32
    %c0_i32_1 = arith.constant 0 : i32
    %c0_i32_2 = arith.constant 0 : i32
    return %c0_i32, %c0_i32_0, %c0_i32_1 : i32, i32, i32
  }
  func.func @transform_3(%arg0: i32, %arg1: i32, %arg2: i32) -> (i32, i32, i32, i32) {
    %c2_i32 = arith.constant 2 : i32
    %0 = arith.muli %arg1, %c2_i32 : i32
    %1 = arith.addi %0, %arg0 : i32
    %c0_i32 = arith.constant 0 : i32
    %c0_i32_0 = arith.constant 0 : i32
    %c0_i32_1 = arith.constant 0 : i32
    %c0_i32_2 = arith.constant 0 : i32
    return %1, %c0_i32, %c0_i32_0, %c0_i32_1 : i32, i32, i32, i32
  }
  func.func @transform_4(%arg0: i32, %arg1: i32, %arg2: i32) -> (i32, i32, i32, i32) {
    %c0_i32 = arith.constant 0 : i32
    %c0_i32_0 = arith.constant 0 : i32
    %c0_i32_1 = arith.constant 0 : i32
    %c0_i32_2 = arith.constant 0 : i32
    return %arg0, %c0_i32, %c0_i32_0, %c0_i32_1 : i32, i32, i32, i32
  }
}

</mosaic_0001>

<llo_original>
// kernel: convlstm_forward.1
$region0: #{convlstm_forward.1}
  #allocation0 [shape = 'u32[]', space=smem, size = 0x4, offset = 0x4, fixed_abs, tag = 'smem constant byte address 0x4 - core index']
  #allocation1 [shape = 'u32[144,128]{1,0:T(1,128)}', space=vmem, size = 0x12000, scoped, tag = 'internal scratch']
  #allocation2 [shape = 'f32[3,18,18,32]{3,2,1,0:T(8,128)}', space=vmem, size = 0xa2000, scoped, tag = 'scratch operand']
  #allocation3 [shape = 'f32[2,256,32]{2,1,0:T(8,128)}', space=vmem, size = 0x40000, scoped, tag = 'scratch operand']
  #allocation4 [shape = 'bf16[256,640]{1,0:T(16,128)(2,1)}', space=vmem, size = 0x50000, scoped, tag = 'scratch operand']
  %s0 = inlined_call_operand.vmem [shape: f32[2,18,18,32], index: 0, kind: input, shape index: {}]
  %s1 = inlined_call_operand.vmem [shape: bf16[2,640,128], index: 1, kind: input, shape index: {}]
  %s2 = inlined_call_operand.vmem [shape: f32[2,1,128], index: 2, kind: input, shape index: {}]
  %s3 = inlined_call_operand.vmem [shape: f32[4,16,16,32], index: 3, kind: output, shape index: {0}]
  %s4 = inlined_call_operand.hbm [shape: f32[2,16,16,32], index: 4, kind: output, shape index: {1}]
  %5 = xla_tuple %s3, %s4
  %s6 = sld [smem:[#allocation0]]
  $region61: #{convlstm_forward.1} parent=0
    _
  %s8 = ssub.s32 1, %s6
  %s9 = scalar_select 0, %s8, %s6
  $region1: #{convlstm_forward.1} parent=0
    #allocation5 [shape = 'u8[262144]{0}', space=vmem, size = 0x40000, scoped, tag = 'output window, operand 1']
    #allocation6 [shape = 's32[2]{0}', space=sflag, size = 0x8, scoped, tag = 'scoped memory for convlstm_forward.1']
    %10 = vsyncpa [#allocation6], 0
    %s11 = scalar_lea.sflag [#allocation6], 1
    %12 = vsyncpa %s11, 0
    loop: start=0, step=1, limit=10
    $region2: #{convlstm_forward.1} parent=1 // loop_pre_header
      _
    $region3: #{convlstm_forward.1} parent=1 // loop_header
      %s14 = sphi 0, %s18
      %p15 = scmp.ge.s32.totalorder %s14, 10
      %s21 = sphi 0, %s40
      %s22 = sphi 0, %s36
      %s23 = sphi 0, %s32
      %s24 = sphi 0, %s21
      %s25 = sphi 0, %s22
      %s26 = sphi 0, %s23
      %s27 = sphi 0, %s24
      %s28 = sphi 0, %s25
      %s29 = sphi 0, %s26
      %s43 = sphi 0, %s45
      %s46 = sphi 0, %s43
      %s47 = sphi 0, %s46
      %s63 = sphi 0, %s47
      %s67 = sphi 0, %s67
      %s69 = sphi 0, %s67
      %s70 = sphi 0, %s69
      %s84 = sphi 0, %s70
      %s88 = sphi 0, %s88
      %s90 = sphi 0, %s88
      %s91 = sphi 0, %s90
      %s105 = sphi 0, %s91
      %s115 = sphi 0, %s117
      %s118 = sphi 0, %s115
      %s119 = sphi 0, %s118
      %s135 = sphi 0, %s119
      %s141 = sphi 0, %s143
      %s144 = sphi 0, %s141
      %s145 = sphi 0, %s144
      %s161 = sphi 0, %s145
    $region4: #{convlstm_forward.1} parent=1 // loop_header_branch
      %17 = sbr.rel (%p15) target = $region8
    $region5: #{convlstm_forward.1} parent=1 // loop_body
      %s19 = ssub.s32 %s14, 1
      %s20 = ssub.s32 %s14, 2
      %s30 = sadd.s32 1, %s23
      %p31 = scmp.ge.s32.totalorder %s30, 2
      %s32 = scalar_select %p31, 0, %s30
      %s33 = sadd.s32 1, %s22
      %s34 = scalar_select %p31, %s33, %s22
      %p35 = scmp.ge.s32.totalorder %s34, 2
      %s36 = scalar_select %p35, 0, %s34
      %s37 = sadd.s32 1, %s21
      %s38 = scalar_select %p35, %s37, %s21
      %p39 = scmp.ge.s32.totalorder %s38, 2
      %s40 = scalar_select %p39, 0, %s38
      %s41 = ssub.s32 %s21, %s40
      %p42 = scmp.eq.s32.totalorder %s41, 0
      %s44 = sadd.s32 %s43, 1
      %s45 = scalar_select %p42, %s43, %s44
      %p48 = pneg %p42
      %p49 = scmp.eq.s32.totalorder %s14, 7
      %p50 = por %p48, %p49
      %p51 = scmp.ne.s32.totalorder %s43, %s46
      %p52 = scmp.eq.s32.totalorder %s14, 0
      %p53 = por %p51, %p52
      %p54 = scmp.ne.s32.totalorder %s43, %s46
      %p55 = scmp.eq.s32.totalorder %s19, 7
      %p56 = por %p54, %p55
      %p57 = scmp.ne.s32.totalorder %s46, %s47
      %p58 = scmp.eq.s32.totalorder %s19, 0
      %p59 = por %p57, %p58
      %p60 = scmp.ne.s32.totalorder %s46, %s47
      %p61 = scmp.eq.s32.totalorder %s20, 7
      %p62 = por %p60, %p61
      %p64 = scmp.ne.s32.totalorder %s47, %s63
      %p65 = scmp.eq.s32.totalorder %s20, 0
      %p66 = por %p64, %p65
      %s68 = sadd.s32 %s67, 1
      %p71 = scmp.eq.s32.totalorder %s14, 7
      %p72 = scmp.ne.s32.totalorder %s67, %s69
      %p73 = scmp.eq.s32.totalorder %s14, 0
      %p74 = por %p72, %p73
      %p75 = scmp.ne.s32.totalorder %s67, %s69
      %p76 = scmp.eq.s32.totalorder %s19, 7
      %p77 = por %p75, %p76
      %p78 = scmp.ne.s32.totalorder %s69, %s70
      %p79 = scmp.eq.s32.totalorder %s19, 0
      %p80 = por %p78, %p79
      %p81 = scmp.ne.s32.totalorder %s69, %s70
      %p82 = scmp.eq.s32.totalorder %s20, 7
      %p83 = por %p81, %p82
      %p85 = scmp.ne.s32.totalorder %s70, %s84
      %p86 = scmp.eq.s32.totalorder %s20, 0
      %p87 = por %p85, %p86
      %s89 = sadd.s32 %s88, 1
      %p92 = scmp.eq.s32.totalorder %s14, 7
      %p93 = scmp.ne.s32.totalorder %s88, %s90
      %p94 = scmp.eq.s32.totalorder %s14, 0
      %p95 = por %p93, %p94
      %p96 = scmp.ne.s32.totalorder %s88, %s90
      %p97 = scmp.eq.s32.totalorder %s19, 7
      %p98 = por %p96, %p97
      %p99 = scmp.ne.s32.totalorder %s90, %s91
      %p100 = scmp.eq.s32.totalorder %s19, 0
      %p101 = por %p99, %p100
      %p102 = scmp.ne.s32.totalorder %s90, %s91
      %p103 = scmp.eq.s32.totalorder %s20, 7
      %p104 = por %p102, %p103
      %p106 = scmp.ne.s32.totalorder %s91, %s105
      %p107 = scmp.eq.s32.totalorder %s20, 0
      %p108 = por %p106, %p107
      %s109 = smul.u32 %s22, 2
      %s110 = sadd.s32 %s109, %s21
      %s111 = smul.u32 %s36, 2
      %s112 = sadd.s32 %s111, %s40
      %s113 = ssub.s32 %s110, %s112
      %p114 = scmp.eq.s32.totalorder %s113, 0
      %s116 = sadd.s32 %s115, 1
      %s117 = scalar_select %p114, %s115, %s116
      %p120 = pneg %p114
      %p121 = scmp.eq.s32.totalorder %s14, 7
      %p122 = por %p120, %p121
      %p123 = scmp.ne.s32.totalorder %s115, %s118
      %p124 = scmp.eq.s32.totalorder %s14, 0
      %p125 = por %p123, %p124
      %p126 = scmp.ne.s32.totalorder %s115, %s118
      %p127 = scmp.eq.s32.totalorder %s19, 7
      %p128 = por %p126, %p127
      %p129 = scmp.ne.s32.totalorder %s118, %s119
      %p130 = scmp.eq.s32.totalorder %s19, 0
      %p131 = por %p129, %p130
      %p132 = scmp.ne.s32.totalorder %s118, %s119
      %p133 = scmp.eq.s32.totalorder %s20, 7
      %p134 = por %p132, %p133
      %p136 = scmp.ne.s32.totalorder %s119, %s135
      %p137 = scmp.eq.s32.totalorder %s20, 0
      %p138 = por %p136, %p137
      %s139 = ssub.s32 %s21, %s40
      %p140 = scmp.eq.s32.totalorder %s139, 0
      %s142 = sadd.s32 %s141, 1
      %s143 = scalar_select %p140, %s141, %s142
      %p146 = pneg %p140
      %p147 = scmp.eq.s32.totalorder %s14, 7
      %p148 = por %p146, %p147
      %p149 = scmp.ne.s32.totalorder %s141, %s144
      %p150 = scmp.eq.s32.totalorder %s14, 0
      %p151 = por %p149, %p150
      %p152 = scmp.ne.s32.totalorder %s141, %s144
      %p153 = scmp.eq.s32.totalorder %s19, 7
      %p154 = por %p152, %p153
      %p155 = scmp.ne.s32.totalorder %s144, %s145
      %p156 = scmp.eq.s32.totalorder %s19, 0
      %p157 = por %p155, %p156
      %p158 = scmp.ne.s32.totalorder %s144, %s145
      %p159 = scmp.eq.s32.totalorder %s20, 7
      %p160 = por %p158, %p159
      %p162 = scmp.ne.s32.totalorder %s145, %s161
      %p163 = scmp.eq.s32.totalorder %s20, 0
      %p164 = por %p162, %p163
      %p165 = scmp.le.s32.totalorder 1, %s14
      %p166 = scmp.lt.s32.totalorder %s14, 9
      %p167 = pnand %p165, %p166
      %p168 = pneg %p167
      // Predicated region
      $region9: #{convlstm_forward.1} parent=5 // pred_check
        _
      $region10: #{convlstm_forward.1} parent=5 // pred_check_branch
        %170 = sbr.rel (%p167) target = $region12
      $region11: #{convlstm_forward.1} parent=5 // pred_region
        %s171 = ssub.s32 %s14, 1
        // Predicated region
        $region13: #{convlstm_forward.1} parent=11 // pred_check
          %p172 = pneg %p80
        $region14: #{convlstm_forward.1} parent=11 // pred_check_branch
          %174 = sbr.rel (%p172) target = $region16
        $region15: #{convlstm_forward.1} parent=11 // pred_region
          _
        $region16: #{convlstm_forward.1} parent=11 // pred_fallthru
          _
        // Predicated region
        $region17: #{convlstm_forward.1} parent=11 // pred_check
          %p175 = pneg %p101
        $region18: #{convlstm_forward.1} parent=11 // pred_check_branch
          %177 = sbr.rel (%p175) target = $region20
        $region19: #{convlstm_forward.1} parent=11 // pred_region
          _
        $region20: #{convlstm_forward.1} parent=11 // pred_fallthru
          _
      $region12: #{convlstm_forward.1} parent=5 // pred_fallthru
        _
      %p178 = scmp.lt.s32.totalorder %s14, 8
      // Predicated region
      $region21: #{convlstm_forward.1} parent=5 // pred_check
        %p179 = pneg %p178
      $region22: #{convlstm_forward.1} parent=5 // pred_check_branch
        %181 = sbr.rel (%p179) target = $region24
      $region23: #{convlstm_forward.1} parent=5 // pred_region
        // Predicated region
        $region25: #{convlstm_forward.1} parent=23 // pred_check
          %p182 = pneg %p53
        $region26: #{convlstm_forward.1} parent=23 // pred_check_branch
          %184 = sbr.rel (%p182) target = $region28
        $region27: #{convlstm_forward.1} parent=23 // pred_region
          %p185 = scmp.lt.s32.totalorder %s21, 1
          %s186 = scalar_select %p185, %s21, 1
          %s187 = smul.addr %s186, 54
          %s188 = smul.addr %s187, 8
          %s189 = scalar_lea.vmem %s0, %s188
        $region28: #{convlstm_forward.1} parent=23 // pred_fallthru
          _
      $region24: #{convlstm_forward.1} parent=5 // pred_fallthru
        _
      %p190 = scmp.le.s32.totalorder 1, %s14
      %p191 = scmp.lt.s32.totalorder %s14, 9
      %p192 = pnand %p190, %p191
      %p193 = pneg %p192
      // Predicated region
      $region29: #{convlstm_forward.1} parent=5 // pred_check
        _
      $region30: #{convlstm_forward.1} parent=5 // pred_check_branch
        %195 = sbr.rel (%p192) target = $region32
      $region31: #{convlstm_forward.1} parent=5 // pred_region
        %s196 = ssub.s32 %s14, 1
        %p197 = scmp.lt.s32.totalorder %s24, 1
        %s198 = scalar_select %p197, %s24, 1
        %s199 = smul.addr %s198, 54
        %s200 = smul.addr %s199, 8
        %s201 = scalar_lea.vmem %s0, %s200
        %p202 = pneg %p59
        %p203 = pneg %p56
        %p204 = pneg %p80
        %p205 = pneg %p77
        %p206 = pneg %p101
        %p207 = pneg %p98
        %p208 = pneg %p131
        %p209 = pneg %p128
        %s210 = smul.u32 %s25, 2
        %s211 = sadd.s32 %s210, %s24
        %p212 = scmp.lt.s32.totalorder %s211, 3
        %s213 = scalar_select %p212, %s211, 3
        %s214 = smul.addr %s213, 32
        %s215 = smul.addr %s214, 8
        %s216 = scalar_lea.vmem %s3, %s215
        %p217 = pneg %p157
        %p218 = pneg %p154
        %s219 = sand.u32 %s144, 1
        %s220 = scalar_lea.sflag [#allocation6], %s219
        %s221 = sand.u32 %s144, 1
        %s222 = smul.addr %s221, 256
        %s223 = scalar_lea.vmem [#allocation5], %s222
        %p224 = scmp.lt.s32.totalorder %s24, 1
        %s225 = scalar_select %p224, %s24, 1
        %s226 = smul.addr %s225, 54
        %s227 = smul.addr %s226, 8
        %s228 = scalar_lea.vmem %s0, %s227
        %s229 = smul.u32 %s25, 2
        %s230 = sadd.s32 %s229, %s24
        %p231 = scmp.lt.s32.totalorder %s230, 3
        %s232 = scalar_select %p231, %s230, 3
        %s233 = smul.addr %s232, 32
        %s234 = smul.addr %s233, 8
        %s235 = scalar_lea.vmem %s3, %s234
        %s236 = smul.u32 %s25, 2
        %s237 = sadd.s32 %s236, %s24
        %p239 = scmp.eq.s32.totalorder %s25, 0
        %p240 = scmp.eq.s32.totalorder %s26, 0
        %p241 = pnand %p239, %p240
        %p242 = pneg %p241
        // Predicated region
        $region33: #{convlstm_forward.1} parent=31 // pred_check
          _
        $region34: #{convlstm_forward.1} parent=31 // pred_check_branch
          %244 = sbr.rel (%p241) target = $region36
        $region35: #{convlstm_forward.1} parent=31 // pred_region
          %vm245 = vcmask 261120
          %246 = vst.msk [vmem:[#allocation2] sm:$0xff] %vm245, 0.0
          %247 = vst.msk [vmem:[#allocation2 + $0x8] sm:$0xff] %vm245, 0.0
          %vm248 = vcmask 254976
          %249 = vst.msk [vmem:[#allocation2 + $0x10] sm:$0x3] %vm248, 0.0
          %250 = vst.msk [vmem:[#allocation2 + $0x18] sm:$0xff] %vm245, 0.0
          %251 = vst.msk [vmem:[#allocation2 + $0x20] sm:$0xff] %vm245, 0.0
          %252 = vst.msk [vmem:[#allocation2 + $0x28] sm:$0x3] %vm248, 0.0
          %253 = vst.msk [vmem:[#allocation2 + $0x30] sm:$0xff] %vm245, 0.0
          %254 = vst.msk [vmem:[#allocation2 + $0x38] sm:$0xff] %vm245, 0.0
          %255 = vst.msk [vmem:[#allocation2 + $0x40] sm:$0x3] %vm248, 0.0
          %256 = vst.msk [vmem:[#allocation2 + $0x48] sm:$0xff] %vm245, 0.0
          %257 = vst.msk [vmem:[#allocation2 + $0x50] sm:$0xff] %vm245, 0.0
          %258 = vst.msk [vmem:[#allocation2 + $0x58] sm:$0x3] %vm248, 0.0
          %259 = vst.msk [vmem:[#allocation2 + $0x60] sm:$0xff] %vm245, 0.0
          %260 = vst.msk [vmem:[#allocation2 + $0x68] sm:$0xff] %vm245, 0.0
          %261 = vst.msk [vmem:[#allocation2 + $0x70] sm:$0x3] %vm248, 0.0
          %262 = vst.msk [vmem:[#allocation2 + $0x78] sm:$0xff] %vm245, 0.0
          %263 = vst.msk [vmem:[#allocation2 + $0x80] sm:$0xff] %vm245, 0.0
          %264 = vst.msk [vmem:[#allocation2 + $0x88] sm:$0x3] %vm248, 0.0
          %265 = vst.msk [vmem:[#allocation2 + $0x90] sm:$0xff] %vm245, 0.0
          %266 = vst.msk [vmem:[#allocation2 + $0x98] sm:$0xff] %vm245, 0.0
          %267 = vst.msk [vmem:[#allocation2 + $0xa0] sm:$0x3] %vm248, 0.0
          %268 = vst.msk [vmem:[#allocation2 + $0xa8] sm:$0xff] %vm245, 0.0
          %269 = vst.msk [vmem:[#allocation2 + $0xb0] sm:$0xff] %vm245, 0.0
          %270 = vst.msk [vmem:[#allocation2 + $0xb8] sm:$0x3] %vm248, 0.0
          %271 = vst.msk [vmem:[#allocation2 + $0xc0] sm:$0xff] %vm245, 0.0
          %272 = vst.msk [vmem:[#allocation2 + $0xc8] sm:$0xff] %vm245, 0.0
          %273 = vst.msk [vmem:[#allocation2 + $0xd0] sm:$0x3] %vm248, 0.0
          %274 = vst.msk [vmem:[#allocation2 + $0xd8] sm:$0xff] %vm245, 0.0
          %275 = vst.msk [vmem:[#allocation2 + $0xe0] sm:$0xff] %vm245, 0.0
          %276 = vst.msk [vmem:[#allocation2 + $0xe8] sm:$0x3] %vm248, 0.0
          %277 = vst.msk [vmem:[#allocation2 + $0xf0] sm:$0xff] %vm245, 0.0
          %278 = vst.msk [vmem:[#allocation2 + $0xf8] sm:$0xff] %vm245, 0.0
          %279 = vst.msk [vmem:[#allocation2 + $0x100] sm:$0x3] %vm248, 0.0
          %280 = vst.msk [vmem:[#allocation2 + $0x108] sm:$0xff] %vm245, 0.0
          %281 = vst.msk [vmem:[#allocation2 + $0x110] sm:$0xff] %vm245, 0.0
          %282 = vst.msk [vmem:[#allocation2 + $0x118] sm:$0x3] %vm248, 0.0
          %283 = vst.msk [vmem:[#allocation2 + $0x120] sm:$0xff] %vm245, 0.0
          %284 = vst.msk [vmem:[#allocation2 + $0x128] sm:$0xff] %vm245, 0.0
          %285 = vst.msk [vmem:[#allocation2 + $0x130] sm:$0x3] %vm248, 0.0
          %286 = vst.msk [vmem:[#allocation2 + $0x138] sm:$0xff] %vm245, 0.0
          %287 = vst.msk [vmem:[#allocation2 + $0x140] sm:$0xff] %vm245, 0.0
          %288 = vst.msk [vmem:[#allocation2 + $0x148] sm:$0x3] %vm248, 0.0
          %289 = vst.msk [vmem:[#allocation2 + $0x150] sm:$0xff] %vm245, 0.0
          %290 = vst.msk [vmem:[#allocation2 + $0x158] sm:$0xff] %vm245, 0.0
          %291 = vst.msk [vmem:[#allocation2 + $0x160] sm:$0x3] %vm248, 0.0
          %292 = vst.msk [vmem:[#allocation2 + $0x168] sm:$0xff] %vm245, 0.0
          %293 = vst.msk [vmem:[#allocation2 + $0x170] sm:$0xff] %vm245, 0.0
          %294 = vst.msk [vmem:[#allocation2 + $0x178] sm:$0x3] %vm248, 0.0
          %295 = vst.msk [vmem:[#allocation2 + $0x180] sm:$0xff] %vm245, 0.0
          %296 = vst.msk [vmem:[#allocation2 + $0x188] sm:$0xff] %vm245, 0.0
          %297 = vst.msk [vmem:[#allocation2 + $0x190] sm:$0x3] %vm248, 0.0
          %298 = vst.msk [vmem:[#allocation2 + $0x198] sm:$0xff] %vm245, 0.0
          %299 = vst.msk [vmem:[#allocation2 + $0x1a0] sm:$0xff] %vm245, 0.0
          %300 = vst.msk [vmem:[#allocation2 + $0x1a8] sm:$0x3] %vm248, 0.0
          %301 = vst.msk [vmem:[#allocation2 + $0x1b0] sm:$0xff] %vm245, 0.0
          %302 = vst.msk [vmem:[#allocation2 + $0x1b8] sm:$0xff] %vm245, 0.0
          %303 = vst.msk [vmem:[#allocation2 + $0x1c0] sm:$0x3] %vm248, 0.0
          %304 = vst.msk [vmem:[#allocation2 + $0x1c8] sm:$0xff] %vm245, 0.0
          %305 = vst.msk [vmem:[#allocation2 + $0x1d0] sm:$0xff] %vm245, 0.0
          %306 = vst.msk [vmem:[#allocation2 + $0x1d8] sm:$0x3] %vm248, 0.0
          %307 = vst.msk [vmem:[#allocation2 + $0x1e0] sm:$0xff] %vm245, 0.0
          %308 = vst.msk [vmem:[#allocation2 + $0x1e8] sm:$0xff] %vm245, 0.0
          %309 = vst.msk [vmem:[#allocation2 + $0x1f0] sm:$0x3] %vm248, 0.0
          %310 = vst.msk [vmem:[#allocation2 + $0x1f8] sm:$0xff] %vm245, 0.0
          %311 = vst.msk [vmem:[#allocation2 + $0x200] sm:$0xff] %vm245, 0.0
          %312 = vst.msk [vmem:[#allocation2 + $0x208] sm:$0x3] %vm248, 0.0
          %313 = vst.msk [vmem:[#allocation2 + $0x210] sm:$0xff] %vm245, 0.0
          %314 = vst.msk [vmem:[#allocation2 + $0x218] sm:$0xff] %vm245, 0.0
          %315 = vst.msk [vmem:[#allocation2 + $0x220] sm:$0x3] %vm248, 0.0
          %316 = vst.msk [vmem:[#allocation2 + $0x228] sm:$0xff] %vm245, 0.0
          %317 = vst.msk [vmem:[#allocation2 + $0x230] sm:$0xff] %vm245, 0.0
          %318 = vst.msk [vmem:[#allocation2 + $0x238] sm:$0x3] %vm248, 0.0
          %319 = vst.msk [vmem:[#allocation2 + $0x240] sm:$0xff] %vm245, 0.0
          %320 = vst.msk [vmem:[#allocation2 + $0x248] sm:$0xff] %vm245, 0.0
          %321 = vst.msk [vmem:[#allocation2 + $0x250] sm:$0x3] %vm248, 0.0
          %322 = vst.msk [vmem:[#allocation2 + $0x258] sm:$0xff] %vm245, 0.0
          %323 = vst.msk [vmem:[#allocation2 + $0x260] sm:$0xff] %vm245, 0.0
          %324 = vst.msk [vmem:[#allocation2 + $0x268] sm:$0x3] %vm248, 0.0
          %325 = vst.msk [vmem:[#allocation2 + $0x270] sm:$0xff] %vm245, 0.0
          %326 = vst.msk [vmem:[#allocation2 + $0x278] sm:$0xff] %vm245, 0.0
          %327 = vst.msk [vmem:[#allocation2 + $0x280] sm:$0x3] %vm248, 0.0
          %328 = vst.msk [vmem:[#allocation2 + $0x288] sm:$0xff] %vm245, 0.0
          %329 = vst.msk [vmem:[#allocation2 + $0x290] sm:$0xff] %vm245, 0.0
          %330 = vst.msk [vmem:[#allocation2 + $0x298] sm:$0x3] %vm248, 0.0
          %331 = vst.msk [vmem:[#allocation2 + $0x2a0] sm:$0xff] %vm245, 0.0
          %332 = vst.msk [vmem:[#allocation2 + $0x2a8] sm:$0xff] %vm245, 0.0
          %333 = vst.msk [vmem:[#allocation2 + $0x2b0] sm:$0x3] %vm248, 0.0
          %334 = vst.msk [vmem:[#allocation2 + $0x2b8] sm:$0xff] %vm245, 0.0
          %335 = vst.msk [vmem:[#allocation2 + $0x2c0] sm:$0xff] %vm245, 0.0
          %336 = vst.msk [vmem:[#allocation2 + $0x2c8] sm:$0x3] %vm248, 0.0
          %337 = vst.msk [vmem:[#allocation2 + $0x2d0] sm:$0xff] %vm245, 0.0
          %338 = vst.msk [vmem:[#allocation2 + $0x2d8] sm:$0xff] %vm245, 0.0
          %339 = vst.msk [vmem:[#allocation2 + $0x2e0] sm:$0x3] %vm248, 0.0
          %340 = vst.msk [vmem:[#allocation2 + $0x2e8] sm:$0xff] %vm245, 0.0
          %341 = vst.msk [vmem:[#allocation2 + $0x2f0] sm:$0xff] %vm245, 0.0
          %342 = vst.msk [vmem:[#allocation2 + $0x2f8] sm:$0x3] %vm248, 0.0
          %343 = vst.msk [vmem:[#allocation2 + $0x300] sm:$0xff] %vm245, 0.0
          %344 = vst.msk [vmem:[#allocation2 + $0x308] sm:$0xff] %vm245, 0.0
          %345 = vst.msk [vmem:[#allocation2 + $0x310] sm:$0x3] %vm248, 0.0
          %346 = vst.msk [vmem:[#allocation2 + $0x318] sm:$0xff] %vm245, 0.0
          %347 = vst.msk [vmem:[#allocation2 + $0x320] sm:$0xff] %vm245, 0.0
          %348 = vst.msk [vmem:[#allocation2 + $0x328] sm:$0x3] %vm248, 0.0
          %349 = vst.msk [vmem:[#allocation2 + $0x330] sm:$0xff] %vm245, 0.0
          %350 = vst.msk [vmem:[#allocation2 + $0x338] sm:$0xff] %vm245, 0.0
          %351 = vst.msk [vmem:[#allocation2 + $0x340] sm:$0x3] %vm248, 0.0
          %352 = vst.msk [vmem:[#allocation2 + $0x348] sm:$0xff] %vm245, 0.0
          %353 = vst.msk [vmem:[#allocation2 + $0x350] sm:$0xff] %vm245, 0.0
          %354 = vst.msk [vmem:[#allocation2 + $0x358] sm:$0x3] %vm248, 0.0
          %355 = vst.msk [vmem:[#allocation2 + $0x360] sm:$0xff] %vm245, 0.0
          %356 = vst.msk [vmem:[#allocation2 + $0x368] sm:$0xff] %vm245, 0.0
          %357 = vst.msk [vmem:[#allocation2 + $0x370] sm:$0x3] %vm248, 0.0
          %358 = vst.msk [vmem:[#allocation2 + $0x378] sm:$0xff] %vm245, 0.0
          %359 = vst.msk [vmem:[#allocation2 + $0x380] sm:$0xff] %vm245, 0.0
          %360 = vst.msk [vmem:[#allocation2 + $0x388] sm:$0x3] %vm248, 0.0
          %361 = vst.msk [vmem:[#allocation2 + $0x390] sm:$0xff] %vm245, 0.0
          %362 = vst.msk [vmem:[#allocation2 + $0x398] sm:$0xff] %vm245, 0.0
          %363 = vst.msk [vmem:[#allocation2 + $0x3a0] sm:$0x3] %vm248, 0.0
          %364 = vst.msk [vmem:[#allocation2 + $0x3a8] sm:$0xff] %vm245, 0.0
          %365 = vst.msk [vmem:[#allocation2 + $0x3b0] sm:$0xff] %vm245, 0.0
          %366 = vst.msk [vmem:[#allocation2 + $0x3b8] sm:$0x3] %vm248, 0.0
          %367 = vst.msk [vmem:[#allocation2 + $0x3c0] sm:$0xff] %vm245, 0.0
          %368 = vst.msk [vmem:[#allocation2 + $0x3c8] sm:$0xff] %vm245, 0.0
          %369 = vst.msk [vmem:[#allocation2 + $0x3d0] sm:$0x3] %vm248, 0.0
          %370 = vst.msk [vmem:[#allocation2 + $0x3d8] sm:$0xff] %vm245, 0.0
          %371 = vst.msk [vmem:[#allocation2 + $0x3e0] sm:$0xff] %vm245, 0.0
          %372 = vst.msk [vmem:[#allocation2 + $0x3e8] sm:$0x3] %vm248, 0.0
          %373 = vst.msk [vmem:[#allocation2 + $0x3f0] sm:$0xff] %vm245, 0.0
          %374 = vst.msk [vmem:[#allocation2 + $0x3f8] sm:$0xff] %vm245, 0.0
          %375 = vst.msk [vmem:[#allocation2 + $0x400] sm:$0x3] %vm248, 0.0
          %376 = vst.msk [vmem:[#allocation2 + $0x408] sm:$0xff] %vm245, 0.0
          %377 = vst.msk [vmem:[#allocation2 + $0x410] sm:$0xff] %vm245, 0.0
          %378 = vst.msk [vmem:[#allocation2 + $0x418] sm:$0x3] %vm248, 0.0
          %379 = vst.msk [vmem:[#allocation2 + $0x420] sm:$0xff] %vm245, 0.0
          %380 = vst.msk [vmem:[#allocation2 + $0x428] sm:$0xff] %vm245, 0.0
          %381 = vst.msk [vmem:[#allocation2 + $0x430] sm:$0x3] %vm248, 0.0
          %382 = vst.msk [vmem:[#allocation2 + $0x438] sm:$0xff] %vm245, 0.0
          %383 = vst.msk [vmem:[#allocation2 + $0x440] sm:$0xff] %vm245, 0.0
          %384 = vst.msk [vmem:[#allocation2 + $0x448] sm:$0x3] %vm248, 0.0
          %385 = vst.msk [vmem:[#allocation2 + $0x450] sm:$0xff] %vm245, 0.0
          %386 = vst.msk [vmem:[#allocation2 + $0x458] sm:$0xff] %vm245, 0.0
          %387 = vst.msk [vmem:[#allocation2 + $0x460] sm:$0x3] %vm248, 0.0
          %388 = vst.msk [vmem:[#allocation2 + $0x468] sm:$0xff] %vm245, 0.0
          %389 = vst.msk [vmem:[#allocation2 + $0x470] sm:$0xff] %vm245, 0.0
          %390 = vst.msk [vmem:[#allocation2 + $0x478] sm:$0x3] %vm248, 0.0
          %391 = vst.msk [vmem:[#allocation2 + $0x480] sm:$0xff] %vm245, 0.0
          %392 = vst.msk [vmem:[#allocation2 + $0x488] sm:$0xff] %vm245, 0.0
          %393 = vst.msk [vmem:[#allocation2 + $0x490] sm:$0x3] %vm248, 0.0
          %394 = vst.msk [vmem:[#allocation2 + $0x498] sm:$0xff] %vm245, 0.0
          %395 = vst.msk [vmem:[#allocation2 + $0x4a0] sm:$0xff] %vm245, 0.0
          %396 = vst.msk [vmem:[#allocation2 + $0x4a8] sm:$0x3] %vm248, 0.0
          %397 = vst.msk [vmem:[#allocation2 + $0x4b0] sm:$0xff] %vm245, 0.0
          %398 = vst.msk [vmem:[#allocation2 + $0x4b8] sm:$0xff] %vm245, 0.0
          %399 = vst.msk [vmem:[#allocation2 + $0x4c0] sm:$0x3] %vm248, 0.0
          %400 = vst.msk [vmem:[#allocation2 + $0x4c8] sm:$0xff] %vm245, 0.0
          %401 = vst.msk [vmem:[#allocation2 + $0x4d0] sm:$0xff] %vm245, 0.0
          %402 = vst.msk [vmem:[#allocation2 + $0x4d8] sm:$0x3] %vm248, 0.0
          %403 = vst.msk [vmem:[#allocation2 + $0x4e0] sm:$0xff] %vm245, 0.0
          %404 = vst.msk [vmem:[#allocation2 + $0x4e8] sm:$0xff] %vm245, 0.0
          %405 = vst.msk [vmem:[#allocation2 + $0x4f0] sm:$0x3] %vm248, 0.0
          %406 = vst.msk [vmem:[#allocation2 + $0x4f8] sm:$0xff] %vm245, 0.0
          %407 = vst.msk [vmem:[#allocation2 + $0x500] sm:$0xff] %vm245, 0.0
          %408 = vst.msk [vmem:[#allocation2 + $0x508] sm:$0x3] %vm248, 0.0
          %409 = vst.msk [vmem:[#allocation3] sm:$0xff] %vm245, 0.0
          %410 = vst.msk [vmem:[#allocation3 + $0x8] sm:$0xff] %vm245, 0.0
          %411 = vst.msk [vmem:[#allocation3 + $0x10] sm:$0xff] %vm245, 0.0
          %412 = vst.msk [vmem:[#allocation3 + $0x18] sm:$0xff] %vm245, 0.0
          %413 = vst.msk [vmem:[#allocation3 + $0x20] sm:$0xff] %vm245, 0.0
          %414 = vst.msk [vmem:[#allocation3 + $0x28] sm:$0xff] %vm245, 0.0
          %415 = vst.msk [vmem:[#allocation3 + $0x30] sm:$0xff] %vm245, 0.0
          %416 = vst.msk [vmem:[#allocation3 + $0x38] sm:$0xff] %vm245, 0.0
          %417 = vst.msk [vmem:[#allocation3 + $0x40] sm:$0xff] %vm245, 0.0
          %418 = vst.msk [vmem:[#allocation3 + $0x48] sm:$0xff] %vm245, 0.0
          %419 = vst.msk [vmem:[#allocation3 + $0x50] sm:$0xff] %vm245, 0.0
          %420 = vst.msk [vmem:[#allocation3 + $0x58] sm:$0xff] %vm245, 0.0
          %421 = vst.msk [vmem:[#allocation3 + $0x60] sm:$0xff] %vm245, 0.0
          %422 = vst.msk [vmem:[#allocation3 + $0x68] sm:$0xff] %vm245, 0.0
          %423 = vst.msk [vmem:[#allocation3 + $0x70] sm:$0xff] %vm245, 0.0
          %424 = vst.msk [vmem:[#allocation3 + $0x78] sm:$0xff] %vm245, 0.0
          %425 = vst.msk [vmem:[#allocation3 + $0x80] sm:$0xff] %vm245, 0.0
          %426 = vst.msk [vmem:[#allocation3 + $0x88] sm:$0xff] %vm245, 0.0
          %427 = vst.msk [vmem:[#allocation3 + $0x90] sm:$0xff] %vm245, 0.0
          %428 = vst.msk [vmem:[#allocation3 + $0x98] sm:$0xff] %vm245, 0.0
          %429 = vst.msk [vmem:[#allocation3 + $0xa0] sm:$0xff] %vm245, 0.0
          %430 = vst.msk [vmem:[#allocation3 + $0xa8] sm:$0xff] %vm245, 0.0
          %431 = vst.msk [vmem:[#allocation3 + $0xb0] sm:$0xff] %vm245, 0.0
          %432 = vst.msk [vmem:[#allocation3 + $0xb8] sm:$0xff] %vm245, 0.0
          %433 = vst.msk [vmem:[#allocation3 + $0xc0] sm:$0xff] %vm245, 0.0
          %434 = vst.msk [vmem:[#allocation3 + $0xc8] sm:$0xff] %vm245, 0.0
          %435 = vst.msk [vmem:[#allocation3 + $0xd0] sm:$0xff] %vm245, 0.0
          %436 = vst.msk [vmem:[#allocation3 + $0xd8] sm:$0xff] %vm245, 0.0
          %437 = vst.msk [vmem:[#allocation3 + $0xe0] sm:$0xff] %vm245, 0.0
          %438 = vst.msk [vmem:[#allocation3 + $0xe8] sm:$0xff] %vm245, 0.0
          %439 = vst.msk [vmem:[#allocation3 + $0xf0] sm:$0xff] %vm245, 0.0
          %440 = vst.msk [vmem:[#allocation3 + $0xf8] sm:$0xff] %vm245, 0.0
          %441 = vst.msk [vmem:[#allocation3 + $0x100] sm:$0xff] %vm245, 0.0
          %442 = vst.msk [vmem:[#allocation3 + $0x108] sm:$0xff] %vm245, 0.0
          %443 = vst.msk [vmem:[#allocation3 + $0x110] sm:$0xff] %vm245, 0.0
          %444 = vst.msk [vmem:[#allocation3 + $0x118] sm:$0xff] %vm245, 0.0
          %445 = vst.msk [vmem:[#allocation3 + $0x120] sm:$0xff] %vm245, 0.0
          %446 = vst.msk [vmem:[#allocation3 + $0x128] sm:$0xff] %vm245, 0.0
          %447 = vst.msk [vmem:[#allocation3 + $0x130] sm:$0xff] %vm245, 0.0
          %448 = vst.msk [vmem:[#allocation3 + $0x138] sm:$0xff] %vm245, 0.0
          %449 = vst.msk [vmem:[#allocation3 + $0x140] sm:$0xff] %vm245, 0.0
          %450 = vst.msk [vmem:[#allocation3 + $0x148] sm:$0xff] %vm245, 0.0
          %451 = vst.msk [vmem:[#allocation3 + $0x150] sm:$0xff] %vm245, 0.0
          %452 = vst.msk [vmem:[#allocation3 + $0x158] sm:$0xff] %vm245, 0.0
          %453 = vst.msk [vmem:[#allocation3 + $0x160] sm:$0xff] %vm245, 0.0
          %454 = vst.msk [vmem:[#allocation3 + $0x168] sm:$0xff] %vm245, 0.0
          %455 = vst.msk [vmem:[#allocation3 + $0x170] sm:$0xff] %vm245, 0.0
          %456 = vst.msk [vmem:[#allocation3 + $0x178] sm:$0xff] %vm245, 0.0
          %457 = vst.msk [vmem:[#allocation3 + $0x180] sm:$0xff] %vm245, 0.0
          %458 = vst.msk [vmem:[#allocation3 + $0x188] sm:$0xff] %vm245, 0.0
          %459 = vst.msk [vmem:[#allocation3 + $0x190] sm:$0xff] %vm245, 0.0
          %460 = vst.msk [vmem:[#allocation3 + $0x198] sm:$0xff] %vm245, 0.0
          %461 = vst.msk [vmem:[#allocation3 + $0x1a0] sm:$0xff] %vm245, 0.0
          %462 = vst.msk [vmem:[#allocation3 + $0x1a8] sm:$0xff] %vm245, 0.0
          %463 = vst.msk [vmem:[#allocation3 + $0x1b0] sm:$0xff] %vm245, 0.0
          %464 = vst.msk [vmem:[#allocation3 + $0x1b8] sm:$0xff] %vm245, 0.0
          %465 = vst.msk [vmem:[#allocation3 + $0x1c0] sm:$0xff] %vm245, 0.0
          %466 = vst.msk [vmem:[#allocation3 + $0x1c8] sm:$0xff] %vm245, 0.0
          %467 = vst.msk [vmem:[#allocation3 + $0x1d0] sm:$0xff] %vm245, 0.0
          %468 = vst.msk [vmem:[#allocation3 + $0x1d8] sm:$0xff] %vm245, 0.0
          %469 = vst.msk [vmem:[#allocation3 + $0x1e0] sm:$0xff] %vm245, 0.0
          %470 = vst.msk [vmem:[#allocation3 + $0x1e8] sm:$0xff] %vm245, 0.0
          %471 = vst.msk [vmem:[#allocation3 + $0x1f0] sm:$0xff] %vm245, 0.0
          %472 = vst.msk [vmem:[#allocation3 + $0x1f8] sm:$0xff] %vm245, 0.0
          %473 = vst [vmem:[#allocation4] sm:$0xff] 0
          %474 = vst [vmem:[#allocation4 + $0x8] sm:$0xff] 0
          %475 = vst [vmem:[#allocation4 + $0x10] sm:$0xff] 0
          %476 = vst [vmem:[#allocation4 + $0x18] sm:$0xff] 0
          %477 = vst [vmem:[#allocation4 + $0x20] sm:$0xff] 0
          %478 = vst [vmem:[#allocation4 + $0x28] sm:$0xff] 0
          %479 = vst [vmem:[#allocation4 + $0x30] sm:$0xff] 0
          %480 = vst [vmem:[#allocation4 + $0x38] sm:$0xff] 0
          %481 = vst [vmem:[#allocation4 + $0x40] sm:$0xff] 0
          %482 = vst [vmem:[#allocation4 + $0x48] sm:$0xff] 0
          %483 = vst [vmem:[#allocation4 + $0x50] sm:$0xff] 0
          %484 = vst [vmem:[#allocation4 + $0x58] sm:$0xff] 0
          %485 = vst [vmem:[#allocation4 + $0x60] sm:$0xff] 0
          %486 = vst [vmem:[#allocation4 + $0x68] sm:$0xff] 0
          %487 = vst [vmem:[#allocation4 + $0x70] sm:$0xff] 0
          %488 = vst [vmem:[#allocation4 + $0x78] sm:$0xff] 0
          %489 = vst [vmem:[#allocation4 + $0x80] sm:$0xff] 0
          %490 = vst [vmem:[#allocation4 + $0x88] sm:$0xff] 0
          %491 = vst [vmem:[#allocation4 + $0x90] sm:$0xff] 0
          %492 = vst [vmem:[#allocation4 + $0x98] sm:$0xff] 0
          %493 = vst [vmem:[#allocation4 + $0xa0] sm:$0xff] 0
          %494 = vst [vmem:[#allocation4 + $0xa8] sm:$0xff] 0
          %495 = vst [vmem:[#allocation4 + $0xb0] sm:$0xff] 0
          %496 = vst [vmem:[#allocation4 + $0xb8] sm:$0xff] 0
          %497 = vst [vmem:[#allocation4 + $0xc0] sm:$0xff] 0
          %498 = vst [vmem:[#allocation4 + $0xc8] sm:$0xff] 0
          %499 = vst [vmem:[#allocation4 + $0xd0] sm:$0xff] 0
          %500 = vst [vmem:[#allocation4 + $0xd8] sm:$0xff] 0
          %501 = vst [vmem:[#allocation4 + $0xe0] sm:$0xff] 0
          %502 = vst [vmem:[#allocation4 + $0xe8] sm:$0xff] 0
          %503 = vst [vmem:[#allocation4 + $0xf0] sm:$0xff] 0
          %504 = vst [vmem:[#allocation4 + $0xf8] sm:$0xff] 0
          %505 = vst [vmem:[#allocation4 + $0x100] sm:$0xff] 0
          %506 = vst [vmem:[#allocation4 + $0x108] sm:$0xff] 0
          %507 = vst [vmem:[#allocation4 + $0x110] sm:$0xff] 0
          %508 = vst [vmem:[#allocation4 + $0x118] sm:$0xff] 0
          %509 = vst [vmem:[#allocation4 + $0x120] sm:$0xff] 0
          %510 = vst [vmem:[#allocation4 + $0x128] sm:$0xff] 0
          %511 = vst [vmem:[#allocation4 + $0x130] sm:$0xff] 0
          %512 = vst [vmem:[#allocation4 + $0x138] sm:$0xff] 0
          %513 = vst [vmem:[#allocation4 + $0x140] sm:$0xff] 0
          %514 = vst [vmem:[#allocation4 + $0x148] sm:$0xff] 0
          %515 = vst [vmem:[#allocation4 + $0x150] sm:$0xff] 0
          %516 = vst [vmem:[#allocation4 + $0x158] sm:$0xff] 0
          %517 = vst [vmem:[#allocation4 + $0x160] sm:$0xff] 0
          %518 = vst [vmem:[#allocation4 + $0x168] sm:$0xff] 0
          %519 = vst [vmem:[#allocation4 + $0x170] sm:$0xff] 0
          %520 = vst [vmem:[#allocation4 + $0x178] sm:$0xff] 0
          %521 = vst [vmem:[#allocation4 + $0x180] sm:$0xff] 0
          %522 = vst [vmem:[#allocation4 + $0x188] sm:$0xff] 0
          %523 = vst [vmem:[#allocation4 + $0x190] sm:$0xff] 0
          %524 = vst [vmem:[#allocation4 + $0x198] sm:$0xff] 0
          %525 = vst [vmem:[#allocation4 + $0x1a0] sm:$0xff] 0
          %526 = vst [vmem:[#allocation4 + $0x1a8] sm:$0xff] 0
          %527 = vst [vmem:[#allocation4 + $0x1b0] sm:$0xff] 0
          %528 = vst [vmem:[#allocation4 + $0x1b8] sm:$0xff] 0
          %529 = vst [vmem:[#allocation4 + $0x1c0] sm:$0xff] 0
          %530 = vst [vmem:[#allocation4 + $0x1c8] sm:$0xff] 0
          %531 = vst [vmem:[#allocation4 + $0x1d0] sm:$0xff] 0
          %532 = vst [vmem:[#allocation4 + $0x1d8] sm:$0xff] 0
          %533 = vst [vmem:[#allocation4 + $0x1e0] sm:$0xff] 0
          %534 = vst [vmem:[#allocation4 + $0x1e8] sm:$0xff] 0
          %535 = vst [vmem:[#allocation4 + $0x1f0] sm:$0xff] 0
          %536 = vst [vmem:[#allocation4 + $0x1f8] sm:$0xff] 0
          %537 = vst [vmem:[#allocation4 + $0x200] sm:$0xff] 0
          %538 = vst [vmem:[#allocation4 + $0x208] sm:$0xff] 0
          %539 = vst [vmem:[#allocation4 + $0x210] sm:$0xff] 0
          %540 = vst [vmem:[#allocation4 + $0x218] sm:$0xff] 0
          %541 = vst [vmem:[#allocation4 + $0x220] sm:$0xff] 0
          %542 = vst [vmem:[#allocation4 + $0x228] sm:$0xff] 0
          %543 = vst [vmem:[#allocation4 + $0x230] sm:$0xff] 0
          %544 = vst [vmem:[#allocation4 + $0x238] sm:$0xff] 0
          %545 = vst [vmem:[#allocation4 + $0x240] sm:$0xff] 0
          %546 = vst [vmem:[#allocation4 + $0x248] sm:$0xff] 0
          %547 = vst [vmem:[#allocation4 + $0x250] sm:$0xff] 0
          %548 = vst [vmem:[#allocation4 + $0x258] sm:$0xff] 0
          %549 = vst [vmem:[#allocation4 + $0x260] sm:$0xff] 0
          %550 = vst [vmem:[#allocation4 + $0x268] sm:$0xff] 0
          %551 = vst [vmem:[#allocation4 + $0x270] sm:$0xff] 0
          %552 = vst [vmem:[#allocation4 + $0x278] sm:$0xff] 0
          %v553 = vld [vmem:[%s228] sm:$0xff]
          %v554 = vld [vmem:[%s228 + $0x8] sm:$0xff]
          %v555 = vld [vmem:[%s228 + $0x10] sm:$0x3]
          %v556 = vld [vmem:[%s228 + $0x18] sm:$0xff]
          %v557 = vld [vmem:[%s228 + $0x20] sm:$0xff]
          %v558 = vld [vmem:[%s228 + $0x28] sm:$0x3]
          %v559 = vld [vmem:[%s228 + $0x30] sm:$0xff]
          %v560 = vld [vmem:[%s228 + $0x38] sm:$0xff]
          %v561 = vld [vmem:[%s228 + $0x40] sm:$0x3]
          %v562 = vld [vmem:[%s228 + $0x48] sm:$0xff]
          %v563 = vld [vmem:[%s228 + $0x50] sm:$0xff]
          %v564 = vld [vmem:[%s228 + $0x58] sm:$0x3]
          %v565 = vld [vmem:[%s228 + $0x60] sm:$0xff]
          %v566 = vld [vmem:[%s228 + $0x68] sm:$0xff]
          %v567 = vld [vmem:[%s228 + $0x70] sm:$0x3]
          %v568 = vld [vmem:[%s228 + $0x78] sm:$0xff]
          %v569 = vld [vmem:[%s228 + $0x80] sm:$0xff]
          %v570 = vld [vmem:[%s228 + $0x88] sm:$0x3]
          %v571 = vld [vmem:[%s228 + $0x90] sm:$0xff]
          %v572 = vld [vmem:[%s228 + $0x98] sm:$0xff]
          %v573 = vld [vmem:[%s228 + $0xa0] sm:$0x3]
          %v574 = vld [vmem:[%s228 + $0xa8] sm:$0xff]
          %v575 = vld [vmem:[%s228 + $0xb0] sm:$0xff]
          %v576 = vld [vmem:[%s228 + $0xb8] sm:$0x3]
          %v577 = vld [vmem:[%s228 + $0xc0] sm:$0xff]
          %v578 = vld [vmem:[%s228 + $0xc8] sm:$0xff]
          %v579 = vld [vmem:[%s228 + $0xd0] sm:$0x3]
          %v580 = vld [vmem:[%s228 + $0xd8] sm:$0xff]
          %v581 = vld [vmem:[%s228 + $0xe0] sm:$0xff]
          %v582 = vld [vmem:[%s228 + $0xe8] sm:$0x3]
          %v583 = vld [vmem:[%s228 + $0xf0] sm:$0xff]
          %v584 = vld [vmem:[%s228 + $0xf8] sm:$0xff]
          %v585 = vld [vmem:[%s228 + $0x100] sm:$0x3]
          %v586 = vld [vmem:[%s228 + $0x108] sm:$0xff]
          %v587 = vld [vmem:[%s228 + $0x110] sm:$0xff]
          %v588 = vld [vmem:[%s228 + $0x118] sm:$0x3]
          %v589 = vld [vmem:[%s228 + $0x120] sm:$0xff]
          %v590 = vld [vmem:[%s228 + $0x128] sm:$0xff]
          %v591 = vld [vmem:[%s228 + $0x130] sm:$0x3]
          %v592 = vld [vmem:[%s228 + $0x138] sm:$0xff]
          %v593 = vld [vmem:[%s228 + $0x140] sm:$0xff]
          %v594 = vld [vmem:[%s228 + $0x148] sm:$0x3]
          %v595 = vld [vmem:[%s228 + $0x150] sm:$0xff]
          %v596 = vld [vmem:[%s228 + $0x158] sm:$0xff]
          %v597 = vld [vmem:[%s228 + $0x160] sm:$0x3]
          %v598 = vld [vmem:[%s228 + $0x168] sm:$0xff]
          %v599 = vld [vmem:[%s228 + $0x170] sm:$0xff]
          %v600 = vld [vmem:[%s228 + $0x178] sm:$0x3]
          %v601 = vld [vmem:[%s228 + $0x180] sm:$0xff]
          %v602 = vld [vmem:[%s228 + $0x188] sm:$0xff]
          %v603 = vld [vmem:[%s228 + $0x190] sm:$0x3]
          %v604 = vld [vmem:[%s228 + $0x198] sm:$0xff]
          %v605 = vld [vmem:[%s228 + $0x1a0] sm:$0xff]
          %v606 = vld [vmem:[%s228 + $0x1a8] sm:$0x3]
          %607 = vst.msk [vmem:[#allocation2] sm:$0xff] %vm245, %v553
          %608 = vst.msk [vmem:[#allocation2 + $0x8] sm:$0xff] %vm245, %v554
          %609 = vst.msk [vmem:[#allocation2 + $0x10] sm:$0x3] %vm248, %v555
          %610 = vst.msk [vmem:[#allocation2 + $0x18] sm:$0xff] %vm245, %v556
          %611 = vst.msk [vmem:[#allocation2 + $0x20] sm:$0xff] %vm245, %v557
          %612 = vst.msk [vmem:[#allocation2 + $0x28] sm:$0x3] %vm248, %v558
          %613 = vst.msk [vmem:[#allocation2 + $0x30] sm:$0xff] %vm245, %v559
          %614 = vst.msk [vmem:[#allocation2 + $0x38] sm:$0xff] %vm245, %v560
          %615 = vst.msk [vmem:[#allocation2 + $0x40] sm:$0x3] %vm248, %v561
          %616 = vst.msk [vmem:[#allocation2 + $0x48] sm:$0xff] %vm245, %v562
          %617 = vst.msk [vmem:[#allocation2 + $0x50] sm:$0xff] %vm245, %v563
          %618 = vst.msk [vmem:[#allocation2 + $0x58] sm:$0x3] %vm248, %v564
          %619 = vst.msk [vmem:[#allocation2 + $0x60] sm:$0xff] %vm245, %v565
          %620 = vst.msk [vmem:[#allocation2 + $0x68] sm:$0xff] %vm245, %v566
          %621 = vst.msk [vmem:[#allocation2 + $0x70] sm:$0x3] %vm248, %v567
          %622 = vst.msk [vmem:[#allocation2 + $0x78] sm:$0xff] %vm245, %v568
          %623 = vst.msk [vmem:[#allocation2 + $0x80] sm:$0xff] %vm245, %v569
          %624 = vst.msk [vmem:[#allocation2 + $0x88] sm:$0x3] %vm248, %v570
          %625 = vst.msk [vmem:[#allocation2 + $0x90] sm:$0xff] %vm245, %v571
          %626 = vst.msk [vmem:[#allocation2 + $0x98] sm:$0xff] %vm245, %v572
          %627 = vst.msk [vmem:[#allocation2 + $0xa0] sm:$0x3] %vm248, %v573
          %628 = vst.msk [vmem:[#allocation2 + $0xa8] sm:$0xff] %vm245, %v574
          %629 = vst.msk [vmem:[#allocation2 + $0xb0] sm:$0xff] %vm245, %v575
          %630 = vst.msk [vmem:[#allocation2 + $0xb8] sm:$0x3] %vm248, %v576
          %631 = vst.msk [vmem:[#allocation2 + $0xc0] sm:$0xff] %vm245, %v577
          %632 = vst.msk [vmem:[#allocation2 + $0xc8] sm:$0xff] %vm245, %v578
          %633 = vst.msk [vmem:[#allocation2 + $0xd0] sm:$0x3] %vm248, %v579
          %634 = vst.msk [vmem:[#allocation2 + $0xd8] sm:$0xff] %vm245, %v580
          %635 = vst.msk [vmem:[#allocation2 + $0xe0] sm:$0xff] %vm245, %v581
          %636 = vst.msk [vmem:[#allocation2 + $0xe8] sm:$0x3] %vm248, %v582
          %637 = vst.msk [vmem:[#allocation2 + $0xf0] sm:$0xff] %vm245, %v583
          %638 = vst.msk [vmem:[#allocation2 + $0xf8] sm:$0xff] %vm245, %v584
          %639 = vst.msk [vmem:[#allocation2 + $0x100] sm:$0x3] %vm248, %v585
          %640 = vst.msk [vmem:[#allocation2 + $0x108] sm:$0xff] %vm245, %v586
          %641 = vst.msk [vmem:[#allocation2 + $0x110] sm:$0xff] %vm245, %v587
          %642 = vst.msk [vmem:[#allocation2 + $0x118] sm:$0x3] %vm248, %v588
          %643 = vst.msk [vmem:[#allocation2 + $0x120] sm:$0xff] %vm245, %v589
          %644 = vst.msk [vmem:[#allocation2 + $0x128] sm:$0xff] %vm245, %v590
          %645 = vst.msk [vmem:[#allocation2 + $0x130] sm:$0x3] %vm248, %v591
          %646 = vst.msk [vmem:[#allocation2 + $0x138] sm:$0xff] %vm245, %v592
          %647 = vst.msk [vmem:[#allocation2 + $0x140] sm:$0xff] %vm245, %v593
          %648 = vst.msk [vmem:[#allocation2 + $0x148] sm:$0x3] %vm248, %v594
          %649 = vst.msk [vmem:[#allocation2 + $0x150] sm:$0xff] %vm245, %v595
          %650 = vst.msk [vmem:[#allocation2 + $0x158] sm:$0xff] %vm245, %v596
          %651 = vst.msk [vmem:[#allocation2 + $0x160] sm:$0x3] %vm248, %v597
          %652 = vst.msk [vmem:[#allocation2 + $0x168] sm:$0xff] %vm245, %v598
          %653 = vst.msk [vmem:[#allocation2 + $0x170] sm:$0xff] %vm245, %v599
          %654 = vst.msk [vmem:[#allocation2 + $0x178] sm:$0x3] %vm248, %v600
          %655 = vst.msk [vmem:[#allocation2 + $0x180] sm:$0xff] %vm245, %v601
          %656 = vst.msk [vmem:[#allocation2 + $0x188] sm:$0xff] %vm245, %v602
          %657 = vst.msk [vmem:[#allocation2 + $0x190] sm:$0x3] %vm248, %v603
          %658 = vst.msk [vmem:[#allocation2 + $0x198] sm:$0xff] %vm245, %v604
          %659 = vst.msk [vmem:[#allocation2 + $0x1a0] sm:$0xff] %vm245, %v605
          %660 = vst.msk [vmem:[#allocation2 + $0x1a8] sm:$0x3] %vm248, %v606
        $region36: #{convlstm_forward.1} parent=31 // pred_fallthru
          _
        %s661 = sadd.s32 %s26, 1
        %s662 = smul.u32 %s26, 432
        %s663 = scalar_lea.vmem [#allocation2], %s662
        %v664 = vld [vmem:[%s663] sm:$0xff]
        %v665 = vld [vmem:[%s663 + $0x8] sm:$0xff]
        %v666 = vld [vmem:[%s663 + $0x18] sm:$0xff]
        %v667 = vld [vmem:[%s663 + $0x20] sm:$0xff]
        %v668 = vld [vmem:[%s663 + $0x30] sm:$0xff]
        %v669 = vld [vmem:[%s663 + $0x38] sm:$0xff]
        %v670 = vld [vmem:[%s663 + $0x48] sm:$0xff]
        %v671 = vld [vmem:[%s663 + $0x50] sm:$0xff]
        %v672 = vld [vmem:[%s663 + $0x60] sm:$0xff]
        %v673 = vld [vmem:[%s663 + $0x68] sm:$0xff]
        %v674 = vld [vmem:[%s663 + $0x78] sm:$0xff]
        %v675 = vld [vmem:[%s663 + $0x80] sm:$0xff]
        %v676 = vld [vmem:[%s663 + $0x90] sm:$0xff]
        %v677 = vld [vmem:[%s663 + $0x98] sm:$0xff]
        %v678 = vld [vmem:[%s663 + $0xa8] sm:$0xff]
        %v679 = vld [vmem:[%s663 + $0xb0] sm:$0xff]
        %v680 = vld [vmem:[%s663 + $0xc0] sm:$0xff]
        %v681 = vld [vmem:[%s663 + $0xc8] sm:$0xff]
        %v682 = vld [vmem:[%s663 + $0xd8] sm:$0xff]
        %v683 = vld [vmem:[%s663 + $0xe0] sm:$0xff]
        %v684 = vld [vmem:[%s663 + $0xf0] sm:$0xff]
        %v685 = vld [vmem:[%s663 + $0xf8] sm:$0xff]
        %v686 = vld [vmem:[%s663 + $0x108] sm:$0xff]
        %v687 = vld [vmem:[%s663 + $0x110] sm:$0xff]
        %v688 = vld [vmem:[%s663 + $0x120] sm:$0xff]
        %v689 = vld [vmem:[%s663 + $0x128] sm:$0xff]
        %v690 = vld [vmem:[%s663 + $0x138] sm:$0xff]
        %v691 = vld [vmem:[%s663 + $0x140] sm:$0xff]
        %v692 = vld [vmem:[%s663 + $0x150] sm:$0xff]
        %v693 = vld [vmem:[%s663 + $0x158] sm:$0xff]
        %v694 = vld [vmem:[%s663 + $0x168] sm:$0xff]
        %v695 = vld [vmem:[%s663 + $0x170] sm:$0xff]
        %v696 = vpack.c.bf16 %v665, %v664
        %v697 = vpack.c.bf16 %v667, %v666
        %v698 = vpack.c.bf16 %v669, %v668
        %v699 = vpack.c.bf16 %v671, %v670
        %v700 = vpack.c.bf16 %v673, %v672
        %v701 = vpack.c.bf16 %v675, %v674
        %v702 = vpack.c.bf16 %v677, %v676
        %v703 = vpack.c.bf16 %v679, %v678
        %v704 = vpack.c.bf16 %v681, %v680
        %v705 = vpack.c.bf16 %v683, %v682
        %v706 = vpack.c.bf16 %v685, %v684
        %v707 = vpack.c.bf16 %v687, %v686
        %v708 = vpack.c.bf16 %v689, %v688
        %v709 = vpack.c.bf16 %v691, %v690
        %v710 = vpack.c.bf16 %v693, %v692
        %v711 = vpack.c.bf16 %v695, %v694
        %vm712 = vcmask 261120
        %713 = vst.msk [vmem:[#allocation4] sm:$0xff] %vm712, %v696
        %714 = vst.msk [vmem:[#allocation4 + $0x28] sm:$0xff] %vm712, %v697
        %715 = vst.msk [vmem:[#allocation4 + $0x50] sm:$0xff] %vm712, %v698
        %716 = vst.msk [vmem:[#allocation4 + $0x78] sm:$0xff] %vm712, %v699
        %717 = vst.msk [vmem:[#allocation4 + $0xa0] sm:$0xff] %vm712, %v700
        %718 = vst.msk [vmem:[#allocation4 + $0xc8] sm:$0xff] %vm712, %v701
        %719 = vst.msk [vmem:[#allocation4 + $0xf0] sm:$0xff] %vm712, %v702
        %720 = vst.msk [vmem:[#allocation4 + $0x118] sm:$0xff] %vm712, %v703
        %721 = vst.msk [vmem:[#allocation4 + $0x140] sm:$0xff] %vm712, %v704
        %722 = vst.msk [vmem:[#allocation4 + $0x168] sm:$0xff] %vm712, %v705
        %723 = vst.msk [vmem:[#allocation4 + $0x190] sm:$0xff] %vm712, %v706
        %724 = vst.msk [vmem:[#allocation4 + $0x1b8] sm:$0xff] %vm712, %v707
        %725 = vst.msk [vmem:[#allocation4 + $0x1e0] sm:$0xff] %vm712, %v708
        %726 = vst.msk [vmem:[#allocation4 + $0x208] sm:$0xff] %vm712, %v709
        %727 = vst.msk [vmem:[#allocation4 + $0x230] sm:$0xff] %vm712, %v710
        %728 = vst.msk [vmem:[#allocation4 + $0x258] sm:$0xff] %vm712, %v711
        %v729 = vld [vmem:[%s663 + $0x1] sm:$0xff]
        %v730 = vld [vmem:[%s663 + $0x9] sm:$0xff]
        %v731 = vld [vmem:[%s663 + $0x19] sm:$0xff]
        %v732 = vld [vmem:[%s663 + $0x21] sm:$0xff]
        %v733 = vld [vmem:[%s663 + $0x31] sm:$0xff]
        %v734 = vld [vmem:[%s663 + $0x39] sm:$0xff]
        %v735 = vld [vmem:[%s663 + $0x49] sm:$0xff]
        %v736 = vld [vmem:[%s663 + $0x51] sm:$0xff]
        %v737 = vld [vmem:[%s663 + $0x61] sm:$0xff]
        %v738 = vld [vmem:[%s663 + $0x69] sm:$0xff]
        %v739 = vld [vmem:[%s663 + $0x79] sm:$0xff]
        %v740 = vld [vmem:[%s663 + $0x81] sm:$0xff]
        %v741 = vld [vmem:[%s663 + $0x91] sm:$0xff]
        %v742 = vld [vmem:[%s663 + $0x99] sm:$0xff]
        %v743 = vld [vmem:[%s663 + $0xa9] sm:$0xff]
        %v744 = vld [vmem:[%s663 + $0xb1] sm:$0xff]
        %v745 = vld [vmem:[%s663 + $0xc1] sm:$0xff]
        %v746 = vld [vmem:[%s663 + $0xc9] sm:$0xff]
        %v747 = vld [vmem:[%s663 + $0xd9] sm:$0xff]
        %v748 = vld [vmem:[%s663 + $0xe1] sm:$0xff]
        %v749 = vld [vmem:[%s663 + $0xf1] sm:$0xff]
        %v750 = vld [vmem:[%s663 + $0xf9] sm:$0xff]
        %v751 = vld [vmem:[%s663 + $0x109] sm:$0xff]
        %v752 = vld [vmem:[%s663 + $0x111] sm:$0xff]
        %v753 = vld [vmem:[%s663 + $0x121] sm:$0xff]
        %v754 = vld [vmem:[%s663 + $0x129] sm:$0xff]
        %v755 = vld [vmem:[%s663 + $0x139] sm:$0xff]
        %v756 = vld [vmem:[%s663 + $0x141] sm:$0xff]
        %v757 = vld [vmem:[%s663 + $0x151] sm:$0xff]
        %v758 = vld [vmem:[%s663 + $0x159] sm:$0xff]
        %v759 = vld [vmem:[%s663 + $0x169] sm:$0xff]
        %v760 = vld [vmem:[%s663 + $0x171] sm:$0xff]
        %v761 = vpack.c.bf16 %v730, %v729
        %v762 = vpack.c.bf16 %v732, %v731
        %v763 = vpack.c.bf16 %v734, %v733
        %v764 = vpack.c.bf16 %v736, %v735
        %v765 = vpack.c.bf16 %v738, %v737
        %v766 = vpack.c.bf16 %v740, %v739
        %v767 = vpack.c.bf16 %v742, %v741
        %v768 = vpack.c.bf16 %v744, %v743
        %v769 = vpack.c.bf16 %v746, %v745
        %v770 = vpack.c.bf16 %v748, %v747
        %v771 = vpack.c.bf16 %v750, %v749
        %v772 = vpack.c.bf16 %v752, %v751
        %v773 = vpack.c.bf16 %v754, %v753
        %v774 = vpack.c.bf16 %v756, %v755
        %v775 = vpack.c.bf16 %v758, %v757
        %v776 = vpack.c.bf16 %v760, %v759
        %793 = vrot.lane.b32.xlu0 %v761, 32
        %v794 = vpop.permute.xlu0 %793
        %795 = vrot.lane.b32.xlu0 %v762, 32
        %v796 = vpop.permute.xlu0 %795
        %797 = vrot.lane.b32.xlu0 %v763, 32
        %v798 = vpop.permute.xlu0 %797
        %799 = vrot.lane.b32.xlu0 %v764, 32
        %v800 = vpop.permute.xlu0 %799
        %801 = vrot.lane.b32.xlu0 %v765, 32
        %v802 = vpop.permute.xlu0 %801
        %803 = vrot.lane.b32.xlu0 %v766, 32
        %v804 = vpop.permute.xlu0 %803
        %805 = vrot.lane.b32.xlu0 %v767, 32
        %v806 = vpop.permute.xlu0 %805
        %807 = vrot.lane.b32.xlu0 %v768, 32
        %v808 = vpop.permute.xlu0 %807
        %809 = vrot.lane.b32.xlu0 %v769, 32
        %v810 = vpop.permute.xlu0 %809
        %811 = vrot.lane.b32.xlu0 %v770, 32
        %v812 = vpop.permute.xlu0 %811
        %813 = vrot.lane.b32.xlu0 %v771, 32
        %v814 = vpop.permute.xlu0 %813
        %815 = vrot.lane.b32.xlu0 %v772, 32
        %v816 = vpop.permute.xlu0 %815
        %817 = vrot.lane.b32.xlu0 %v773, 32
        %v818 = vpop.permute.xlu0 %817
        %819 = vrot.lane.b32.xlu0 %v774, 32
        %v820 = vpop.permute.xlu0 %819
        %821 = vrot.lane.b32.xlu0 %v775, 32
        %v822 = vpop.permute.xlu0 %821
        %823 = vrot.lane.b32.xlu0 %v776, 32
        %v824 = vpop.permute.xlu0 %823
        %vm841 = vcmask 523520
        %842 = vst.msk [vmem:[#allocation4] sm:$0xff] %vm841, %v794
        %843 = vst.msk [vmem:[#allocation4 + $0x28] sm:$0xff] %vm841, %v796
        %844 = vst.msk [vmem:[#allocation4 + $0x50] sm:$0xff] %vm841, %v798
        %845 = vst.msk [vmem:[#allocation4 + $0x78] sm:$0xff] %vm841, %v800
        %846 = vst.msk [vmem:[#allocation4 + $0xa0] sm:$0xff] %vm841, %v802
        %847 = vst.msk [vmem:[#allocation4 + $0xc8] sm:$0xff] %vm841, %v804
        %848 = vst.msk [vmem:[#allocation4 + $0xf0] sm:$0xff] %vm841, %v806
        %849 = vst.msk [vmem:[#allocation4 + $0x118] sm:$0xff] %vm841, %v808
        %850 = vst.msk [vmem:[#allocation4 + $0x140] sm:$0xff] %vm841, %v810
        %851 = vst.msk [vmem:[#allocation4 + $0x168] sm:$0xff] %vm841, %v812
        %852 = vst.msk [vmem:[#allocation4 + $0x190] sm:$0xff] %vm841, %v814
        %853 = vst.msk [vmem:[#allocation4 + $0x1b8] sm:$0xff] %vm841, %v816
        %854 = vst.msk [vmem:[#allocation4 + $0x1e0] sm:$0xff] %vm841, %v818
        %855 = vst.msk [vmem:[#allocation4 + $0x208] sm:$0xff] %vm841, %v820
        %856 = vst.msk [vmem:[#allocation4 + $0x230] sm:$0xff] %vm841, %v822
        %857 = vst.msk [vmem:[#allocation4 + $0x258] sm:$0xff] %vm841, %v824
        %v858 = vld [vmem:[%s663 + $0x2] sm:$0xff]
        %v859 = vld [vmem:[%s663 + $0xa] sm:$0xff]
        %v860 = vld [vmem:[%s663 + $0x1a] sm:$0xff]
        %v861 = vld [vmem:[%s663 + $0x22] sm:$0xff]
        %v862 = vld [vmem:[%s663 + $0x32] sm:$0xff]
        %v863 = vld [vmem:[%s663 + $0x3a] sm:$0xff]
        %v864 = vld [vmem:[%s663 + $0x4a] sm:$0xff]
        %v865 = vld [vmem:[%s663 + $0x52] sm:$0xff]
        %v866 = vld [vmem:[%s663 + $0x62] sm:$0xff]
        %v867 = vld [vmem:[%s663 + $0x6a] sm:$0xff]
        %v868 = vld [vmem:[%s663 + $0x7a] sm:$0xff]
        %v869 = vld [vmem:[%s663 + $0x82] sm:$0xff]
        %v870 = vld [vmem:[%s663 + $0x92] sm:$0xff]
        %v871 = vld [vmem:[%s663 + $0x9a] sm:$0xff]
        %v872 = vld [vmem:[%s663 + $0xaa] sm:$0xff]
        %v873 = vld [vmem:[%s663 + $0xb2] sm:$0xff]
        %v874 = vld [vmem:[%s663 + $0xc2] sm:$0xff]
        %v875 = vld [vmem:[%s663 + $0xca] sm:$0xff]
        %v876 = vld [vmem:[%s663 + $0xda] sm:$0xff]
        %v877 = vld [vmem:[%s663 + $0xe2] sm:$0xff]
        %v878 = vld [vmem:[%s663 + $0xf2] sm:$0xff]
        %v879 = vld [vmem:[%s663 + $0xfa] sm:$0xff]
        %v880 = vld [vmem:[%s663 + $0x10a] sm:$0xff]
        %v881 = vld [vmem:[%s663 + $0x112] sm:$0xff]
        %v882 = vld [vmem:[%s663 + $0x122] sm:$0xff]
        %v883 = vld [vmem:[%s663 + $0x12a] sm:$0xff]
        %v884 = vld [vmem:[%s663 + $0x13a] sm:$0xff]
        %v885 = vld [vmem:[%s663 + $0x142] sm:$0xff]
        %v886 = vld [vmem:[%s663 + $0x152] sm:$0xff]
        %v887 = vld [vmem:[%s663 + $0x15a] sm:$0xff]
        %v888 = vld [vmem:[%s663 + $0x16a] sm:$0xff]
        %v889 = vld [vmem:[%s663 + $0x172] sm:$0xff]
        %v890 = vpack.c.bf16 %v859, %v858
        %v891 = vpack.c.bf16 %v861, %v860
        %v892 = vpack.c.bf16 %v863, %v862
        %v893 = vpack.c.bf16 %v865, %v864
        %v894 = vpack.c.bf16 %v867, %v866
        %v895 = vpack.c.bf16 %v869, %v868
        %v896 = vpack.c.bf16 %v871, %v870
        %v897 = vpack.c.bf16 %v873, %v872
        %v898 = vpack.c.bf16 %v875, %v874
        %v899 = vpack.c.bf16 %v877, %v876
        %v900 = vpack.c.bf16 %v879, %v878
        %v901 = vpack.c.bf16 %v881, %v880
        %v902 = vpack.c.bf16 %v883, %v882
        %v903 = vpack.c.bf16 %v885, %v884
        %v904 = vpack.c.bf16 %v887, %v886
        %v905 = vpack.c.bf16 %v889, %v888
        %922 = vrot.lane.b32.xlu0 %v890, 64
        %v923 = vpop.permute.xlu0 %922
        %924 = vrot.lane.b32.xlu0 %v891, 64
        %v925 = vpop.permute.xlu0 %924
        %926 = vrot.lane.b32.xlu0 %v892, 64
        %v927 = vpop.permute.xlu0 %926
        %928 = vrot.lane.b32.xlu0 %v893, 64
        %v929 = vpop.permute.xlu0 %928
        %930 = vrot.lane.b32.xlu0 %v894, 64
        %v931 = vpop.permute.xlu0 %930
        %932 = vrot.lane.b32.xlu0 %v895, 64
        %v933 = vpop.permute.xlu0 %932
        %934 = vrot.lane.b32.xlu0 %v896, 64
        %v935 = vpop.permute.xlu0 %934
        %936 = vrot.lane.b32.xlu0 %v897, 64
        %v937 = vpop.permute.xlu0 %936
        %938 = vrot.lane.b32.xlu0 %v898, 64
        %v939 = vpop.permute.xlu0 %938
        %940 = vrot.lane.b32.xlu0 %v899, 64
        %v941 = vpop.permute.xlu0 %940
        %942 = vrot.lane.b32.xlu0 %v900, 64
        %v943 = vpop.permute.xlu0 %942
        %944 = vrot.lane.b32.xlu0 %v901, 64
        %v945 = vpop.permute.xlu0 %944
        %946 = vrot.lane.b32.xlu0 %v902, 64
        %v947 = vpop.permute.xlu0 %946
        %948 = vrot.lane.b32.xlu0 %v903, 64
        %v949 = vpop.permute.xlu0 %948
        %950 = vrot.lane.b32.xlu0 %v904, 64
        %v951 = vpop.permute.xlu0 %950
        %952 = vrot.lane.b32.xlu0 %v905, 64
        %v953 = vpop.permute.xlu0 %952
        %vm970 = vcmask 785920
        %971 = vst.msk [vmem:[#allocation4] sm:$0xff] %vm970, %v923
        %972 = vst.msk [vmem:[#allocation4 + $0x28] sm:$0xff] %vm970, %v925
        %973 = vst.msk [vmem:[#allocation4 + $0x50] sm:$0xff] %vm970, %v927
        %974 = vst.msk [vmem:[#allocation4 + $0x78] sm:$0xff] %vm970, %v929
        %975 = vst.msk [vmem:[#allocation4 + $0xa0] sm:$0xff] %vm970, %v931
        %976 = vst.msk [vmem:[#allocation4 + $0xc8] sm:$0xff] %vm970, %v933
        %977 = vst.msk [vmem:[#allocation4 + $0xf0] sm:$0xff] %vm970, %v935
        %978 = vst.msk [vmem:[#allocation4 + $0x118] sm:$0xff] %vm970, %v937
        %979 = vst.msk [vmem:[#allocation4 + $0x140] sm:$0xff] %vm970, %v939
        %980 = vst.msk [vmem:[#allocation4 + $0x168] sm:$0xff] %vm970, %v941
        %981 = vst.msk [vmem:[#allocation4 + $0x190] sm:$0xff] %vm970, %v943
        %982 = vst.msk [vmem:[#allocation4 + $0x1b8] sm:$0xff] %vm970, %v945
        %983 = vst.msk [vmem:[#allocation4 + $0x1e0] sm:$0xff] %vm970, %v947
        %984 = vst.msk [vmem:[#allocation4 + $0x208] sm:$0xff] %vm970, %v949
        %985 = vst.msk [vmem:[#allocation4 + $0x230] sm:$0xff] %vm970, %v951
        %986 = vst.msk [vmem:[#allocation4 + $0x258] sm:$0xff] %vm970, %v953
        %s987 = sadd.s32 24, %s662
        %s988 = scalar_lea.vmem [#allocation2], %s987
        %v989 = vld [vmem:[%s988] sm:$0xff]
        %v990 = vld [vmem:[%s988 + $0x8] sm:$0xff]
        %v991 = vld [vmem:[%s988 + $0x18] sm:$0xff]
        %v992 = vld [vmem:[%s988 + $0x20] sm:$0xff]
        %v993 = vld [vmem:[%s988 + $0x30] sm:$0xff]
        %v994 = vld [vmem:[%s988 + $0x38] sm:$0xff]
        %v995 = vld [vmem:[%s988 + $0x48] sm:$0xff]
        %v996 = vld [vmem:[%s988 + $0x50] sm:$0xff]
        %v997 = vld [vmem:[%s988 + $0x60] sm:$0xff]
        %v998 = vld [vmem:[%s988 + $0x68] sm:$0xff]
        %v999 = vld [vmem:[%s988 + $0x78] sm:$0xff]
        %v1000 = vld [vmem:[%s988 + $0x80] sm:$0xff]
        %v1001 = vld [vmem:[%s988 + $0x90] sm:$0xff]
        %v1002 = vld [vmem:[%s988 + $0x98] sm:$0xff]
        %v1003 = vld [vmem:[%s988 + $0xa8] sm:$0xff]
        %v1004 = vld [vmem:[%s988 + $0xb0] sm:$0xff]
        %v1005 = vld [vmem:[%s988 + $0xc0] sm:$0xff]
        %v1006 = vld [vmem:[%s988 + $0xc8] sm:$0xff]
        %v1007 = vld [vmem:[%s988 + $0xd8] sm:$0xff]
        %v1008 = vld [vmem:[%s988 + $0xe0] sm:$0xff]
        %v1009 = vld [vmem:[%s988 + $0xf0] sm:$0xff]
        %v1010 = vld [vmem:[%s988 + $0xf8] sm:$0xff]
        %v1011 = vld [vmem:[%s988 + $0x108] sm:$0xff]
        %v1012 = vld [vmem:[%s988 + $0x110] sm:$0xff]
        %v1013 = vld [vmem:[%s988 + $0x120] sm:$0xff]
        %v1014 = vld [vmem:[%s988 + $0x128] sm:$0xff]
        %v1015 = vld [vmem:[%s988 + $0x138] sm:$0xff]
        %v1016 = vld [vmem:[%s988 + $0x140] sm:$0xff]
        %v1017 = vld [vmem:[%s988 + $0x150] sm:$0xff]
        %v1018 = vld [vmem:[%s988 + $0x158] sm:$0xff]
        %v1019 = vld [vmem:[%s988 + $0x168] sm:$0xff]
        %v1020 = vld [vmem:[%s988 + $0x170] sm:$0xff]
        %v1021 = vpack.c.bf16 %v990, %v989
        %v1022 = vpack.c.bf16 %v992, %v991
        %v1023 = vpack.c.bf16 %v994, %v993
        %v1024 = vpack.c.bf16 %v996, %v995
        %v1025 = vpack.c.bf16 %v998, %v997
        %v1026 = vpack.c.bf16 %v1000, %v999
        %v1027 = vpack.c.bf16 %v1002, %v1001
        %v1028 = vpack.c.bf16 %v1004, %v1003
        %v1029 = vpack.c.bf16 %v1006, %v1005
        %v1030 = vpack.c.bf16 %v1008, %v1007
        %v1031 = vpack.c.bf16 %v1010, %v1009
        %v1032 = vpack.c.bf16 %v1012, %v1011
        %v1033 = vpack.c.bf16 %v1014, %v1013
        %v1034 = vpack.c.bf16 %v1016, %v1015
        %v1035 = vpack.c.bf16 %v1018, %v1017
        %v1036 = vpack.c.bf16 %v1020, %v1019
        %1053 = vrot.lane.b32.xlu0 %v1021, 96
        %v1054 = vpop.permute.xlu0 %1053
        %1055 = vrot.lane.b32.xlu0 %v1022, 96
        %v1056 = vpop.permute.xlu0 %1055
        %1057 = vrot.lane.b32.xlu0 %v1023, 96
        %v1058 = vpop.permute.xlu0 %1057
        %1059 = vrot.lane.b32.xlu0 %v1024, 96
        %v1060 = vpop.permute.xlu0 %1059
        %1061 = vrot.lane.b32.xlu0 %v1025, 96
        %v1062 = vpop.permute.xlu0 %1061
        %1063 = vrot.lane.b32.xlu0 %v1026, 96
        %v1064 = vpop.permute.xlu0 %1063
        %1065 = vrot.lane.b32.xlu0 %v1027, 96
        %v1066 = vpop.permute.xlu0 %1065
        %1067 = vrot.lane.b32.xlu0 %v1028, 96
        %v1068 = vpop.permute.xlu0 %1067
        %1069 = vrot.lane.b32.xlu0 %v1029, 96
        %v1070 = vpop.permute.xlu0 %1069
        %1071 = vrot.lane.b32.xlu0 %v1030, 96
        %v1072 = vpop.permute.xlu0 %1071
        %1073 = vrot.lane.b32.xlu0 %v1031, 96
        %v1074 = vpop.permute.xlu0 %1073
        %1075 = vrot.lane.b32.xlu0 %v1032, 96
        %v1076 = vpop.permute.xlu0 %1075
        %1077 = vrot.lane.b32.xlu0 %v1033, 96
        %v1078 = vpop.permute.xlu0 %1077
        %1079 = vrot.lane.b32.xlu0 %v1034, 96
        %v1080 = vpop.permute.xlu0 %1079
        %1081 = vrot.lane.b32.xlu0 %v1035, 96
        %v1082 = vpop.permute.xlu0 %1081
        %1083 = vrot.lane.b32.xlu0 %v1036, 96
        %v1084 = vpop.permute.xlu0 %1083
        %vm1101 = vcmask 1048320
        %1102 = vst.msk [vmem:[#allocation4] sm:$0xff] %vm1101, %v1054
        %1103 = vst.msk [vmem:[#allocation4 + $0x28] sm:$0xff] %vm1101, %v1056
        %1104 = vst.msk [vmem:[#allocation4 + $0x50] sm:$0xff] %vm1101, %v1058
        %1105 = vst.msk [vmem:[#allocation4 + $0x78] sm:$0xff] %vm1101, %v1060
        %1106 = vst.msk [vmem:[#allocation4 + $0xa0] sm:$0xff] %vm1101, %v1062
        %1107 = vst.msk [vmem:[#allocation4 + $0xc8] sm:$0xff] %vm1101, %v1064
        %1108 = vst.msk [vmem:[#allocation4 + $0xf0] sm:$0xff] %vm1101, %v1066
        %1109 = vst.msk [vmem:[#allocation4 + $0x118] sm:$0xff] %vm1101, %v1068
        %1110 = vst.msk [vmem:[#allocation4 + $0x140] sm:$0xff] %vm1101, %v1070
        %1111 = vst.msk [vmem:[#allocation4 + $0x168] sm:$0xff] %vm1101, %v1072
        %1112 = vst.msk [vmem:[#allocation4 + $0x190] sm:$0xff] %vm1101, %v1074
        %1113 = vst.msk [vmem:[#allocation4 + $0x1b8] sm:$0xff] %vm1101, %v1076
        %1114 = vst.msk [vmem:[#allocation4 + $0x1e0] sm:$0xff] %vm1101, %v1078
        %1115 = vst.msk [vmem:[#allocation4 + $0x208] sm:$0xff] %vm1101, %v1080
        %1116 = vst.msk [vmem:[#allocation4 + $0x230] sm:$0xff] %vm1101, %v1082
        %1117 = vst.msk [vmem:[#allocation4 + $0x258] sm:$0xff] %vm1101, %v1084
        %v1118 = vld [vmem:[%s988 + $0x1] sm:$0xff]
        %v1119 = vld [vmem:[%s988 + $0x9] sm:$0xff]
        %v1120 = vld [vmem:[%s988 + $0x19] sm:$0xff]
        %v1121 = vld [vmem:[%s988 + $0x21] sm:$0xff]
        %v1122 = vld [vmem:[%s988 + $0x31] sm:$0xff]
        %v1123 = vld [vmem:[%s988 + $0x39] sm:$0xff]
        %v1124 = vld [vmem:[%s988 + $0x49] sm:$0xff]
        %v1125 = vld [vmem:[%s988 + $0x51] sm:$0xff]
        %v1126 = vld [vmem:[%s988 + $0x61] sm:$0xff]
        %v1127 = vld [vmem:[%s988 + $0x69] sm:$0xff]
        %v1128 = vld [vmem:[%s988 + $0x79] sm:$0xff]
        %v1129 = vld [vmem:[%s988 + $0x81] sm:$0xff]
        %v1130 = vld [vmem:[%s988 + $0x91] sm:$0xff]
        %v1131 = vld [vmem:[%s988 + $0x99] sm:$0xff]
        %v1132 = vld [vmem:[%s988 + $0xa9] sm:$0xff]
        %v1133 = vld [vmem:[%s988 + $0xb1] sm:$0xff]
        %v1134 = vld [vmem:[%s988 + $0xc1] sm:$0xff]
        %v1135 = vld [vmem:[%s988 + $0xc9] sm:$0xff]
        %v1136 = vld [vmem:[%s988 + $0xd9] sm:$0xff]
        %v1137 = vld [vmem:[%s988 + $0xe1] sm:$0xff]
        %v1138 = vld [vmem:[%s988 + $0xf1] sm:$0xff]
        %v1139 = vld [vmem:[%s988 + $0xf9] sm:$0xff]
        %v1140 = vld [vmem:[%s988 + $0x109] sm:$0xff]
        %v1141 = vld [vmem:[%s988 + $0x111] sm:$0xff]
        %v1142 = vld [vmem:[%s988 + $0x121] sm:$0xff]
        %v1143 = vld [vmem:[%s988 + $0x129] sm:$0xff]
        %v1144 = vld [vmem:[%s988 + $0x139] sm:$0xff]
        %v1145 = vld [vmem:[%s988 + $0x141] sm:$0xff]
        %v1146 = vld [vmem:[%s988 + $0x151] sm:$0xff]
        %v1147 = vld [vmem:[%s988 + $0x159] sm:$0xff]
        %v1148 = vld [vmem:[%s988 + $0x169] sm:$0xff]
        %v1149 = vld [vmem:[%s988 + $0x171] sm:$0xff]
        %v1150 = vpack.c.bf16 %v1119, %v1118
        %v1151 = vpack.c.bf16 %v1121, %v1120
        %v1152 = vpack.c.bf16 %v1123, %v1122
        %v1153 = vpack.c.bf16 %v1125, %v1124
        %v1154 = vpack.c.bf16 %v1127, %v1126
        %v1155 = vpack.c.bf16 %v1129, %v1128
        %v1156 = vpack.c.bf16 %v1131, %v1130
        %v1157 = vpack.c.bf16 %v1133, %v1132
        %v1158 = vpack.c.bf16 %v1135, %v1134
        %v1159 = vpack.c.bf16 %v1137, %v1136
        %v1160 = vpack.c.bf16 %v1139, %v1138
        %v1161 = vpack.c.bf16 %v1141, %v1140
        %v1162 = vpack.c.bf16 %v1143, %v1142
        %v1163 = vpack.c.bf16 %v1145, %v1144
        %v1164 = vpack.c.bf16 %v1147, %v1146
        %v1165 = vpack.c.bf16 %v1149, %v1148
        %1166 = vst.msk [vmem:[#allocation4 + $0x8] sm:$0xff] %vm712, %v1150
        %1167 = vst.msk [vmem:[#allocation4 + $0x30] sm:$0xff] %vm712, %v1151
        %1168 = vst.msk [vmem:[#allocation4 + $0x58] sm:$0xff] %vm712, %v1152
        %1169 = vst.msk [vmem:[#allocation4 + $0x80] sm:$0xff] %vm712, %v1153
        %1170 = vst.msk [vmem:[#allocation4 + $0xa8] sm:$0xff] %vm712, %v1154
        %1171 = vst.msk [vmem:[#allocation4 + $0xd0] sm:$0xff] %vm712, %v1155
        %1172 = vst.msk [vmem:[#allocation4 + $0xf8] sm:$0xff] %vm712, %v1156
        %1173 = vst.msk [vmem:[#allocation4 + $0x120] sm:$0xff] %vm712, %v1157
        %1174 = vst.msk [vmem:[#allocation4 + $0x148] sm:$0xff] %vm712, %v1158
        %1175 = vst.msk [vmem:[#allocation4 + $0x170] sm:$0xff] %vm712, %v1159
        %1176 = vst.msk [vmem:[#allocation4 + $0x198] sm:$0xff] %vm712, %v1160
        %1177 = vst.msk [vmem:[#allocation4 + $0x1c0] sm:$0xff] %vm712, %v1161
        %1178 = vst.msk [vmem:[#allocation4 + $0x1e8] sm:$0xff] %vm712, %v1162
        %1179 = vst.msk [vmem:[#allocation4 + $0x210] sm:$0xff] %vm712, %v1163
        %1180 = vst.msk [vmem:[#allocation4 + $0x238] sm:$0xff] %vm712, %v1164
        %1181 = vst.msk [vmem:[#allocation4 + $0x260] sm:$0xff] %vm712, %v1165
        %v1182 = vld [vmem:[%s988 + $0x2] sm:$0xff]
        %v1183 = vld [vmem:[%s988 + $0xa] sm:$0xff]
        %v1184 = vld [vmem:[%s988 + $0x1a] sm:$0xff]
        %v1185 = vld [vmem:[%s988 + $0x22] sm:$0xff]
        %v1186 = vld [vmem:[%s988 + $0x32] sm:$0xff]
        %v1187 = vld [vmem:[%s988 + $0x3a] sm:$0xff]
        %v1188 = vld [vmem:[%s988 + $0x4a] sm:$0xff]
        %v1189 = vld [vmem:[%s988 + $0x52] sm:$0xff]
        %v1190 = vld [vmem:[%s988 + $0x62] sm:$0xff]
        %v1191 = vld [vmem:[%s988 + $0x6a] sm:$0xff]
        %v1192 = vld [vmem:[%s988 + $0x7a] sm:$0xff]
        %v1193 = vld [vmem:[%s988 + $0x82] sm:$0xff]
        %v1194 = vld [vmem:[%s988 + $0x92] sm:$0xff]
        %v1195 = vld [vmem:[%s988 + $0x9a] sm:$0xff]
        %v1196 = vld [vmem:[%s988 + $0xaa] sm:$0xff]
        %v1197 = vld [vmem:[%s988 + $0xb2] sm:$0xff]
        %v1198 = vld [vmem:[%s988 + $0xc2] sm:$0xff]
        %v1199 = vld [vmem:[%s988 + $0xca] sm:$0xff]
        %v1200 = vld [vmem:[%s988 + $0xda] sm:$0xff]
        %v1201 = vld [vmem:[%s988 + $0xe2] sm:$0xff]
        %v1202 = vld [vmem:[%s988 + $0xf2] sm:$0xff]
        %v1203 = vld [vmem:[%s988 + $0xfa] sm:$0xff]
        %v1204 = vld [vmem:[%s988 + $0x10a] sm:$0xff]
        %v1205 = vld [vmem:[%s988 + $0x112] sm:$0xff]
        %v1206 = vld [vmem:[%s988 + $0x122] sm:$0xff]
        %v1207 = vld [vmem:[%s988 + $0x12a] sm:$0xff]
        %v1208 = vld [vmem:[%s988 + $0x13a] sm:$0xff]
        %v1209 = vld [vmem:[%s988 + $0x142] sm:$0xff]
        %v1210 = vld [vmem:[%s988 + $0x152] sm:$0xff]
        %v1211 = vld [vmem:[%s988 + $0x15a] sm:$0xff]
        %v1212 = vld [vmem:[%s988 + $0x16a] sm:$0xff]
        %v1213 = vld [vmem:[%s988 + $0x172] sm:$0xff]
        %v1214 = vpack.c.bf16 %v1183, %v1182
        %v1215 = vpack.c.bf16 %v1185, %v1184
        %v1216 = vpack.c.bf16 %v1187, %v1186
        %v1217 = vpack.c.bf16 %v1189, %v1188
        %v1218 = vpack.c.bf16 %v1191, %v1190
        %v1219 = vpack.c.bf16 %v1193, %v1192
        %v1220 = vpack.c.bf16 %v1195, %v1194
        %v1221 = vpack.c.bf16 %v1197, %v1196
        %v1222 = vpack.c.bf16 %v1199, %v1198
        %v1223 = vpack.c.bf16 %v1201, %v1200
        %v1224 = vpack.c.bf16 %v1203, %v1202
        %v1225 = vpack.c.bf16 %v1205, %v1204
        %v1226 = vpack.c.bf16 %v1207, %v1206
        %v1227 = vpack.c.bf16 %v1209, %v1208
        %v1228 = vpack.c.bf16 %v1211, %v1210
        %v1229 = vpack.c.bf16 %v1213, %v1212
        %1246 = vrot.lane.b32.xlu0 %v1214, 32
        %v1247 = vpop.permute.xlu0 %1246
        %1248 = vrot.lane.b32.xlu0 %v1215, 32
        %v1249 = vpop.permute.xlu0 %1248
        %1250 = vrot.lane.b32.xlu0 %v1216, 32
        %v1251 = vpop.permute.xlu0 %1250
        %1252 = vrot.lane.b32.xlu0 %v1217, 32
        %v1253 = vpop.permute.xlu0 %1252
        %1254 = vrot.lane.b32.xlu0 %v1218, 32
        %v1255 = vpop.permute.xlu0 %1254
        %1256 = vrot.lane.b32.xlu0 %v1219, 32
        %v1257 = vpop.permute.xlu0 %1256
        %1258 = vrot.lane.b32.xlu0 %v1220, 32
        %v1259 = vpop.permute.xlu0 %1258
        %1260 = vrot.lane.b32.xlu0 %v1221, 32
        %v1261 = vpop.permute.xlu0 %1260
        %1262 = vrot.lane.b32.xlu0 %v1222, 32
        %v1263 = vpop.permute.xlu0 %1262
        %1264 = vrot.lane.b32.xlu0 %v1223, 32
        %v1265 = vpop.permute.xlu0 %1264
        %1266 = vrot.lane.b32.xlu0 %v1224, 32
        %v1267 = vpop.permute.xlu0 %1266
        %1268 = vrot.lane.b32.xlu0 %v1225, 32
        %v1269 = vpop.permute.xlu0 %1268
        %1270 = vrot.lane.b32.xlu0 %v1226, 32
        %v1271 = vpop.permute.xlu0 %1270
        %1272 = vrot.lane.b32.xlu0 %v1227, 32
        %v1273 = vpop.permute.xlu0 %1272
        %1274 = vrot.lane.b32.xlu0 %v1228, 32
        %v1275 = vpop.permute.xlu0 %1274
        %1276 = vrot.lane.b32.xlu0 %v1229, 32
        %v1277 = vpop.permute.xlu0 %1276
        %1294 = vst.msk [vmem:[#allocation4 + $0x8] sm:$0xff] %vm841, %v1247
        %1295 = vst.msk [vmem:[#allocation4 + $0x30] sm:$0xff] %vm841, %v1249
        %1296 = vst.msk [vmem:[#allocation4 + $0x58] sm:$0xff] %vm841, %v1251
        %1297 = vst.msk [vmem:[#allocation4 + $0x80] sm:$0xff] %vm841, %v1253
        %1298 = vst.msk [vmem:[#allocation4 + $0xa8] sm:$0xff] %vm841, %v1255
        %1299 = vst.msk [vmem:[#allocation4 + $0xd0] sm:$0xff] %vm841, %v1257
        %1300 = vst.msk [vmem:[#allocation4 + $0xf8] sm:$0xff] %vm841, %v1259
        %1301 = vst.msk [vmem:[#allocation4 + $0x120] sm:$0xff] %vm841, %v1261
        %1302 = vst.msk [vmem:[#allocation4 + $0x148] sm:$0xff] %vm841, %v1263
        %1303 = vst.msk [vmem:[#allocation4 + $0x170] sm:$0xff] %vm841, %v1265
        %1304 = vst.msk [vmem:[#allocation4 + $0x198] sm:$0xff] %vm841, %v1267
        %1305 = vst.msk [vmem:[#allocation4 + $0x1c0] sm:$0xff] %vm841, %v1269
        %1306 = vst.msk [vmem:[#allocation4 + $0x1e8] sm:$0xff] %vm841, %v1271
        %1307 = vst.msk [vmem:[#allocation4 + $0x210] sm:$0xff] %vm841, %v1273
        %1308 = vst.msk [vmem:[#allocation4 + $0x238] sm:$0xff] %vm841, %v1275
        %1309 = vst.msk [vmem:[#allocation4 + $0x260] sm:$0xff] %vm841, %v1277
        %s1310 = sadd.s32 48, %s662
        %s1311 = scalar_lea.vmem [#allocation2], %s1310
        %v1312 = vld [vmem:[%s1311] sm:$0xff]
        %v1313 = vld [vmem:[%s1311 + $0x8] sm:$0xff]
        %v1314 = vld [vmem:[%s1311 + $0x18] sm:$0xff]
        %v1315 = vld [vmem:[%s1311 + $0x20] sm:$0xff]
        %v1316 = vld [vmem:[%s1311 + $0x30] sm:$0xff]
        %v1317 = vld [vmem:[%s1311 + $0x38] sm:$0xff]
        %v1318 = vld [vmem:[%s1311 + $0x48] sm:$0xff]
        %v1319 = vld [vmem:[%s1311 + $0x50] sm:$0xff]
        %v1320 = vld [vmem:[%s1311 + $0x60] sm:$0xff]
        %v1321 = vld [vmem:[%s1311 + $0x68] sm:$0xff]
        %v1322 = vld [vmem:[%s1311 + $0x78] sm:$0xff]
        %v1323 = vld [vmem:[%s1311 + $0x80] sm:$0xff]
        %v1324 = vld [vmem:[%s1311 + $0x90] sm:$0xff]
        %v1325 = vld [vmem:[%s1311 + $0x98] sm:$0xff]
        %v1326 = vld [vmem:[%s1311 + $0xa8] sm:$0xff]
        %v1327 = vld [vmem:[%s1311 + $0xb0] sm:$0xff]
        %v1328 = vld [vmem:[%s1311 + $0xc0] sm:$0xff]
        %v1329 = vld [vmem:[%s1311 + $0xc8] sm:$0xff]
        %v1330 = vld [vmem:[%s1311 + $0xd8] sm:$0xff]
        %v1331 = vld [vmem:[%s1311 + $0xe0] sm:$0xff]
        %v1332 = vld [vmem:[%s1311 + $0xf0] sm:$0xff]
        %v1333 = vld [vmem:[%s1311 + $0xf8] sm:$0xff]
        %v1334 = vld [vmem:[%s1311 + $0x108] sm:$0xff]
        %v1335 = vld [vmem:[%s1311 + $0x110] sm:$0xff]
        %v1336 = vld [vmem:[%s1311 + $0x120] sm:$0xff]
        %v1337 = vld [vmem:[%s1311 + $0x128] sm:$0xff]
        %v1338 = vld [vmem:[%s1311 + $0x138] sm:$0xff]
        %v1339 = vld [vmem:[%s1311 + $0x140] sm:$0xff]
        %v1340 = vld [vmem:[%s1311 + $0x150] sm:$0xff]
        %v1341 = vld [vmem:[%s1311 + $0x158] sm:$0xff]
        %v1342 = vld [vmem:[%s1311 + $0x168] sm:$0xff]
        %v1343 = vld [vmem:[%s1311 + $0x170] sm:$0xff]
        %v1344 = vpack.c.bf16 %v1313, %v1312
        %v1345 = vpack.c.bf16 %v1315, %v1314
        %v1346 = vpack.c.bf16 %v1317, %v1316
        %v1347 = vpack.c.bf16 %v1319, %v1318
        %v1348 = vpack.c.bf16 %v1321, %v1320
        %v1349 = vpack.c.bf16 %v1323, %v1322
        %v1350 = vpack.c.bf16 %v1325, %v1324
        %v1351 = vpack.c.bf16 %v1327, %v1326
        %v1352 = vpack.c.bf16 %v1329, %v1328
        %v1353 = vpack.c.bf16 %v1331, %v1330
        %v1354 = vpack.c.bf16 %v1333, %v1332
        %v1355 = vpack.c.bf16 %v1335, %v1334
        %v1356 = vpack.c.bf16 %v1337, %v1336
        %v1357 = vpack.c.bf16 %v1339, %v1338
        %v1358 = vpack.c.bf16 %v1341, %v1340
        %v1359 = vpack.c.bf16 %v1343, %v1342
        %1376 = vrot.lane.b32.xlu0 %v1344, 64
        %v1377 = vpop.permute.xlu0 %1376
        %1378 = vrot.lane.b32.xlu0 %v1345, 64
        %v1379 = vpop.permute.xlu0 %1378
        %1380 = vrot.lane.b32.xlu0 %v1346, 64
        %v1381 = vpop.permute.xlu0 %1380
        %1382 = vrot.lane.b32.xlu0 %v1347, 64
        %v1383 = vpop.permute.xlu0 %1382
        %1384 = vrot.lane.b32.xlu0 %v1348, 64
        %v1385 = vpop.permute.xlu0 %1384
        %1386 = vrot.lane.b32.xlu0 %v1349, 64
        %v1387 = vpop.permute.xlu0 %1386
        %1388 = vrot.lane.b32.xlu0 %v1350, 64
        %v1389 = vpop.permute.xlu0 %1388
        %1390 = vrot.lane.b32.xlu0 %v1351, 64
        %v1391 = vpop.permute.xlu0 %1390
        %1392 = vrot.lane.b32.xlu0 %v1352, 64
        %v1393 = vpop.permute.xlu0 %1392
        %1394 = vrot.lane.b32.xlu0 %v1353, 64
        %v1395 = vpop.permute.xlu0 %1394
        %1396 = vrot.lane.b32.xlu0 %v1354, 64
        %v1397 = vpop.permute.xlu0 %1396
        %1398 = vrot.lane.b32.xlu0 %v1355, 64
        %v1399 = vpop.permute.xlu0 %1398
        %1400 = vrot.lane.b32.xlu0 %v1356, 64
        %v1401 = vpop.permute.xlu0 %1400
        %1402 = vrot.lane.b32.xlu0 %v1357, 64
        %v1403 = vpop.permute.xlu0 %1402
        %1404 = vrot.lane.b32.xlu0 %v1358, 64
        %v1405 = vpop.permute.xlu0 %1404
        %1406 = vrot.lane.b32.xlu0 %v1359, 64
        %v1407 = vpop.permute.xlu0 %1406
        %1424 = vst.msk [vmem:[#allocation4 + $0x8] sm:$0xff] %vm970, %v1377
        %1425 = vst.msk [vmem:[#allocation4 + $0x30] sm:$0xff] %vm970, %v1379
        %1426 = vst.msk [vmem:[#allocation4 + $0x58] sm:$0xff] %vm970, %v1381
        %1427 = vst.msk [vmem:[#allocation4 + $0x80] sm:$0xff] %vm970, %v1383
        %1428 = vst.msk [vmem:[#allocation4 + $0xa8] sm:$0xff] %vm970, %v1385
        %1429 = vst.msk [vmem:[#allocation4 + $0xd0] sm:$0xff] %vm970, %v1387
        %1430 = vst.msk [vmem:[#allocation4 + $0xf8] sm:$0xff] %vm970, %v1389
        %1431 = vst.msk [vmem:[#allocation4 + $0x120] sm:$0xff] %vm970, %v1391
        %1432 = vst.msk [vmem:[#allocation4 + $0x148] sm:$0xff] %vm970, %v1393
        %1433 = vst.msk [vmem:[#allocation4 + $0x170] sm:$0xff] %vm970, %v1395
        %1434 = vst.msk [vmem:[#allocation4 + $0x198] sm:$0xff] %vm970, %v1397
        %1435 = vst.msk [vmem:[#allocation4 + $0x1c0] sm:$0xff] %vm970, %v1399
        %1436 = vst.msk [vmem:[#allocation4 + $0x1e8] sm:$0xff] %vm970, %v1401
        %1437 = vst.msk [vmem:[#allocation4 + $0x210] sm:$0xff] %vm970, %v1403
        %1438 = vst.msk [vmem:[#allocation4 + $0x238] sm:$0xff] %vm970, %v1405
        %1439 = vst.msk [vmem:[#allocation4 + $0x260] sm:$0xff] %vm970, %v1407
        %v1440 = vld [vmem:[%s1311 + $0x1] sm:$0xff]
        %v1441 = vld [vmem:[%s1311 + $0x9] sm:$0xff]
        %v1442 = vld [vmem:[%s1311 + $0x19] sm:$0xff]
        %v1443 = vld [vmem:[%s1311 + $0x21] sm:$0xff]
        %v1444 = vld [vmem:[%s1311 + $0x31] sm:$0xff]
        %v1445 = vld [vmem:[%s1311 + $0x39] sm:$0xff]
        %v1446 = vld [vmem:[%s1311 + $0x49] sm:$0xff]
        %v1447 = vld [vmem:[%s1311 + $0x51] sm:$0xff]
        %v1448 = vld [vmem:[%s1311 + $0x61] sm:$0xff]
        %v1449 = vld [vmem:[%s1311 + $0x69] sm:$0xff]
        %v1450 = vld [vmem:[%s1311 + $0x79] sm:$0xff]
        %v1451 = vld [vmem:[%s1311 + $0x81] sm:$0xff]
        %v1452 = vld [vmem:[%s1311 + $0x91] sm:$0xff]
        %v1453 = vld [vmem:[%s1311 + $0x99] sm:$0xff]
        %v1454 = vld [vmem:[%s1311 + $0xa9] sm:$0xff]
        %v1455 = vld [vmem:[%s1311 + $0xb1] sm:$0xff]
        %v1456 = vld [vmem:[%s1311 + $0xc1] sm:$0xff]
        %v1457 = vld [vmem:[%s1311 + $0xc9] sm:$0xff]
        %v1458 = vld [vmem:[%s1311 + $0xd9] sm:$0xff]
        %v1459 = vld [vmem:[%s1311 + $0xe1] sm:$0xff]
        %v1460 = vld [vmem:[%s1311 + $0xf1] sm:$0xff]
        %v1461 = vld [vmem:[%s1311 + $0xf9] sm:$0xff]
        %v1462 = vld [vmem:[%s1311 + $0x109] sm:$0xff]
        %v1463 = vld [vmem:[%s1311 + $0x111] sm:$0xff]
        %v1464 = vld [vmem:[%s1311 + $0x121] sm:$0xff]
        %v1465 = vld [vmem:[%s1311 + $0x129] sm:$0xff]
        %v1466 = vld [vmem:[%s1311 + $0x139] sm:$0xff]
        %v1467 = vld [vmem:[%s1311 + $0x141] sm:$0xff]
        %v1468 = vld [vmem:[%s1311 + $0x151] sm:$0xff]
        %v1469 = vld [vmem:[%s1311 + $0x159] sm:$0xff]
        %v1470 = vld [vmem:[%s1311 + $0x169] sm:$0xff]
        %v1471 = vld [vmem:[%s1311 + $0x171] sm:$0xff]
        %v1472 = vpack.c.bf16 %v1441, %v1440
        %v1473 = vpack.c.bf16 %v1443, %v1442
        %v1474 = vpack.c.bf16 %v1445, %v1444
        %v1475 = vpack.c.bf16 %v1447, %v1446
        %v1476 = vpack.c.bf16 %v1449, %v1448
        %v1477 = vpack.c.bf16 %v1451, %v1450
        %v1478 = vpack.c.bf16 %v1453, %v1452
        %v1479 = vpack.c.bf16 %v1455, %v1454
        %v1480 = vpack.c.bf16 %v1457, %v1456
        %v1481 = vpack.c.bf16 %v1459, %v1458
        %v1482 = vpack.c.bf16 %v1461, %v1460
        %v1483 = vpack.c.bf16 %v1463, %v1462
        %v1484 = vpack.c.bf16 %v1465, %v1464
        %v1485 = vpack.c.bf16 %v1467, %v1466
        %v1486 = vpack.c.bf16 %v1469, %v1468
        %v1487 = vpack.c.bf16 %v1471, %v1470
        %1504 = vrot.lane.b32.xlu0 %v1472, 96
        %v1505 = vpop.permute.xlu0 %1504
        %1506 = vrot.lane.b32.xlu0 %v1473, 96
        %v1507 = vpop.permute.xlu0 %1506
        %1508 = vrot.lane.b32.xlu0 %v1474, 96
        %v1509 = vpop.permute.xlu0 %1508
        %1510 = vrot.lane.b32.xlu0 %v1475, 96
        %v1511 = vpop.permute.xlu0 %1510
        %1512 = vrot.lane.b32.xlu0 %v1476, 96
        %v1513 = vpop.permute.xlu0 %1512
        %1514 = vrot.lane.b32.xlu0 %v1477, 96
        %v1515 = vpop.permute.xlu0 %1514
        %1516 = vrot.lane.b32.xlu0 %v1478, 96
        %v1517 = vpop.permute.xlu0 %1516
        %1518 = vrot.lane.b32.xlu0 %v1479, 96
        %v1519 = vpop.permute.xlu0 %1518
        %1520 = vrot.lane.b32.xlu0 %v1480, 96
        %v1521 = vpop.permute.xlu0 %1520
        %1522 = vrot.lane.b32.xlu0 %v1481, 96
        %v1523 = vpop.permute.xlu0 %1522
        %1524 = vrot.lane.b32.xlu0 %v1482, 96
        %v1525 = vpop.permute.xlu0 %1524
        %1526 = vrot.lane.b32.xlu0 %v1483, 96
        %v1527 = vpop.permute.xlu0 %1526
        %1528 = vrot.lane.b32.xlu0 %v1484, 96
        %v1529 = vpop.permute.xlu0 %1528
        %1530 = vrot.lane.b32.xlu0 %v1485, 96
        %v1531 = vpop.permute.xlu0 %1530
        %1532 = vrot.lane.b32.xlu0 %v1486, 96
        %v1533 = vpop.permute.xlu0 %1532
        %1534 = vrot.lane.b32.xlu0 %v1487, 96
        %v1535 = vpop.permute.xlu0 %1534
        %1552 = vst.msk [vmem:[#allocation4 + $0x8] sm:$0xff] %vm1101, %v1505
        %1553 = vst.msk [vmem:[#allocation4 + $0x30] sm:$0xff] %vm1101, %v1507
        %1554 = vst.msk [vmem:[#allocation4 + $0x58] sm:$0xff] %vm1101, %v1509
        %1555 = vst.msk [vmem:[#allocation4 + $0x80] sm:$0xff] %vm1101, %v1511
        %1556 = vst.msk [vmem:[#allocation4 + $0xa8] sm:$0xff] %vm1101, %v1513
        %1557 = vst.msk [vmem:[#allocation4 + $0xd0] sm:$0xff] %vm1101, %v1515
        %1558 = vst.msk [vmem:[#allocation4 + $0xf8] sm:$0xff] %vm1101, %v1517
        %1559 = vst.msk [vmem:[#allocation4 + $0x120] sm:$0xff] %vm1101, %v1519
        %1560 = vst.msk [vmem:[#allocation4 + $0x148] sm:$0xff] %vm1101, %v1521
        %1561 = vst.msk [vmem:[#allocation4 + $0x170] sm:$0xff] %vm1101, %v1523
        %1562 = vst.msk [vmem:[#allocation4 + $0x198] sm:$0xff] %vm1101, %v1525
        %1563 = vst.msk [vmem:[#allocation4 + $0x1c0] sm:$0xff] %vm1101, %v1527
        %1564 = vst.msk [vmem:[#allocation4 + $0x1e8] sm:$0xff] %vm1101, %v1529
        %1565 = vst.msk [vmem:[#allocation4 + $0x210] sm:$0xff] %vm1101, %v1531
        %1566 = vst.msk [vmem:[#allocation4 + $0x238] sm:$0xff] %vm1101, %v1533
        %1567 = vst.msk [vmem:[#allocation4 + $0x260] sm:$0xff] %vm1101, %v1535
        %v1568 = vld [vmem:[%s1311 + $0x2] sm:$0xff]
        %v1569 = vld [vmem:[%s1311 + $0xa] sm:$0xff]
        %v1570 = vld [vmem:[%s1311 + $0x1a] sm:$0xff]
        %v1571 = vld [vmem:[%s1311 + $0x22] sm:$0xff]
        %v1572 = vld [vmem:[%s1311 + $0x32] sm:$0xff]
        %v1573 = vld [vmem:[%s1311 + $0x3a] sm:$0xff]
        %v1574 = vld [vmem:[%s1311 + $0x4a] sm:$0xff]
        %v1575 = vld [vmem:[%s1311 + $0x52] sm:$0xff]
        %v1576 = vld [vmem:[%s1311 + $0x62] sm:$0xff]
        %v1577 = vld [vmem:[%s1311 + $0x6a] sm:$0xff]
        %v1578 = vld [vmem:[%s1311 + $0x7a] sm:$0xff]
        %v1579 = vld [vmem:[%s1311 + $0x82] sm:$0xff]
        %v1580 = vld [vmem:[%s1311 + $0x92] sm:$0xff]
        %v1581 = vld [vmem:[%s1311 + $0x9a] sm:$0xff]
        %v1582 = vld [vmem:[%s1311 + $0xaa] sm:$0xff]
        %v1583 = vld [vmem:[%s1311 + $0xb2] sm:$0xff]
        %v1584 = vld [vmem:[%s1311 + $0xc2] sm:$0xff]
        %v1585 = vld [vmem:[%s1311 + $0xca] sm:$0xff]
        %v1586 = vld [vmem:[%s1311 + $0xda] sm:$0xff]
        %v1587 = vld [vmem:[%s1311 + $0xe2] sm:$0xff]
        %v1588 = vld [vmem:[%s1311 + $0xf2] sm:$0xff]
        %v1589 = vld [vmem:[%s1311 + $0xfa] sm:$0xff]
        %v1590 = vld [vmem:[%s1311 + $0x10a] sm:$0xff]
        %v1591 = vld [vmem:[%s1311 + $0x112] sm:$0xff]
        %v1592 = vld [vmem:[%s1311 + $0x122] sm:$0xff]
        %v1593 = vld [vmem:[%s1311 + $0x12a] sm:$0xff]
        %v1594 = vld [vmem:[%s1311 + $0x13a] sm:$0xff]
        %v1595 = vld [vmem:[%s1311 + $0x142] sm:$0xff]
        %v1596 = vld [vmem:[%s1311 + $0x152] sm:$0xff]
        %v1597 = vld [vmem:[%s1311 + $0x15a] sm:$0xff]
        %v1598 = vld [vmem:[%s1311 + $0x16a] sm:$0xff]
        %v1599 = vld [vmem:[%s1311 + $0x172] sm:$0xff]
        %v1600 = vpack.c.bf16 %v1569, %v1568
        %v1601 = vpack.c.bf16 %v1571, %v1570
        %v1602 = vpack.c.bf16 %v1573, %v1572
        %v1603 = vpack.c.bf16 %v1575, %v1574
        %v1604 = vpack.c.bf16 %v1577, %v1576
        %v1605 = vpack.c.bf16 %v1579, %v1578
        %v1606 = vpack.c.bf16 %v1581, %v1580
        %v1607 = vpack.c.bf16 %v1583, %v1582
        %v1608 = vpack.c.bf16 %v1585, %v1584
        %v1609 = vpack.c.bf16 %v1587, %v1586
        %v1610 = vpack.c.bf16 %v1589, %v1588
        %v1611 = vpack.c.bf16 %v1591, %v1590
        %v1612 = vpack.c.bf16 %v1593, %v1592
        %v1613 = vpack.c.bf16 %v1595, %v1594
        %v1614 = vpack.c.bf16 %v1597, %v1596
        %v1615 = vpack.c.bf16 %v1599, %v1598
        %1616 = vst.msk [vmem:[#allocation4 + $0x10] sm:$0xff] %vm712, %v1600
        %1617 = vst.msk [vmem:[#allocation4 + $0x38] sm:$0xff] %vm712, %v1601
        %1618 = vst.msk [vmem:[#allocation4 + $0x60] sm:$0xff] %vm712, %v1602
        %1619 = vst.msk [vmem:[#allocation4 + $0x88] sm:$0xff] %vm712, %v1603
        %1620 = vst.msk [vmem:[#allocation4 + $0xb0] sm:$0xff] %vm712, %v1604
        %1621 = vst.msk [vmem:[#allocation4 + $0xd8] sm:$0xff] %vm712, %v1605
        %1622 = vst.msk [vmem:[#allocation4 + $0x100] sm:$0xff] %vm712, %v1606
        %1623 = vst.msk [vmem:[#allocation4 + $0x128] sm:$0xff] %vm712, %v1607
        %1624 = vst.msk [vmem:[#allocation4 + $0x150] sm:$0xff] %vm712, %v1608
        %1625 = vst.msk [vmem:[#allocation4 + $0x178] sm:$0xff] %vm712, %v1609
        %1626 = vst.msk [vmem:[#allocation4 + $0x1a0] sm:$0xff] %vm712, %v1610
        %1627 = vst.msk [vmem:[#allocation4 + $0x1c8] sm:$0xff] %vm712, %v1611
        %1628 = vst.msk [vmem:[#allocation4 + $0x1f0] sm:$0xff] %vm712, %v1612
        %1629 = vst.msk [vmem:[#allocation4 + $0x218] sm:$0xff] %vm712, %v1613
        %1630 = vst.msk [vmem:[#allocation4 + $0x240] sm:$0xff] %vm712, %v1614
        %1631 = vst.msk [vmem:[#allocation4 + $0x268] sm:$0xff] %vm712, %v1615
        %s1632 = smul.u32 %s661, 432
        %s1633 = scalar_lea.vmem [#allocation2], %s1632
        %v1634 = vld [vmem:[%s1633] sm:$0xff]
        %v1635 = vld [vmem:[%s1633 + $0x8] sm:$0xff]
        %v1636 = vld [vmem:[%s1633 + $0x18] sm:$0xff]
        %v1637 = vld [vmem:[%s1633 + $0x20] sm:$0xff]
        %v1638 = vld [vmem:[%s1633 + $0x30] sm:$0xff]
        %v1639 = vld [vmem:[%s1633 + $0x38] sm:$0xff]
        %v1640 = vld [vmem:[%s1633 + $0x48] sm:$0xff]
        %v1641 = vld [vmem:[%s1633 + $0x50] sm:$0xff]
        %v1642 = vld [vmem:[%s1633 + $0x60] sm:$0xff]
        %v1643 = vld [vmem:[%s1633 + $0x68] sm:$0xff]
        %v1644 = vld [vmem:[%s1633 + $0x78] sm:$0xff]
        %v1645 = vld [vmem:[%s1633 + $0x80] sm:$0xff]
        %v1646 = vld [vmem:[%s1633 + $0x90] sm:$0xff]
        %v1647 = vld [vmem:[%s1633 + $0x98] sm:$0xff]
        %v1648 = vld [vmem:[%s1633 + $0xa8] sm:$0xff]
        %v1649 = vld [vmem:[%s1633 + $0xb0] sm:$0xff]
        %v1650 = vld [vmem:[%s1633 + $0xc0] sm:$0xff]
        %v1651 = vld [vmem:[%s1633 + $0xc8] sm:$0xff]
        %v1652 = vld [vmem:[%s1633 + $0xd8] sm:$0xff]
        %v1653 = vld [vmem:[%s1633 + $0xe0] sm:$0xff]
        %v1654 = vld [vmem:[%s1633 + $0xf0] sm:$0xff]
        %v1655 = vld [vmem:[%s1633 + $0xf8] sm:$0xff]
        %v1656 = vld [vmem:[%s1633 + $0x108] sm:$0xff]
        %v1657 = vld [vmem:[%s1633 + $0x110] sm:$0xff]
        %v1658 = vld [vmem:[%s1633 + $0x120] sm:$0xff]
        %v1659 = vld [vmem:[%s1633 + $0x128] sm:$0xff]
        %v1660 = vld [vmem:[%s1633 + $0x138] sm:$0xff]
        %v1661 = vld [vmem:[%s1633 + $0x140] sm:$0xff]
        %v1662 = vld [vmem:[%s1633 + $0x150] sm:$0xff]
        %v1663 = vld [vmem:[%s1633 + $0x158] sm:$0xff]
        %v1664 = vld [vmem:[%s1633 + $0x168] sm:$0xff]
        %v1665 = vld [vmem:[%s1633 + $0x170] sm:$0xff]
        %v1666 = vpack.c.bf16 %v1635, %v1634
        %v1667 = vpack.c.bf16 %v1637, %v1636
        %v1668 = vpack.c.bf16 %v1639, %v1638
        %v1669 = vpack.c.bf16 %v1641, %v1640
        %v1670 = vpack.c.bf16 %v1643, %v1642
        %v1671 = vpack.c.bf16 %v1645, %v1644
        %v1672 = vpack.c.bf16 %v1647, %v1646
        %v1673 = vpack.c.bf16 %v1649, %v1648
        %v1674 = vpack.c.bf16 %v1651, %v1650
        %v1675 = vpack.c.bf16 %v1653, %v1652
        %v1676 = vpack.c.bf16 %v1655, %v1654
        %v1677 = vpack.c.bf16 %v1657, %v1656
        %v1678 = vpack.c.bf16 %v1659, %v1658
        %v1679 = vpack.c.bf16 %v1661, %v1660
        %v1680 = vpack.c.bf16 %v1663, %v1662
        %v1681 = vpack.c.bf16 %v1665, %v1664
        %1698 = vrot.lane.b32.xlu0 %v1666, 32
        %v1699 = vpop.permute.xlu0 %1698
        %1700 = vrot.lane.b32.xlu0 %v1667, 32
        %v1701 = vpop.permute.xlu0 %1700
        %1702 = vrot.lane.b32.xlu0 %v1668, 32
        %v1703 = vpop.permute.xlu0 %1702
        %1704 = vrot.lane.b32.xlu0 %v1669, 32
        %v1705 = vpop.permute.xlu0 %1704
        %1706 = vrot.lane.b32.xlu0 %v1670, 32
        %v1707 = vpop.permute.xlu0 %1706
        %1708 = vrot.lane.b32.xlu0 %v1671, 32
        %v1709 = vpop.permute.xlu0 %1708
        %1710 = vrot.lane.b32.xlu0 %v1672, 32
        %v1711 = vpop.permute.xlu0 %1710
        %1712 = vrot.lane.b32.xlu0 %v1673, 32
        %v1713 = vpop.permute.xlu0 %1712
        %1714 = vrot.lane.b32.xlu0 %v1674, 32
        %v1715 = vpop.permute.xlu0 %1714
        %1716 = vrot.lane.b32.xlu0 %v1675, 32
        %v1717 = vpop.permute.xlu0 %1716
        %1718 = vrot.lane.b32.xlu0 %v1676, 32
        %v1719 = vpop.permute.xlu0 %1718
        %1720 = vrot.lane.b32.xlu0 %v1677, 32
        %v1721 = vpop.permute.xlu0 %1720
        %1722 = vrot.lane.b32.xlu0 %v1678, 32
        %v1723 = vpop.permute.xlu0 %1722
        %1724 = vrot.lane.b32.xlu0 %v1679, 32
        %v1725 = vpop.permute.xlu0 %1724
        %1726 = vrot.lane.b32.xlu0 %v1680, 32
        %v1727 = vpop.permute.xlu0 %1726
        %1728 = vrot.lane.b32.xlu0 %v1681, 32
        %v1729 = vpop.permute.xlu0 %1728
        %1746 = vst.msk [vmem:[#allocation4 + $0x10] sm:$0xff] %vm841, %v1699
        %1747 = vst.msk [vmem:[#allocation4 + $0x38] sm:$0xff] %vm841, %v1701
        %1748 = vst.msk [vmem:[#allocation4 + $0x60] sm:$0xff] %vm841, %v1703
        %1749 = vst.msk [vmem:[#allocation4 + $0x88] sm:$0xff] %vm841, %v1705
        %1750 = vst.msk [vmem:[#allocation4 + $0xb0] sm:$0xff] %vm841, %v1707
        %1751 = vst.msk [vmem:[#allocation4 + $0xd8] sm:$0xff] %vm841, %v1709
        %1752 = vst.msk [vmem:[#allocation4 + $0x100] sm:$0xff] %vm841, %v1711
        %1753 = vst.msk [vmem:[#allocation4 + $0x128] sm:$0xff] %vm841, %v1713
        %1754 = vst.msk [vmem:[#allocation4 + $0x150] sm:$0xff] %vm841, %v1715
        %1755 = vst.msk [vmem:[#allocation4 + $0x178] sm:$0xff] %vm841, %v1717
        %1756 = vst.msk [vmem:[#allocation4 + $0x1a0] sm:$0xff] %vm841, %v1719
        %1757 = vst.msk [vmem:[#allocation4 + $0x1c8] sm:$0xff] %vm841, %v1721
        %1758 = vst.msk [vmem:[#allocation4 + $0x1f0] sm:$0xff] %vm841, %v1723
        %1759 = vst.msk [vmem:[#allocation4 + $0x218] sm:$0xff] %vm841, %v1725
        %1760 = vst.msk [vmem:[#allocation4 + $0x240] sm:$0xff] %vm841, %v1727
        %1761 = vst.msk [vmem:[#allocation4 + $0x268] sm:$0xff] %vm841, %v1729
        %v1762 = vld [vmem:[%s1633 + $0x1] sm:$0xff]
        %v1763 = vld [vmem:[%s1633 + $0x9] sm:$0xff]
        %v1764 = vld [vmem:[%s1633 + $0x19] sm:$0xff]
        %v1765 = vld [vmem:[%s1633 + $0x21] sm:$0xff]
        %v1766 = vld [vmem:[%s1633 + $0x31] sm:$0xff]
        %v1767 = vld [vmem:[%s1633 + $0x39] sm:$0xff]
        %v1768 = vld [vmem:[%s1633 + $0x49] sm:$0xff]
        %v1769 = vld [vmem:[%s1633 + $0x51] sm:$0xff]
        %v1770 = vld [vmem:[%s1633 + $0x61] sm:$0xff]
        %v1771 = vld [vmem:[%s1633 + $0x69] sm:$0xff]
        %v1772 = vld [vmem:[%s1633 + $0x79] sm:$0xff]
        %v1773 = vld [vmem:[%s1633 + $0x81] sm:$0xff]
        %v1774 = vld [vmem:[%s1633 + $0x91] sm:$0xff]
        %v1775 = vld [vmem:[%s1633 + $0x99] sm:$0xff]
        %v1776 = vld [vmem:[%s1633 + $0xa9] sm:$0xff]
        %v1777 = vld [vmem:[%s1633 + $0xb1] sm:$0xff]
        %v1778 = vld [vmem:[%s1633 + $0xc1] sm:$0xff]
        %v1779 = vld [vmem:[%s1633 + $0xc9] sm:$0xff]
        %v1780 = vld [vmem:[%s1633 + $0xd9] sm:$0xff]
        %v1781 = vld [vmem:[%s1633 + $0xe1] sm:$0xff]
        %v1782 = vld [vmem:[%s1633 + $0xf1] sm:$0xff]
        %v1783 = vld [vmem:[%s1633 + $0xf9] sm:$0xff]
        %v1784 = vld [vmem:[%s1633 + $0x109] sm:$0xff]
        %v1785 = vld [vmem:[%s1633 + $0x111] sm:$0xff]
        %v1786 = vld [vmem:[%s1633 + $0x121] sm:$0xff]
        %v1787 = vld [vmem:[%s1633 + $0x129] sm:$0xff]
        %v1788 = vld [vmem:[%s1633 + $0x139] sm:$0xff]
        %v1789 = vld [vmem:[%s1633 + $0x141] sm:$0xff]
        %v1790 = vld [vmem:[%s1633 + $0x151] sm:$0xff]
        %v1791 = vld [vmem:[%s1633 + $0x159] sm:$0xff]
        %v1792 = vld [vmem:[%s1633 + $0x169] sm:$0xff]
        %v1793 = vld [vmem:[%s1633 + $0x171] sm:$0xff]
        %v1794 = vpack.c.bf16 %v1763, %v1762
        %v1795 = vpack.c.bf16 %v1765, %v1764
        %v1796 = vpack.c.bf16 %v1767, %v1766
        %v1797 = vpack.c.bf16 %v1769, %v1768
        %v1798 = vpack.c.bf16 %v1771, %v1770
        %v1799 = vpack.c.bf16 %v1773, %v1772
        %v1800 = vpack.c.bf16 %v1775, %v1774
        %v1801 = vpack.c.bf16 %v1777, %v1776
        %v1802 = vpack.c.bf16 %v1779, %v1778
        %v1803 = vpack.c.bf16 %v1781, %v1780
        %v1804 = vpack.c.bf16 %v1783, %v1782
        %v1805 = vpack.c.bf16 %v1785, %v1784
        %v1806 = vpack.c.bf16 %v1787, %v1786
        %v1807 = vpack.c.bf16 %v1789, %v1788
        %v1808 = vpack.c.bf16 %v1791, %v1790
        %v1809 = vpack.c.bf16 %v1793, %v1792
        %1826 = vrot.lane.b32.xlu0 %v1794, 64
        %v1827 = vpop.permute.xlu0 %1826
        %1828 = vrot.lane.b32.xlu0 %v1795, 64
        %v1829 = vpop.permute.xlu0 %1828
        %1830 = vrot.lane.b32.xlu0 %v1796, 64
        %v1831 = vpop.permute.xlu0 %1830
        %1832 = vrot.lane.b32.xlu0 %v1797, 64
        %v1833 = vpop.permute.xlu0 %1832
        %1834 = vrot.lane.b32.xlu0 %v1798, 64
        %v1835 = vpop.permute.xlu0 %1834
        %1836 = vrot.lane.b32.xlu0 %v1799, 64
        %v1837 = vpop.permute.xlu0 %1836
        %1838 = vrot.lane.b32.xlu0 %v1800, 64
        %v1839 = vpop.permute.xlu0 %1838
        %1840 = vrot.lane.b32.xlu0 %v1801, 64
        %v1841 = vpop.permute.xlu0 %1840
        %1842 = vrot.lane.b32.xlu0 %v1802, 64
        %v1843 = vpop.permute.xlu0 %1842
        %1844 = vrot.lane.b32.xlu0 %v1803, 64
        %v1845 = vpop.permute.xlu0 %1844
        %1846 = vrot.lane.b32.xlu0 %v1804, 64
        %v1847 = vpop.permute.xlu0 %1846
        %1848 = vrot.lane.b32.xlu0 %v1805, 64
        %v1849 = vpop.permute.xlu0 %1848
        %1850 = vrot.lane.b32.xlu0 %v1806, 64
        %v1851 = vpop.permute.xlu0 %1850
        %1852 = vrot.lane.b32.xlu0 %v1807, 64
        %v1853 = vpop.permute.xlu0 %1852
        %1854 = vrot.lane.b32.xlu0 %v1808, 64
        %v1855 = vpop.permute.xlu0 %1854
        %1856 = vrot.lane.b32.xlu0 %v1809, 64
        %v1857 = vpop.permute.xlu0 %1856
        %1874 = vst.msk [vmem:[#allocation4 + $0x10] sm:$0xff] %vm970, %v1827
        %1875 = vst.msk [vmem:[#allocation4 + $0x38] sm:$0xff] %vm970, %v1829
        %1876 = vst.msk [vmem:[#allocation4 + $0x60] sm:$0xff] %vm970, %v1831
        %1877 = vst.msk [vmem:[#allocation4 + $0x88] sm:$0xff] %vm970, %v1833
        %1878 = vst.msk [vmem:[#allocation4 + $0xb0] sm:$0xff] %vm970, %v1835
        %1879 = vst.msk [vmem:[#allocation4 + $0xd8] sm:$0xff] %vm970, %v1837
        %1880 = vst.msk [vmem:[#allocation4 + $0x100] sm:$0xff] %vm970, %v1839
        %1881 = vst.msk [vmem:[#allocation4 + $0x128] sm:$0xff] %vm970, %v1841
        %1882 = vst.msk [vmem:[#allocation4 + $0x150] sm:$0xff] %vm970, %v1843
        %1883 = vst.msk [vmem:[#allocation4 + $0x178] sm:$0xff] %vm970, %v1845
        %1884 = vst.msk [vmem:[#allocation4 + $0x1a0] sm:$0xff] %vm970, %v1847
        %1885 = vst.msk [vmem:[#allocation4 + $0x1c8] sm:$0xff] %vm970, %v1849
        %1886 = vst.msk [vmem:[#allocation4 + $0x1f0] sm:$0xff] %vm970, %v1851
        %1887 = vst.msk [vmem:[#allocation4 + $0x218] sm:$0xff] %vm970, %v1853
        %1888 = vst.msk [vmem:[#allocation4 + $0x240] sm:$0xff] %vm970, %v1855
        %1889 = vst.msk [vmem:[#allocation4 + $0x268] sm:$0xff] %vm970, %v1857
        %v1890 = vld [vmem:[%s1633 + $0x2] sm:$0xff]
        %v1891 = vld [vmem:[%s1633 + $0xa] sm:$0xff]
        %v1892 = vld [vmem:[%s1633 + $0x1a] sm:$0xff]
        %v1893 = vld [vmem:[%s1633 + $0x22] sm:$0xff]
        %v1894 = vld [vmem:[%s1633 + $0x32] sm:$0xff]
        %v1895 = vld [vmem:[%s1633 + $0x3a] sm:$0xff]
        %v1896 = vld [vmem:[%s1633 + $0x4a] sm:$0xff]
        %v1897 = vld [vmem:[%s1633 + $0x52] sm:$0xff]
        %v1898 = vld [vmem:[%s1633 + $0x62] sm:$0xff]
        %v1899 = vld [vmem:[%s1633 + $0x6a] sm:$0xff]
        %v1900 = vld [vmem:[%s1633 + $0x7a] sm:$0xff]
        %v1901 = vld [vmem:[%s1633 + $0x82] sm:$0xff]
        %v1902 = vld [vmem:[%s1633 + $0x92] sm:$0xff]
        %v1903 = vld [vmem:[%s1633 + $0x9a] sm:$0xff]
        %v1904 = vld [vmem:[%s1633 + $0xaa] sm:$0xff]
        %v1905 = vld [vmem:[%s1633 + $0xb2] sm:$0xff]
        %v1906 = vld [vmem:[%s1633 + $0xc2] sm:$0xff]
        %v1907 = vld [vmem:[%s1633 + $0xca] sm:$0xff]
        %v1908 = vld [vmem:[%s1633 + $0xda] sm:$0xff]
        %v1909 = vld [vmem:[%s1633 + $0xe2] sm:$0xff]
        %v1910 = vld [vmem:[%s1633 + $0xf2] sm:$0xff]
        %v1911 = vld [vmem:[%s1633 + $0xfa] sm:$0xff]
        %v1912 = vld [vmem:[%s1633 + $0x10a] sm:$0xff]
        %v1913 = vld [vmem:[%s1633 + $0x112] sm:$0xff]
        %v1914 = vld [vmem:[%s1633 + $0x122] sm:$0xff]
        %v1915 = vld [vmem:[%s1633 + $0x12a] sm:$0xff]
        %v1916 = vld [vmem:[%s1633 + $0x13a] sm:$0xff]
        %v1917 = vld [vmem:[%s1633 + $0x142] sm:$0xff]
        %v1918 = vld [vmem:[%s1633 + $0x152] sm:$0xff]
        %v1919 = vld [vmem:[%s1633 + $0x15a] sm:$0xff]
        %v1920 = vld [vmem:[%s1633 + $0x16a] sm:$0xff]
        %v1921 = vld [vmem:[%s1633 + $0x172] sm:$0xff]
        %v1922 = vpack.c.bf16 %v1891, %v1890
        %v1923 = vpack.c.bf16 %v1893, %v1892
        %v1924 = vpack.c.bf16 %v1895, %v1894
        %v1925 = vpack.c.bf16 %v1897, %v1896
        %v1926 = vpack.c.bf16 %v1899, %v1898
        %v1927 = vpack.c.bf16 %v1901, %v1900
        %v1928 = vpack.c.bf16 %v1903, %v1902
        %v1929 = vpack.c.bf16 %v1905, %v1904
        %v1930 = vpack.c.bf16 %v1907, %v1906
        %v1931 = vpack.c.bf16 %v1909, %v1908
        %v1932 = vpack.c.bf16 %v1911, %v1910
        %v1933 = vpack.c.bf16 %v1913, %v1912
        %v1934 = vpack.c.bf16 %v1915, %v1914
        %v1935 = vpack.c.bf16 %v1917, %v1916
        %v1936 = vpack.c.bf16 %v1919, %v1918
        %v1937 = vpack.c.bf16 %v1921, %v1920
        %1954 = vrot.lane.b32.xlu0 %v1922, 96
        %v1955 = vpop.permute.xlu0 %1954
        %1956 = vrot.lane.b32.xlu0 %v1923, 96
        %v1957 = vpop.permute.xlu0 %1956
        %1958 = vrot.lane.b32.xlu0 %v1924, 96
        %v1959 = vpop.permute.xlu0 %1958
        %1960 = vrot.lane.b32.xlu0 %v1925, 96
        %v1961 = vpop.permute.xlu0 %1960
        %1962 = vrot.lane.b32.xlu0 %v1926, 96
        %v1963 = vpop.permute.xlu0 %1962
        %1964 = vrot.lane.b32.xlu0 %v1927, 96
        %v1965 = vpop.permute.xlu0 %1964
        %1966 = vrot.lane.b32.xlu0 %v1928, 96
        %v1967 = vpop.permute.xlu0 %1966
        %1968 = vrot.lane.b32.xlu0 %v1929, 96
        %v1969 = vpop.permute.xlu0 %1968
        %1970 = vrot.lane.b32.xlu0 %v1930, 96
        %v1971 = vpop.permute.xlu0 %1970
        %1972 = vrot.lane.b32.xlu0 %v1931, 96
        %v1973 = vpop.permute.xlu0 %1972
        %1974 = vrot.lane.b32.xlu0 %v1932, 96
        %v1975 = vpop.permute.xlu0 %1974
        %1976 = vrot.lane.b32.xlu0 %v1933, 96
        %v1977 = vpop.permute.xlu0 %1976
        %1978 = vrot.lane.b32.xlu0 %v1934, 96
        %v1979 = vpop.permute.xlu0 %1978
        %1980 = vrot.lane.b32.xlu0 %v1935, 96
        %v1981 = vpop.permute.xlu0 %1980
        %1982 = vrot.lane.b32.xlu0 %v1936, 96
        %v1983 = vpop.permute.xlu0 %1982
        %1984 = vrot.lane.b32.xlu0 %v1937, 96
        %v1985 = vpop.permute.xlu0 %1984
        %2002 = vst.msk [vmem:[#allocation4 + $0x10] sm:$0xff] %vm1101, %v1955
        %2003 = vst.msk [vmem:[#allocation4 + $0x38] sm:$0xff] %vm1101, %v1957
        %2004 = vst.msk [vmem:[#allocation4 + $0x60] sm:$0xff] %vm1101, %v1959
        %2005 = vst.msk [vmem:[#allocation4 + $0x88] sm:$0xff] %vm1101, %v1961
        %2006 = vst.msk [vmem:[#allocation4 + $0xb0] sm:$0xff] %vm1101, %v1963
        %2007 = vst.msk [vmem:[#allocation4 + $0xd8] sm:$0xff] %vm1101, %v1965
        %2008 = vst.msk [vmem:[#allocation4 + $0x100] sm:$0xff] %vm1101, %v1967
        %2009 = vst.msk [vmem:[#allocation4 + $0x128] sm:$0xff] %vm1101, %v1969
        %2010 = vst.msk [vmem:[#allocation4 + $0x150] sm:$0xff] %vm1101, %v1971
        %2011 = vst.msk [vmem:[#allocation4 + $0x178] sm:$0xff] %vm1101, %v1973
        %2012 = vst.msk [vmem:[#allocation4 + $0x1a0] sm:$0xff] %vm1101, %v1975
        %2013 = vst.msk [vmem:[#allocation4 + $0x1c8] sm:$0xff] %vm1101, %v1977
        %2014 = vst.msk [vmem:[#allocation4 + $0x1f0] sm:$0xff] %vm1101, %v1979
        %2015 = vst.msk [vmem:[#allocation4 + $0x218] sm:$0xff] %vm1101, %v1981
        %2016 = vst.msk [vmem:[#allocation4 + $0x240] sm:$0xff] %vm1101, %v1983
        %2017 = vst.msk [vmem:[#allocation4 + $0x268] sm:$0xff] %vm1101, %v1985
        %s2018 = sadd.s32 24, %s1632
        %s2019 = scalar_lea.vmem [#allocation2], %s2018
        %v2020 = vld [vmem:[%s2019] sm:$0xff]
        %v2021 = vld [vmem:[%s2019 + $0x8] sm:$0xff]
        %v2022 = vld [vmem:[%s2019 + $0x18] sm:$0xff]
        %v2023 = vld [vmem:[%s2019 + $0x20] sm:$0xff]
        %v2024 = vld [vmem:[%s2019 + $0x30] sm:$0xff]
        %v2025 = vld [vmem:[%s2019 + $0x38] sm:$0xff]
        %v2026 = vld [vmem:[%s2019 + $0x48] sm:$0xff]
        %v2027 = vld [vmem:[%s2019 + $0x50] sm:$0xff]
        %v2028 = vld [vmem:[%s2019 + $0x60] sm:$0xff]
        %v2029 = vld [vmem:[%s2019 + $0x68] sm:$0xff]
        %v2030 = vld [vmem:[%s2019 + $0x78] sm:$0xff]
        %v2031 = vld [vmem:[%s2019 + $0x80] sm:$0xff]
        %v2032 = vld [vmem:[%s2019 + $0x90] sm:$0xff]
        %v2033 = vld [vmem:[%s2019 + $0x98] sm:$0xff]
        %v2034 = vld [vmem:[%s2019 + $0xa8] sm:$0xff]
        %v2035 = vld [vmem:[%s2019 + $0xb0] sm:$0xff]
        %v2036 = vld [vmem:[%s2019 + $0xc0] sm:$0xff]
        %v2037 = vld [vmem:[%s2019 + $0xc8] sm:$0xff]
        %v2038 = vld [vmem:[%s2019 + $0xd8] sm:$0xff]
        %v2039 = vld [vmem:[%s2019 + $0xe0] sm:$0xff]
        %v2040 = vld [vmem:[%s2019 + $0xf0] sm:$0xff]
        %v2041 = vld [vmem:[%s2019 + $0xf8] sm:$0xff]
        %v2042 = vld [vmem:[%s2019 + $0x108] sm:$0xff]
        %v2043 = vld [vmem:[%s2019 + $0x110] sm:$0xff]
        %v2044 = vld [vmem:[%s2019 + $0x120] sm:$0xff]
        %v2045 = vld [vmem:[%s2019 + $0x128] sm:$0xff]
        %v2046 = vld [vmem:[%s2019 + $0x138] sm:$0xff]
        %v2047 = vld [vmem:[%s2019 + $0x140] sm:$0xff]
        %v2048 = vld [vmem:[%s2019 + $0x150] sm:$0xff]
        %v2049 = vld [vmem:[%s2019 + $0x158] sm:$0xff]
        %v2050 = vld [vmem:[%s2019 + $0x168] sm:$0xff]
        %v2051 = vld [vmem:[%s2019 + $0x170] sm:$0xff]
        %v2052 = vpack.c.bf16 %v2021, %v2020
        %v2053 = vpack.c.bf16 %v2023, %v2022
        %v2054 = vpack.c.bf16 %v2025, %v2024
        %v2055 = vpack.c.bf16 %v2027, %v2026
        %v2056 = vpack.c.bf16 %v2029, %v2028
        %v2057 = vpack.c.bf16 %v2031, %v2030
        %v2058 = vpack.c.bf16 %v2033, %v2032
        %v2059 = vpack.c.bf16 %v2035, %v2034
        %v2060 = vpack.c.bf16 %v2037, %v2036
        %v2061 = vpack.c.bf16 %v2039, %v2038
        %v2062 = vpack.c.bf16 %v2041, %v2040
        %v2063 = vpack.c.bf16 %v2043, %v2042
        %v2064 = vpack.c.bf16 %v2045, %v2044
        %v2065 = vpack.c.bf16 %v2047, %v2046
        %v2066 = vpack.c.bf16 %v2049, %v2048
        %v2067 = vpack.c.bf16 %v2051, %v2050
        %2068 = vst.msk [vmem:[#allocation4 + $0x18] sm:$0xff] %vm712, %v2052
        %2069 = vst.msk [vmem:[#allocation4 + $0x40] sm:$0xff] %vm712, %v2053
        %2070 = vst.msk [vmem:[#allocation4 + $0x68] sm:$0xff] %vm712, %v2054
        %2071 = vst.msk [vmem:[#allocation4 + $0x90] sm:$0xff] %vm712, %v2055
        %2072 = vst.msk [vmem:[#allocation4 + $0xb8] sm:$0xff] %vm712, %v2056
        %2073 = vst.msk [vmem:[#allocation4 + $0xe0] sm:$0xff] %vm712, %v2057
        %2074 = vst.msk [vmem:[#allocation4 + $0x108] sm:$0xff] %vm712, %v2058
        %2075 = vst.msk [vmem:[#allocation4 + $0x130] sm:$0xff] %vm712, %v2059
        %2076 = vst.msk [vmem:[#allocation4 + $0x158] sm:$0xff] %vm712, %v2060
        %2077 = vst.msk [vmem:[#allocation4 + $0x180] sm:$0xff] %vm712, %v2061
        %2078 = vst.msk [vmem:[#allocation4 + $0x1a8] sm:$0xff] %vm712, %v2062
        %2079 = vst.msk [vmem:[#allocation4 + $0x1d0] sm:$0xff] %vm712, %v2063
        %2080 = vst.msk [vmem:[#allocation4 + $0x1f8] sm:$0xff] %vm712, %v2064
        %2081 = vst.msk [vmem:[#allocation4 + $0x220] sm:$0xff] %vm712, %v2065
        %2082 = vst.msk [vmem:[#allocation4 + $0x248] sm:$0xff] %vm712, %v2066
        %2083 = vst.msk [vmem:[#allocation4 + $0x270] sm:$0xff] %vm712, %v2067
        %v2084 = vld [vmem:[%s2019 + $0x1] sm:$0xff]
        %v2085 = vld [vmem:[%s2019 + $0x9] sm:$0xff]
        %v2086 = vld [vmem:[%s2019 + $0x19] sm:$0xff]
        %v2087 = vld [vmem:[%s2019 + $0x21] sm:$0xff]
        %v2088 = vld [vmem:[%s2019 + $0x31] sm:$0xff]
        %v2089 = vld [vmem:[%s2019 + $0x39] sm:$0xff]
        %v2090 = vld [vmem:[%s2019 + $0x49] sm:$0xff]
        %v2091 = vld [vmem:[%s2019 + $0x51] sm:$0xff]
        %v2092 = vld [vmem:[%s2019 + $0x61] sm:$0xff]
        %v2093 = vld [vmem:[%s2019 + $0x69] sm:$0xff]
        %v2094 = vld [vmem:[%s2019 + $0x79] sm:$0xff]
        %v2095 = vld [vmem:[%s2019 + $0x81] sm:$0xff]
        %v2096 = vld [vmem:[%s2019 + $0x91] sm:$0xff]
        %v2097 = vld [vmem:[%s2019 + $0x99] sm:$0xff]
        %v2098 = vld [vmem:[%s2019 + $0xa9] sm:$0xff]
        %v2099 = vld [vmem:[%s2019 + $0xb1] sm:$0xff]
        %v2100 = vld [vmem:[%s2019 + $0xc1] sm:$0xff]
        %v2101 = vld [vmem:[%s2019 + $0xc9] sm:$0xff]
        %v2102 = vld [vmem:[%s2019 + $0xd9] sm:$0xff]
        %v2103 = vld [vmem:[%s2019 + $0xe1] sm:$0xff]
        %v2104 = vld [vmem:[%s2019 + $0xf1] sm:$0xff]
        %v2105 = vld [vmem:[%s2019 + $0xf9] sm:$0xff]
        %v2106 = vld [vmem:[%s2019 + $0x109] sm:$0xff]
        %v2107 = vld [vmem:[%s2019 + $0x111] sm:$0xff]
        %v2108 = vld [vmem:[%s2019 + $0x121] sm:$0xff]
        %v2109 = vld [vmem:[%s2019 + $0x129] sm:$0xff]
        %v2110 = vld [vmem:[%s2019 + $0x139] sm:$0xff]
        %v2111 = vld [vmem:[%s2019 + $0x141] sm:$0xff]
        %v2112 = vld [vmem:[%s2019 + $0x151] sm:$0xff]
        %v2113 = vld [vmem:[%s2019 + $0x159] sm:$0xff]
        %v2114 = vld [vmem:[%s2019 + $0x169] sm:$0xff]
        %v2115 = vld [vmem:[%s2019 + $0x171] sm:$0xff]
        %v2116 = vpack.c.bf16 %v2085, %v2084
        %v2117 = vpack.c.bf16 %v2087, %v2086
        %v2118 = vpack.c.bf16 %v2089, %v2088
        %v2119 = vpack.c.bf16 %v2091, %v2090
        %v2120 = vpack.c.bf16 %v2093, %v2092
        %v2121 = vpack.c.bf16 %v2095, %v2094
        %v2122 = vpack.c.bf16 %v2097, %v2096
        %v2123 = vpack.c.bf16 %v2099, %v2098
        %v2124 = vpack.c.bf16 %v2101, %v2100
        %v2125 = vpack.c.bf16 %v2103, %v2102
        %v2126 = vpack.c.bf16 %v2105, %v2104
        %v2127 = vpack.c.bf16 %v2107, %v2106
        %v2128 = vpack.c.bf16 %v2109, %v2108
        %v2129 = vpack.c.bf16 %v2111, %v2110
        %v2130 = vpack.c.bf16 %v2113, %v2112
        %v2131 = vpack.c.bf16 %v2115, %v2114
        %2148 = vrot.lane.b32.xlu0 %v2116, 32
        %v2149 = vpop.permute.xlu0 %2148
        %2150 = vrot.lane.b32.xlu0 %v2117, 32
        %v2151 = vpop.permute.xlu0 %2150
        %2152 = vrot.lane.b32.xlu0 %v2118, 32
        %v2153 = vpop.permute.xlu0 %2152
        %2154 = vrot.lane.b32.xlu0 %v2119, 32
        %v2155 = vpop.permute.xlu0 %2154
        %2156 = vrot.lane.b32.xlu0 %v2120, 32
        %v2157 = vpop.permute.xlu0 %2156
        %2158 = vrot.lane.b32.xlu0 %v2121, 32
        %v2159 = vpop.permute.xlu0 %2158
        %2160 = vrot.lane.b32.xlu0 %v2122, 32
        %v2161 = vpop.permute.xlu0 %2160
        %2162 = vrot.lane.b32.xlu0 %v2123, 32
        %v2163 = vpop.permute.xlu0 %2162
        %2164 = vrot.lane.b32.xlu0 %v2124, 32
        %v2165 = vpop.permute.xlu0 %2164
        %2166 = vrot.lane.b32.xlu0 %v2125, 32
        %v2167 = vpop.permute.xlu0 %2166
        %2168 = vrot.lane.b32.xlu0 %v2126, 32
        %v2169 = vpop.permute.xlu0 %2168
        %2170 = vrot.lane.b32.xlu0 %v2127, 32
        %v2171 = vpop.permute.xlu0 %2170
        %2172 = vrot.lane.b32.xlu0 %v2128, 32
        %v2173 = vpop.permute.xlu0 %2172
        %2174 = vrot.lane.b32.xlu0 %v2129, 32
        %v2175 = vpop.permute.xlu0 %2174
        %2176 = vrot.lane.b32.xlu0 %v2130, 32
        %v2177 = vpop.permute.xlu0 %2176
        %2178 = vrot.lane.b32.xlu0 %v2131, 32
        %v2179 = vpop.permute.xlu0 %2178
        %2196 = vst.msk [vmem:[#allocation4 + $0x18] sm:$0xff] %vm841, %v2149
        %2197 = vst.msk [vmem:[#allocation4 + $0x40] sm:$0xff] %vm841, %v2151
        %2198 = vst.msk [vmem:[#allocation4 + $0x68] sm:$0xff] %vm841, %v2153
        %2199 = vst.msk [vmem:[#allocation4 + $0x90] sm:$0xff] %vm841, %v2155
        %2200 = vst.msk [vmem:[#allocation4 + $0xb8] sm:$0xff] %vm841, %v2157
        %2201 = vst.msk [vmem:[#allocation4 + $0xe0] sm:$0xff] %vm841, %v2159
        %2202 = vst.msk [vmem:[#allocation4 + $0x108] sm:$0xff] %vm841, %v2161
        %2203 = vst.msk [vmem:[#allocation4 + $0x130] sm:$0xff] %vm841, %v2163
        %2204 = vst.msk [vmem:[#allocation4 + $0x158] sm:$0xff] %vm841, %v2165
        %2205 = vst.msk [vmem:[#allocation4 + $0x180] sm:$0xff] %vm841, %v2167
        %2206 = vst.msk [vmem:[#allocation4 + $0x1a8] sm:$0xff] %vm841, %v2169
        %2207 = vst.msk [vmem:[#allocation4 + $0x1d0] sm:$0xff] %vm841, %v2171
        %2208 = vst.msk [vmem:[#allocation4 + $0x1f8] sm:$0xff] %vm841, %v2173
        %2209 = vst.msk [vmem:[#allocation4 + $0x220] sm:$0xff] %vm841, %v2175
        %2210 = vst.msk [vmem:[#allocation4 + $0x248] sm:$0xff] %vm841, %v2177
        %2211 = vst.msk [vmem:[#allocation4 + $0x270] sm:$0xff] %vm841, %v2179
        %v2212 = vld [vmem:[%s2019 + $0x2] sm:$0xff]
        %v2213 = vld [vmem:[%s2019 + $0xa] sm:$0xff]
        %v2214 = vld [vmem:[%s2019 + $0x1a] sm:$0xff]
        %v2215 = vld [vmem:[%s2019 + $0x22] sm:$0xff]
        %v2216 = vld [vmem:[%s2019 + $0x32] sm:$0xff]
        %v2217 = vld [vmem:[%s2019 + $0x3a] sm:$0xff]
        %v2218 = vld [vmem:[%s2019 + $0x4a] sm:$0xff]
        %v2219 = vld [vmem:[%s2019 + $0x52] sm:$0xff]
        %v2220 = vld [vmem:[%s2019 + $0x62] sm:$0xff]
        %v2221 = vld [vmem:[%s2019 + $0x6a] sm:$0xff]
        %v2222 = vld [vmem:[%s2019 + $0x7a] sm:$0xff]
        %v2223 = vld [vmem:[%s2019 + $0x82] sm:$0xff]
        %v2224 = vld [vmem:[%s2019 + $0x92] sm:$0xff]
        %v2225 = vld [vmem:[%s2019 + $0x9a] sm:$0xff]
        %v2226 = vld [vmem:[%s2019 + $0xaa] sm:$0xff]
        %v2227 = vld [vmem:[%s2019 + $0xb2] sm:$0xff]
        %v2228 = vld [vmem:[%s2019 + $0xc2] sm:$0xff]
        %v2229 = vld [vmem:[%s2019 + $0xca] sm:$0xff]
        %v2230 = vld [vmem:[%s2019 + $0xda] sm:$0xff]
        %v2231 = vld [vmem:[%s2019 + $0xe2] sm:$0xff]
        %v2232 = vld [vmem:[%s2019 + $0xf2] sm:$0xff]
        %v2233 = vld [vmem:[%s2019 + $0xfa] sm:$0xff]
        %v2234 = vld [vmem:[%s2019 + $0x10a] sm:$0xff]
        %v2235 = vld [vmem:[%s2019 + $0x112] sm:$0xff]
        %v2236 = vld [vmem:[%s2019 + $0x122] sm:$0xff]
        %v2237 = vld [vmem:[%s2019 + $0x12a] sm:$0xff]
        %v2238 = vld [vmem:[%s2019 + $0x13a] sm:$0xff]
        %v2239 = vld [vmem:[%s2019 + $0x142] sm:$0xff]
        %v2240 = vld [vmem:[%s2019 + $0x152] sm:$0xff]
        %v2241 = vld [vmem:[%s2019 + $0x15a] sm:$0xff]
        %v2242 = vld [vmem:[%s2019 + $0x16a] sm:$0xff]
        %v2243 = vld [vmem:[%s2019 + $0x172] sm:$0xff]
        %v2244 = vpack.c.bf16 %v2213, %v2212
        %v2245 = vpack.c.bf16 %v2215, %v2214
        %v2246 = vpack.c.bf16 %v2217, %v2216
        %v2247 = vpack.c.bf16 %v2219, %v2218
        %v2248 = vpack.c.bf16 %v2221, %v2220
        %v2249 = vpack.c.bf16 %v2223, %v2222
        %v2250 = vpack.c.bf16 %v2225, %v2224
        %v2251 = vpack.c.bf16 %v2227, %v2226
        %v2252 = vpack.c.bf16 %v2229, %v2228
        %v2253 = vpack.c.bf16 %v2231, %v2230
        %v2254 = vpack.c.bf16 %v2233, %v2232
        %v2255 = vpack.c.bf16 %v2235, %v2234
        %v2256 = vpack.c.bf16 %v2237, %v2236
        %v2257 = vpack.c.bf16 %v2239, %v2238
        %v2258 = vpack.c.bf16 %v2241, %v2240
        %v2259 = vpack.c.bf16 %v2243, %v2242
        %2276 = vrot.lane.b32.xlu0 %v2244, 64
        %v2277 = vpop.permute.xlu0 %2276
        %2278 = vrot.lane.b32.xlu0 %v2245, 64
        %v2279 = vpop.permute.xlu0 %2278
        %2280 = vrot.lane.b32.xlu0 %v2246, 64
        %v2281 = vpop.permute.xlu0 %2280
        %2282 = vrot.lane.b32.xlu0 %v2247, 64
        %v2283 = vpop.permute.xlu0 %2282
        %2284 = vrot.lane.b32.xlu0 %v2248, 64
        %v2285 = vpop.permute.xlu0 %2284
        %2286 = vrot.lane.b32.xlu0 %v2249, 64
        %v2287 = vpop.permute.xlu0 %2286
        %2288 = vrot.lane.b32.xlu0 %v2250, 64
        %v2289 = vpop.permute.xlu0 %2288
        %2290 = vrot.lane.b32.xlu0 %v2251, 64
        %v2291 = vpop.permute.xlu0 %2290
        %2292 = vrot.lane.b32.xlu0 %v2252, 64
        %v2293 = vpop.permute.xlu0 %2292
        %2294 = vrot.lane.b32.xlu0 %v2253, 64
        %v2295 = vpop.permute.xlu0 %2294
        %2296 = vrot.lane.b32.xlu0 %v2254, 64
        %v2297 = vpop.permute.xlu0 %2296
        %2298 = vrot.lane.b32.xlu0 %v2255, 64
        %v2299 = vpop.permute.xlu0 %2298
        %2300 = vrot.lane.b32.xlu0 %v2256, 64
        %v2301 = vpop.permute.xlu0 %2300
        %2302 = vrot.lane.b32.xlu0 %v2257, 64
        %v2303 = vpop.permute.xlu0 %2302
        %2304 = vrot.lane.b32.xlu0 %v2258, 64
        %v2305 = vpop.permute.xlu0 %2304
        %2306 = vrot.lane.b32.xlu0 %v2259, 64
        %v2307 = vpop.permute.xlu0 %2306
        %2324 = vst.msk [vmem:[#allocation4 + $0x18] sm:$0xff] %vm970, %v2277
        %2325 = vst.msk [vmem:[#allocation4 + $0x40] sm:$0xff] %vm970, %v2279
        %2326 = vst.msk [vmem:[#allocation4 + $0x68] sm:$0xff] %vm970, %v2281
        %2327 = vst.msk [vmem:[#allocation4 + $0x90] sm:$0xff] %vm970, %v2283
        %2328 = vst.msk [vmem:[#allocation4 + $0xb8] sm:$0xff] %vm970, %v2285
        %2329 = vst.msk [vmem:[#allocation4 + $0xe0] sm:$0xff] %vm970, %v2287
        %2330 = vst.msk [vmem:[#allocation4 + $0x108] sm:$0xff] %vm970, %v2289
        %2331 = vst.msk [vmem:[#allocation4 + $0x130] sm:$0xff] %vm970, %v2291
        %2332 = vst.msk [vmem:[#allocation4 + $0x158] sm:$0xff] %vm970, %v2293
        %2333 = vst.msk [vmem:[#allocation4 + $0x180] sm:$0xff] %vm970, %v2295
        %2334 = vst.msk [vmem:[#allocation4 + $0x1a8] sm:$0xff] %vm970, %v2297
        %2335 = vst.msk [vmem:[#allocation4 + $0x1d0] sm:$0xff] %vm970, %v2299
        %2336 = vst.msk [vmem:[#allocation4 + $0x1f8] sm:$0xff] %vm970, %v2301
        %2337 = vst.msk [vmem:[#allocation4 + $0x220] sm:$0xff] %vm970, %v2303
        %2338 = vst.msk [vmem:[#allocation4 + $0x248] sm:$0xff] %vm970, %v2305
        %2339 = vst.msk [vmem:[#allocation4 + $0x270] sm:$0xff] %vm970, %v2307
        %s2340 = sadd.s32 48, %s1632
        %s2341 = scalar_lea.vmem [#allocation2], %s2340
        %v2342 = vld [vmem:[%s2341] sm:$0xff]
        %v2343 = vld [vmem:[%s2341 + $0x8] sm:$0xff]
        %v2344 = vld [vmem:[%s2341 + $0x18] sm:$0xff]
        %v2345 = vld [vmem:[%s2341 + $0x20] sm:$0xff]
        %v2346 = vld [vmem:[%s2341 + $0x30] sm:$0xff]
        %v2347 = vld [vmem:[%s2341 + $0x38] sm:$0xff]
        %v2348 = vld [vmem:[%s2341 + $0x48] sm:$0xff]
        %v2349 = vld [vmem:[%s2341 + $0x50] sm:$0xff]
        %v2350 = vld [vmem:[%s2341 + $0x60] sm:$0xff]
        %v2351 = vld [vmem:[%s2341 + $0x68] sm:$0xff]
        %v2352 = vld [vmem:[%s2341 + $0x78] sm:$0xff]
        %v2353 = vld [vmem:[%s2341 + $0x80] sm:$0xff]
        %v2354 = vld [vmem:[%s2341 + $0x90] sm:$0xff]
        %v2355 = vld [vmem:[%s2341 + $0x98] sm:$0xff]
        %v2356 = vld [vmem:[%s2341 + $0xa8] sm:$0xff]
        %v2357 = vld [vmem:[%s2341 + $0xb0] sm:$0xff]
        %v2358 = vld [vmem:[%s2341 + $0xc0] sm:$0xff]
        %v2359 = vld [vmem:[%s2341 + $0xc8] sm:$0xff]
        %v2360 = vld [vmem:[%s2341 + $0xd8] sm:$0xff]
        %v2361 = vld [vmem:[%s2341 + $0xe0] sm:$0xff]
        %v2362 = vld [vmem:[%s2341 + $0xf0] sm:$0xff]
        %v2363 = vld [vmem:[%s2341 + $0xf8] sm:$0xff]
        %v2364 = vld [vmem:[%s2341 + $0x108] sm:$0xff]
        %v2365 = vld [vmem:[%s2341 + $0x110] sm:$0xff]
        %v2366 = vld [vmem:[%s2341 + $0x120] sm:$0xff]
        %v2367 = vld [vmem:[%s2341 + $0x128] sm:$0xff]
        %v2368 = vld [vmem:[%s2341 + $0x138] sm:$0xff]
        %v2369 = vld [vmem:[%s2341 + $0x140] sm:$0xff]
        %v2370 = vld [vmem:[%s2341 + $0x150] sm:$0xff]
        %v2371 = vld [vmem:[%s2341 + $0x158] sm:$0xff]
        %v2372 = vld [vmem:[%s2341 + $0x168] sm:$0xff]
        %v2373 = vld [vmem:[%s2341 + $0x170] sm:$0xff]
        %v2374 = vpack.c.bf16 %v2343, %v2342
        %v2375 = vpack.c.bf16 %v2345, %v2344
        %v2376 = vpack.c.bf16 %v2347, %v2346
        %v2377 = vpack.c.bf16 %v2349, %v2348
        %v2378 = vpack.c.bf16 %v2351, %v2350
        %v2379 = vpack.c.bf16 %v2353, %v2352
        %v2380 = vpack.c.bf16 %v2355, %v2354
        %v2381 = vpack.c.bf16 %v2357, %v2356
        %v2382 = vpack.c.bf16 %v2359, %v2358
        %v2383 = vpack.c.bf16 %v2361, %v2360
        %v2384 = vpack.c.bf16 %v2363, %v2362
        %v2385 = vpack.c.bf16 %v2365, %v2364
        %v2386 = vpack.c.bf16 %v2367, %v2366
        %v2387 = vpack.c.bf16 %v2369, %v2368
        %v2388 = vpack.c.bf16 %v2371, %v2370
        %v2389 = vpack.c.bf16 %v2373, %v2372
        %2406 = vrot.lane.b32.xlu0 %v2374, 96
        %v2407 = vpop.permute.xlu0 %2406
        %2408 = vrot.lane.b32.xlu0 %v2375, 96
        %v2409 = vpop.permute.xlu0 %2408
        %2410 = vrot.lane.b32.xlu0 %v2376, 96
        %v2411 = vpop.permute.xlu0 %2410
        %2412 = vrot.lane.b32.xlu0 %v2377, 96
        %v2413 = vpop.permute.xlu0 %2412
        %2414 = vrot.lane.b32.xlu0 %v2378, 96
        %v2415 = vpop.permute.xlu0 %2414
        %2416 = vrot.lane.b32.xlu0 %v2379, 96
        %v2417 = vpop.permute.xlu0 %2416
        %2418 = vrot.lane.b32.xlu0 %v2380, 96
        %v2419 = vpop.permute.xlu0 %2418
        %2420 = vrot.lane.b32.xlu0 %v2381, 96
        %v2421 = vpop.permute.xlu0 %2420
        %2422 = vrot.lane.b32.xlu0 %v2382, 96
        %v2423 = vpop.permute.xlu0 %2422
        %2424 = vrot.lane.b32.xlu0 %v2383, 96
        %v2425 = vpop.permute.xlu0 %2424
        %2426 = vrot.lane.b32.xlu0 %v2384, 96
        %v2427 = vpop.permute.xlu0 %2426
        %2428 = vrot.lane.b32.xlu0 %v2385, 96
        %v2429 = vpop.permute.xlu0 %2428
        %2430 = vrot.lane.b32.xlu0 %v2386, 96
        %v2431 = vpop.permute.xlu0 %2430
        %2432 = vrot.lane.b32.xlu0 %v2387, 96
        %v2433 = vpop.permute.xlu0 %2432
        %2434 = vrot.lane.b32.xlu0 %v2388, 96
        %v2435 = vpop.permute.xlu0 %2434
        %2436 = vrot.lane.b32.xlu0 %v2389, 96
        %v2437 = vpop.permute.xlu0 %2436
        %2454 = vst.msk [vmem:[#allocation4 + $0x18] sm:$0xff] %vm1101, %v2407
        %2455 = vst.msk [vmem:[#allocation4 + $0x40] sm:$0xff] %vm1101, %v2409
        %2456 = vst.msk [vmem:[#allocation4 + $0x68] sm:$0xff] %vm1101, %v2411
        %2457 = vst.msk [vmem:[#allocation4 + $0x90] sm:$0xff] %vm1101, %v2413
        %2458 = vst.msk [vmem:[#allocation4 + $0xb8] sm:$0xff] %vm1101, %v2415
        %2459 = vst.msk [vmem:[#allocation4 + $0xe0] sm:$0xff] %vm1101, %v2417
        %2460 = vst.msk [vmem:[#allocation4 + $0x108] sm:$0xff] %vm1101, %v2419
        %2461 = vst.msk [vmem:[#allocation4 + $0x130] sm:$0xff] %vm1101, %v2421
        %2462 = vst.msk [vmem:[#allocation4 + $0x158] sm:$0xff] %vm1101, %v2423
        %2463 = vst.msk [vmem:[#allocation4 + $0x180] sm:$0xff] %vm1101, %v2425
        %2464 = vst.msk [vmem:[#allocation4 + $0x1a8] sm:$0xff] %vm1101, %v2427
        %2465 = vst.msk [vmem:[#allocation4 + $0x1d0] sm:$0xff] %vm1101, %v2429
        %2466 = vst.msk [vmem:[#allocation4 + $0x1f8] sm:$0xff] %vm1101, %v2431
        %2467 = vst.msk [vmem:[#allocation4 + $0x220] sm:$0xff] %vm1101, %v2433
        %2468 = vst.msk [vmem:[#allocation4 + $0x248] sm:$0xff] %vm1101, %v2435
        %2469 = vst.msk [vmem:[#allocation4 + $0x270] sm:$0xff] %vm1101, %v2437
        %v2470 = vld [vmem:[%s2341 + $0x1] sm:$0xff]
        %v2471 = vld [vmem:[%s2341 + $0x9] sm:$0xff]
        %v2472 = vld [vmem:[%s2341 + $0x19] sm:$0xff]
        %v2473 = vld [vmem:[%s2341 + $0x21] sm:$0xff]
        %v2474 = vld [vmem:[%s2341 + $0x31] sm:$0xff]
        %v2475 = vld [vmem:[%s2341 + $0x39] sm:$0xff]
        %v2476 = vld [vmem:[%s2341 + $0x49] sm:$0xff]
        %v2477 = vld [vmem:[%s2341 + $0x51] sm:$0xff]
        %v2478 = vld [vmem:[%s2341 + $0x61] sm:$0xff]
        %v2479 = vld [vmem:[%s2341 + $0x69] sm:$0xff]
        %v2480 = vld [vmem:[%s2341 + $0x79] sm:$0xff]
        %v2481 = vld [vmem:[%s2341 + $0x81] sm:$0xff]
        %v2482 = vld [vmem:[%s2341 + $0x91] sm:$0xff]
        %v2483 = vld [vmem:[%s2341 + $0x99] sm:$0xff]
        %v2484 = vld [vmem:[%s2341 + $0xa9] sm:$0xff]
        %v2485 = vld [vmem:[%s2341 + $0xb1] sm:$0xff]
        %v2486 = vld [vmem:[%s2341 + $0xc1] sm:$0xff]
        %v2487 = vld [vmem:[%s2341 + $0xc9] sm:$0xff]
        %v2488 = vld [vmem:[%s2341 + $0xd9] sm:$0xff]
        %v2489 = vld [vmem:[%s2341 + $0xe1] sm:$0xff]
        %v2490 = vld [vmem:[%s2341 + $0xf1] sm:$0xff]
        %v2491 = vld [vmem:[%s2341 + $0xf9] sm:$0xff]
        %v2492 = vld [vmem:[%s2341 + $0x109] sm:$0xff]
        %v2493 = vld [vmem:[%s2341 + $0x111] sm:$0xff]
        %v2494 = vld [vmem:[%s2341 + $0x121] sm:$0xff]
        %v2495 = vld [vmem:[%s2341 + $0x129] sm:$0xff]
        %v2496 = vld [vmem:[%s2341 + $0x139] sm:$0xff]
        %v2497 = vld [vmem:[%s2341 + $0x141] sm:$0xff]
        %v2498 = vld [vmem:[%s2341 + $0x151] sm:$0xff]
        %v2499 = vld [vmem:[%s2341 + $0x159] sm:$0xff]
        %v2500 = vld [vmem:[%s2341 + $0x169] sm:$0xff]
        %v2501 = vld [vmem:[%s2341 + $0x171] sm:$0xff]
        %v2502 = vpack.c.bf16 %v2471, %v2470
        %v2503 = vpack.c.bf16 %v2473, %v2472
        %v2504 = vpack.c.bf16 %v2475, %v2474
        %v2505 = vpack.c.bf16 %v2477, %v2476
        %v2506 = vpack.c.bf16 %v2479, %v2478
        %v2507 = vpack.c.bf16 %v2481, %v2480
        %v2508 = vpack.c.bf16 %v2483, %v2482
        %v2509 = vpack.c.bf16 %v2485, %v2484
        %v2510 = vpack.c.bf16 %v2487, %v2486
        %v2511 = vpack.c.bf16 %v2489, %v2488
        %v2512 = vpack.c.bf16 %v2491, %v2490
        %v2513 = vpack.c.bf16 %v2493, %v2492
        %v2514 = vpack.c.bf16 %v2495, %v2494
        %v2515 = vpack.c.bf16 %v2497, %v2496
        %v2516 = vpack.c.bf16 %v2499, %v2498
        %v2517 = vpack.c.bf16 %v2501, %v2500
        %2518 = vst.msk [vmem:[#allocation4 + $0x20] sm:$0xff] %vm712, %v2502
        %2519 = vst.msk [vmem:[#allocation4 + $0x48] sm:$0xff] %vm712, %v2503
        %2520 = vst.msk [vmem:[#allocation4 + $0x70] sm:$0xff] %vm712, %v2504
        %2521 = vst.msk [vmem:[#allocation4 + $0x98] sm:$0xff] %vm712, %v2505
        %2522 = vst.msk [vmem:[#allocation4 + $0xc0] sm:$0xff] %vm712, %v2506
        %2523 = vst.msk [vmem:[#allocation4 + $0xe8] sm:$0xff] %vm712, %v2507
        %2524 = vst.msk [vmem:[#allocation4 + $0x110] sm:$0xff] %vm712, %v2508
        %2525 = vst.msk [vmem:[#allocation4 + $0x138] sm:$0xff] %vm712, %v2509
        %2526 = vst.msk [vmem:[#allocation4 + $0x160] sm:$0xff] %vm712, %v2510
        %2527 = vst.msk [vmem:[#allocation4 + $0x188] sm:$0xff] %vm712, %v2511
        %2528 = vst.msk [vmem:[#allocation4 + $0x1b0] sm:$0xff] %vm712, %v2512
        %2529 = vst.msk [vmem:[#allocation4 + $0x1d8] sm:$0xff] %vm712, %v2513
        %2530 = vst.msk [vmem:[#allocation4 + $0x200] sm:$0xff] %vm712, %v2514
        %2531 = vst.msk [vmem:[#allocation4 + $0x228] sm:$0xff] %vm712, %v2515
        %2532 = vst.msk [vmem:[#allocation4 + $0x250] sm:$0xff] %vm712, %v2516
        %2533 = vst.msk [vmem:[#allocation4 + $0x278] sm:$0xff] %vm712, %v2517
        %v2534 = vld [vmem:[%s2341 + $0x2] sm:$0xff]
        %v2535 = vld [vmem:[%s2341 + $0xa] sm:$0xff]
        %v2536 = vld [vmem:[%s2341 + $0x1a] sm:$0xff]
        %v2537 = vld [vmem:[%s2341 + $0x22] sm:$0xff]
        %v2538 = vld [vmem:[%s2341 + $0x32] sm:$0xff]
        %v2539 = vld [vmem:[%s2341 + $0x3a] sm:$0xff]
        %v2540 = vld [vmem:[%s2341 + $0x4a] sm:$0xff]
        %v2541 = vld [vmem:[%s2341 + $0x52] sm:$0xff]
        %v2542 = vld [vmem:[%s2341 + $0x62] sm:$0xff]
        %v2543 = vld [vmem:[%s2341 + $0x6a] sm:$0xff]
        %v2544 = vld [vmem:[%s2341 + $0x7a] sm:$0xff]
        %v2545 = vld [vmem:[%s2341 + $0x82] sm:$0xff]
        %v2546 = vld [vmem:[%s2341 + $0x92] sm:$0xff]
        %v2547 = vld [vmem:[%s2341 + $0x9a] sm:$0xff]
        %v2548 = vld [vmem:[%s2341 + $0xaa] sm:$0xff]
        %v2549 = vld [vmem:[%s2341 + $0xb2] sm:$0xff]
        %v2550 = vld [vmem:[%s2341 + $0xc2] sm:$0xff]
        %v2551 = vld [vmem:[%s2341 + $0xca] sm:$0xff]
        %v2552 = vld [vmem:[%s2341 + $0xda] sm:$0xff]
        %v2553 = vld [vmem:[%s2341 + $0xe2] sm:$0xff]
        %v2554 = vld [vmem:[%s2341 + $0xf2] sm:$0xff]
        %v2555 = vld [vmem:[%s2341 + $0xfa] sm:$0xff]
        %v2556 = vld [vmem:[%s2341 + $0x10a] sm:$0xff]
        %v2557 = vld [vmem:[%s2341 + $0x112] sm:$0xff]
        %v2558 = vld [vmem:[%s2341 + $0x122] sm:$0xff]
        %v2559 = vld [vmem:[%s2341 + $0x12a] sm:$0xff]
        %v2560 = vld [vmem:[%s2341 + $0x13a] sm:$0xff]
        %v2561 = vld [vmem:[%s2341 + $0x142] sm:$0xff]
        %v2562 = vld [vmem:[%s2341 + $0x152] sm:$0xff]
        %v2563 = vld [vmem:[%s2341 + $0x15a] sm:$0xff]
        %v2564 = vld [vmem:[%s2341 + $0x16a] sm:$0xff]
        %v2565 = vld [vmem:[%s2341 + $0x172] sm:$0xff]
        %v2566 = vpack.c.bf16 %v2535, %v2534
        %v2567 = vpack.c.bf16 %v2537, %v2536
        %v2568 = vpack.c.bf16 %v2539, %v2538
        %v2569 = vpack.c.bf16 %v2541, %v2540
        %v2570 = vpack.c.bf16 %v2543, %v2542
        %v2571 = vpack.c.bf16 %v2545, %v2544
        %v2572 = vpack.c.bf16 %v2547, %v2546
        %v2573 = vpack.c.bf16 %v2549, %v2548
        %v2574 = vpack.c.bf16 %v2551, %v2550
        %v2575 = vpack.c.bf16 %v2553, %v2552
        %v2576 = vpack.c.bf16 %v2555, %v2554
        %v2577 = vpack.c.bf16 %v2557, %v2556
        %v2578 = vpack.c.bf16 %v2559, %v2558
        %v2579 = vpack.c.bf16 %v2561, %v2560
        %v2580 = vpack.c.bf16 %v2563, %v2562
        %v2581 = vpack.c.bf16 %v2565, %v2564
        %2598 = vrot.lane.b32.xlu0 %v2566, 32
        %v2599 = vpop.permute.xlu0 %2598
        %2600 = vrot.lane.b32.xlu0 %v2567, 32
        %v2601 = vpop.permute.xlu0 %2600
        %2602 = vrot.lane.b32.xlu0 %v2568, 32
        %v2603 = vpop.permute.xlu0 %2602
        %2604 = vrot.lane.b32.xlu0 %v2569, 32
        %v2605 = vpop.permute.xlu0 %2604
        %2606 = vrot.lane.b32.xlu0 %v2570, 32
        %v2607 = vpop.permute.xlu0 %2606
        %2608 = vrot.lane.b32.xlu0 %v2571, 32
        %v2609 = vpop.permute.xlu0 %2608
        %2610 = vrot.lane.b32.xlu0 %v2572, 32
        %v2611 = vpop.permute.xlu0 %2610
        %2612 = vrot.lane.b32.xlu0 %v2573, 32
        %v2613 = vpop.permute.xlu0 %2612
        %2614 = vrot.lane.b32.xlu0 %v2574, 32
        %v2615 = vpop.permute.xlu0 %2614
        %2616 = vrot.lane.b32.xlu0 %v2575, 32
        %v2617 = vpop.permute.xlu0 %2616
        %2618 = vrot.lane.b32.xlu0 %v2576, 32
        %v2619 = vpop.permute.xlu0 %2618
        %2620 = vrot.lane.b32.xlu0 %v2577, 32
        %v2621 = vpop.permute.xlu0 %2620
        %2622 = vrot.lane.b32.xlu0 %v2578, 32
        %v2623 = vpop.permute.xlu0 %2622
        %2624 = vrot.lane.b32.xlu0 %v2579, 32
        %v2625 = vpop.permute.xlu0 %2624
        %2626 = vrot.lane.b32.xlu0 %v2580, 32
        %v2627 = vpop.permute.xlu0 %2626
        %2628 = vrot.lane.b32.xlu0 %v2581, 32
        %v2629 = vpop.permute.xlu0 %2628
        %2646 = vst.msk [vmem:[#allocation4 + $0x20] sm:$0xff] %vm841, %v2599
        %2647 = vst.msk [vmem:[#allocation4 + $0x48] sm:$0xff] %vm841, %v2601
        %2648 = vst.msk [vmem:[#allocation4 + $0x70] sm:$0xff] %vm841, %v2603
        %2649 = vst.msk [vmem:[#allocation4 + $0x98] sm:$0xff] %vm841, %v2605
        %2650 = vst.msk [vmem:[#allocation4 + $0xc0] sm:$0xff] %vm841, %v2607
        %2651 = vst.msk [vmem:[#allocation4 + $0xe8] sm:$0xff] %vm841, %v2609
        %2652 = vst.msk [vmem:[#allocation4 + $0x110] sm:$0xff] %vm841, %v2611
        %2653 = vst.msk [vmem:[#allocation4 + $0x138] sm:$0xff] %vm841, %v2613
        %2654 = vst.msk [vmem:[#allocation4 + $0x160] sm:$0xff] %vm841, %v2615
        %2655 = vst.msk [vmem:[#allocation4 + $0x188] sm:$0xff] %vm841, %v2617
        %2656 = vst.msk [vmem:[#allocation4 + $0x1b0] sm:$0xff] %vm841, %v2619
        %2657 = vst.msk [vmem:[#allocation4 + $0x1d8] sm:$0xff] %vm841, %v2621
        %2658 = vst.msk [vmem:[#allocation4 + $0x200] sm:$0xff] %vm841, %v2623
        %2659 = vst.msk [vmem:[#allocation4 + $0x228] sm:$0xff] %vm841, %v2625
        %2660 = vst.msk [vmem:[#allocation4 + $0x250] sm:$0xff] %vm841, %v2627
        %2661 = vst.msk [vmem:[#allocation4 + $0x278] sm:$0xff] %vm841, %v2629
        %v2662 = vld [vmem:[#allocation4] sm:$0xff]
        %v2663 = vld [vmem:[#allocation4 + $0x8] sm:$0xff]
        %v2664 = vld [vmem:[#allocation4 + $0x10] sm:$0xff]
        %v2665 = vld [vmem:[#allocation4 + $0x18] sm:$0xff]
        %v2666 = vld [vmem:[#allocation4 + $0x20] sm:$0xff]
        %v2667 = vld [vmem:[#allocation4 + $0x28] sm:$0xff]
        %v2668 = vld [vmem:[#allocation4 + $0x30] sm:$0xff]
        %v2669 = vld [vmem:[#allocation4 + $0x38] sm:$0xff]
        %v2670 = vld [vmem:[#allocation4 + $0x40] sm:$0xff]
        %v2671 = vld [vmem:[#allocation4 + $0x48] sm:$0xff]
        %v2672 = vld [vmem:[#allocation4 + $0x50] sm:$0xff]
        %v2673 = vld [vmem:[#allocation4 + $0x58] sm:$0xff]
        %v2674 = vld [vmem:[#allocation4 + $0x60] sm:$0xff]
        %v2675 = vld [vmem:[#allocation4 + $0x68] sm:$0xff]
        %v2676 = vld [vmem:[#allocation4 + $0x70] sm:$0xff]
        %v2677 = vld [vmem:[#allocation4 + $0x78] sm:$0xff]
        %v2678 = vld [vmem:[#allocation4 + $0x80] sm:$0xff]
        %v2679 = vld [vmem:[#allocation4 + $0x88] sm:$0xff]
        %v2680 = vld [vmem:[#allocation4 + $0x90] sm:$0xff]
        %v2681 = vld [vmem:[#allocation4 + $0x98] sm:$0xff]
        %v2682 = vld [vmem:[#allocation4 + $0xa0] sm:$0xff]
        %v2683 = vld [vmem:[#allocation4 + $0xa8] sm:$0xff]
        %v2684 = vld [vmem:[#allocation4 + $0xb0] sm:$0xff]
        %v2685 = vld [vmem:[#allocation4 + $0xb8] sm:$0xff]
        %v2686 = vld [vmem:[#allocation4 + $0xc0] sm:$0xff]
        %v2687 = vld [vmem:[#allocation4 + $0xc8] sm:$0xff]
        %v2688 = vld [vmem:[#allocation4 + $0xd0] sm:$0xff]
        %v2689 = vld [vmem:[#allocation4 + $0xd8] sm:$0xff]
        %v2690 = vld [vmem:[#allocation4 + $0xe0] sm:$0xff]
        %v2691 = vld [vmem:[#allocation4 + $0xe8] sm:$0xff]
        %v2692 = vld [vmem:[#allocation4 + $0xf0] sm:$0xff]
        %v2693 = vld [vmem:[#allocation4 + $0xf8] sm:$0xff]
        %v2694 = vld [vmem:[#allocation4 + $0x100] sm:$0xff]
        %v2695 = vld [vmem:[#allocation4 + $0x108] sm:$0xff]
        %v2696 = vld [vmem:[#allocation4 + $0x110] sm:$0xff]
        %v2697 = vld [vmem:[#allocation4 + $0x118] sm:$0xff]
        %v2698 = vld [vmem:[#allocation4 + $0x120] sm:$0xff]
        %v2699 = vld [vmem:[#allocation4 + $0x128] sm:$0xff]
        %v2700 = vld [vmem:[#allocation4 + $0x130] sm:$0xff]
        %v2701 = vld [vmem:[#allocation4 + $0x138] sm:$0xff]
        %v2702 = vld [vmem:[#allocation4 + $0x140] sm:$0xff]
        %v2703 = vld [vmem:[#allocation4 + $0x148] sm:$0xff]
        %v2704 = vld [vmem:[#allocation4 + $0x150] sm:$0xff]
        %v2705 = vld [vmem:[#allocation4 + $0x158] sm:$0xff]
        %v2706 = vld [vmem:[#allocation4 + $0x160] sm:$0xff]
        %v2707 = vld [vmem:[#allocation4 + $0x168] sm:$0xff]
        %v2708 = vld [vmem:[#allocation4 + $0x170] sm:$0xff]
        %v2709 = vld [vmem:[#allocation4 + $0x178] sm:$0xff]
        %v2710 = vld [vmem:[#allocation4 + $0x180] sm:$0xff]
        %v2711 = vld [vmem:[#allocation4 + $0x188] sm:$0xff]
        %v2712 = vld [vmem:[#allocation4 + $0x190] sm:$0xff]
        %v2713 = vld [vmem:[#allocation4 + $0x198] sm:$0xff]
        %v2714 = vld [vmem:[#allocation4 + $0x1a0] sm:$0xff]
        %v2715 = vld [vmem:[#allocation4 + $0x1a8] sm:$0xff]
        %v2716 = vld [vmem:[#allocation4 + $0x1b0] sm:$0xff]
        %v2717 = vld [vmem:[#allocation4 + $0x1b8] sm:$0xff]
        %v2718 = vld [vmem:[#allocation4 + $0x1c0] sm:$0xff]
        %v2719 = vld [vmem:[#allocation4 + $0x1c8] sm:$0xff]
        %v2720 = vld [vmem:[#allocation4 + $0x1d0] sm:$0xff]
        %v2721 = vld [vmem:[#allocation4 + $0x1d8] sm:$0xff]
        %v2722 = vld [vmem:[#allocation4 + $0x1e0] sm:$0xff]
        %v2723 = vld [vmem:[#allocation4 + $0x1e8] sm:$0xff]
        %v2724 = vld [vmem:[#allocation4 + $0x1f0] sm:$0xff]
        %v2725 = vld [vmem:[#allocation4 + $0x1f8] sm:$0xff]
        %v2726 = vld [vmem:[#allocation4 + $0x200] sm:$0xff]
        %v2727 = vld [vmem:[#allocation4 + $0x208] sm:$0xff]
        %v2728 = vld [vmem:[#allocation4 + $0x210] sm:$0xff]
        %v2729 = vld [vmem:[#allocation4 + $0x218] sm:$0xff]
        %v2730 = vld [vmem:[#allocation4 + $0x220] sm:$0xff]
        %v2731 = vld [vmem:[#allocation4 + $0x228] sm:$0xff]
        %v2732 = vld [vmem:[#allocation4 + $0x230] sm:$0xff]
        %v2733 = vld [vmem:[#allocation4 + $0x238] sm:$0xff]
        %v2734 = vld [vmem:[#allocation4 + $0x240] sm:$0xff]
        %v2735 = vld [vmem:[#allocation4 + $0x248] sm:$0xff]
        %v2736 = vld [vmem:[#allocation4 + $0x250] sm:$0xff]
        %v2737 = vld [vmem:[#allocation4 + $0x258] sm:$0xff]
        %v2738 = vld [vmem:[#allocation4 + $0x260] sm:$0xff]
        %v2739 = vld [vmem:[#allocation4 + $0x268] sm:$0xff]
        %v2740 = vld [vmem:[#allocation4 + $0x270] sm:$0xff]
        %v2741 = vld [vmem:[#allocation4 + $0x278] sm:$0xff]
        %s2742 = smul.u32 %s26, 80
        %s2743 = smul.addr %s2742, 4
        %s2744 = scalar_lea.vmem %s1, %s2743
        %v2745 = vld [vmem:[%s2744] sm:$0xf]
        %v2746 = vld [vmem:[%s2744 + $0x4] sm:$0xf]
        %v2747 = vld [vmem:[%s2744 + $0x8] sm:$0xf]
        %v2748 = vld [vmem:[%s2744 + $0xc] sm:$0xf]
        %v2749 = vld [vmem:[%s2744 + $0x10] sm:$0xf]
        %v2750 = vld [vmem:[%s2744 + $0x14] sm:$0xf]
        %v2751 = vld [vmem:[%s2744 + $0x18] sm:$0xf]
        %v2752 = vld [vmem:[%s2744 + $0x1c] sm:$0xf]
        %v2753 = vld [vmem:[%s2744 + $0x20] sm:$0xf]
        %v2754 = vld [vmem:[%s2744 + $0x24] sm:$0xf]
        %v2755 = vld [vmem:[%s2744 + $0x28] sm:$0xf]
        %v2756 = vld [vmem:[%s2744 + $0x2c] sm:$0xf]
        %v2757 = vld [vmem:[%s2744 + $0x30] sm:$0xf]
        %v2758 = vld [vmem:[%s2744 + $0x34] sm:$0xf]
        %v2759 = vld [vmem:[%s2744 + $0x38] sm:$0xf]
        %v2760 = vld [vmem:[%s2744 + $0x3c] sm:$0xf]
        %v2761 = vld [vmem:[%s2744 + $0x40] sm:$0xf]
        %v2762 = vld [vmem:[%s2744 + $0x44] sm:$0xf]
        %v2763 = vld [vmem:[%s2744 + $0x48] sm:$0xf]
        %v2764 = vld [vmem:[%s2744 + $0x4c] sm:$0xf]
        %v2765 = vld [vmem:[%s2744 + $0x50] sm:$0xf]
        %v2766 = vld [vmem:[%s2744 + $0x54] sm:$0xf]
        %v2767 = vld [vmem:[%s2744 + $0x58] sm:$0xf]
        %v2768 = vld [vmem:[%s2744 + $0x5c] sm:$0xf]
        %v2769 = vld [vmem:[%s2744 + $0x60] sm:$0xf]
        %v2770 = vld [vmem:[%s2744 + $0x64] sm:$0xf]
        %v2771 = vld [vmem:[%s2744 + $0x68] sm:$0xf]
        %v2772 = vld [vmem:[%s2744 + $0x6c] sm:$0xf]
        %v2773 = vld [vmem:[%s2744 + $0x70] sm:$0xf]
        %v2774 = vld [vmem:[%s2744 + $0x74] sm:$0xf]
        %v2775 = vld [vmem:[%s2744 + $0x78] sm:$0xf]
        %v2776 = vld [vmem:[%s2744 + $0x7c] sm:$0xf]
        %v2777 = vld [vmem:[%s2744 + $0x80] sm:$0xf]
        %v2778 = vld [vmem:[%s2744 + $0x84] sm:$0xf]
        %v2779 = vld [vmem:[%s2744 + $0x88] sm:$0xf]
        %v2780 = vld [vmem:[%s2744 + $0x8c] sm:$0xf]
        %v2781 = vld [vmem:[%s2744 + $0x90] sm:$0xf]
        %v2782 = vld [vmem:[%s2744 + $0x94] sm:$0xf]
        %v2783 = vld [vmem:[%s2744 + $0x98] sm:$0xf]
        %v2784 = vld [vmem:[%s2744 + $0x9c] sm:$0xf]
        %v2785 = vld [vmem:[%s2744 + $0xa0] sm:$0xf]
        %v2786 = vld [vmem:[%s2744 + $0xa4] sm:$0xf]
        %v2787 = vld [vmem:[%s2744 + $0xa8] sm:$0xf]
        %v2788 = vld [vmem:[%s2744 + $0xac] sm:$0xf]
        %v2789 = vld [vmem:[%s2744 + $0xb0] sm:$0xf]
        %v2790 = vld [vmem:[%s2744 + $0xb4] sm:$0xf]
        %v2791 = vld [vmem:[%s2744 + $0xb8] sm:$0xf]
        %v2792 = vld [vmem:[%s2744 + $0xbc] sm:$0xf]
        %v2793 = vld [vmem:[%s2744 + $0xc0] sm:$0xf]
        %v2794 = vld [vmem:[%s2744 + $0xc4] sm:$0xf]
        %v2795 = vld [vmem:[%s2744 + $0xc8] sm:$0xf]
        %v2796 = vld [vmem:[%s2744 + $0xcc] sm:$0xf]
        %v2797 = vld [vmem:[%s2744 + $0xd0] sm:$0xf]
        %v2798 = vld [vmem:[%s2744 + $0xd4] sm:$0xf]
        %v2799 = vld [vmem:[%s2744 + $0xd8] sm:$0xf]
        %v2800 = vld [vmem:[%s2744 + $0xdc] sm:$0xf]
        %v2801 = vld [vmem:[%s2744 + $0xe0] sm:$0xf]
        %v2802 = vld [vmem:[%s2744 + $0xe4] sm:$0xf]
        %v2803 = vld [vmem:[%s2744 + $0xe8] sm:$0xf]
        %v2804 = vld [vmem:[%s2744 + $0xec] sm:$0xf]
        %v2805 = vld [vmem:[%s2744 + $0xf0] sm:$0xf]
        %v2806 = vld [vmem:[%s2744 + $0xf4] sm:$0xf]
        %v2807 = vld [vmem:[%s2744 + $0xf8] sm:$0xf]
        %v2808 = vld [vmem:[%s2744 + $0xfc] sm:$0xf]
        %v2809 = vld [vmem:[%s2744 + $0x100] sm:$0xf]
        %v2810 = vld [vmem:[%s2744 + $0x104] sm:$0xf]
        %v2811 = vld [vmem:[%s2744 + $0x108] sm:$0xf]
        %v2812 = vld [vmem:[%s2744 + $0x10c] sm:$0xf]
        %v2813 = vld [vmem:[%s2744 + $0x110] sm:$0xf]
        %v2814 = vld [vmem:[%s2744 + $0x114] sm:$0xf]
        %v2815 = vld [vmem:[%s2744 + $0x118] sm:$0xf]
        %v2816 = vld [vmem:[%s2744 + $0x11c] sm:$0xf]
        %v2817 = vld [vmem:[%s2744 + $0x120] sm:$0xf]
        %v2818 = vld [vmem:[%s2744 + $0x124] sm:$0xf]
        %v2819 = vld [vmem:[%s2744 + $0x128] sm:$0xf]
        %v2820 = vld [vmem:[%s2744 + $0x12c] sm:$0xf]
        %v2821 = vld [vmem:[%s2744 + $0x130] sm:$0xf]
        %v2822 = vld [vmem:[%s2744 + $0x134] sm:$0xf]
        %v2823 = vld [vmem:[%s2744 + $0x138] sm:$0xf]
        %v2824 = vld [vmem:[%s2744 + $0x13c] sm:$0xf]
        %s2825 = scalar_lea.vmem %s2, %s26
        %v2826 = vld [vmem:[%s2825] sm:$0x1]
        %v2828 = vlaneseq
        %v2829 = vshrl.u32 %v2828, 7
        %v2830 = vsub.s32 0, %v2829
        %v2831 = vrot.slane %v2826, %v2830
        %v2913 = vunpack.c.l.b16 %v2745
        %v2914 = vunpack.c.l.b16 %v2746
        %v2915 = vunpack.c.l.b16 %v2747
        %v2916 = vunpack.c.l.b16 %v2748
        %v2917 = vunpack.c.l.b16 %v2749
        %v2918 = vunpack.c.l.b16 %v2750
        %v2919 = vunpack.c.l.b16 %v2751
        %v2920 = vunpack.c.l.b16 %v2752
        %v2921 = vunpack.c.l.b16 %v2753
        %v2922 = vunpack.c.l.b16 %v2754
        %v2923 = vunpack.c.l.b16 %v2755
        %v2924 = vunpack.c.l.b16 %v2756
        %v2925 = vunpack.c.l.b16 %v2757
        %v2926 = vunpack.c.l.b16 %v2758
        %v2927 = vunpack.c.l.b16 %v2759
        %v2928 = vunpack.c.l.b16 %v2760
        %v2929 = vunpack.c.l.b16 %v2761
        %v2930 = vunpack.c.l.b16 %v2762
        %v2931 = vunpack.c.l.b16 %v2763
        %v2932 = vunpack.c.l.b16 %v2764
        %v2933 = vunpack.c.l.b16 %v2765
        %v2934 = vunpack.c.l.b16 %v2766
        %v2935 = vunpack.c.l.b16 %v2767
        %v2936 = vunpack.c.l.b16 %v2768
        %v2937 = vunpack.c.l.b16 %v2769
        %v2938 = vunpack.c.l.b16 %v2770
        %v2939 = vunpack.c.l.b16 %v2771
        %v2940 = vunpack.c.l.b16 %v2772
        %v2941 = vunpack.c.l.b16 %v2773
        %v2942 = vunpack.c.l.b16 %v2774
        %v2943 = vunpack.c.l.b16 %v2775
        %v2944 = vunpack.c.l.b16 %v2776
        %v2945 = vunpack.c.l.b16 %v2777
        %v2946 = vunpack.c.l.b16 %v2778
        %v2947 = vunpack.c.l.b16 %v2779
        %v2948 = vunpack.c.l.b16 %v2780
        %v2949 = vunpack.c.l.b16 %v2781
        %v2950 = vunpack.c.l.b16 %v2782
        %v2951 = vunpack.c.l.b16 %v2783
        %v2952 = vunpack.c.l.b16 %v2784
        %v2953 = vunpack.c.l.b16 %v2785
        %v2954 = vunpack.c.l.b16 %v2786
        %v2955 = vunpack.c.l.b16 %v2787
        %v2956 = vunpack.c.l.b16 %v2788
        %v2957 = vunpack.c.l.b16 %v2789
        %v2958 = vunpack.c.l.b16 %v2790
        %v2959 = vunpack.c.l.b16 %v2791
        %v2960 = vunpack.c.l.b16 %v2792
        %v2961 = vunpack.c.l.b16 %v2793
        %v2962 = vunpack.c.l.b16 %v2794
        %v2963 = vunpack.c.l.b16 %v2795
        %v2964 = vunpack.c.l.b16 %v2796
        %v2965 = vunpack.c.l.b16 %v2797
        %v2966 = vunpack.c.l.b16 %v2798
        %v2967 = vunpack.c.l.b16 %v2799
        %v2968 = vunpack.c.l.b16 %v2800
        %v2969 = vunpack.c.l.b16 %v2801
        %v2970 = vunpack.c.l.b16 %v2802
        %v2971 = vunpack.c.l.b16 %v2803
        %v2972 = vunpack.c.l.b16 %v2804
        %v2973 = vunpack.c.l.b16 %v2805
        %v2974 = vunpack.c.l.b16 %v2806
        %v2975 = vunpack.c.l.b16 %v2807
        %v2976 = vunpack.c.l.b16 %v2808
        %v2977 = vunpack.c.l.b16 %v2809
        %v2978 = vunpack.c.l.b16 %v2810
        %v2979 = vunpack.c.l.b16 %v2811
        %v2980 = vunpack.c.l.b16 %v2812
        %v2981 = vunpack.c.l.b16 %v2813
        %v2982 = vunpack.c.l.b16 %v2814
        %v2983 = vunpack.c.l.b16 %v2815
        %v2984 = vunpack.c.l.b16 %v2816
        %v2985 = vunpack.c.l.b16 %v2817
        %v2986 = vunpack.c.l.b16 %v2818
        %v2987 = vunpack.c.l.b16 %v2819
        %v2988 = vunpack.c.l.b16 %v2820
        %v2989 = vunpack.c.l.b16 %v2821
        %v2990 = vunpack.c.l.b16 %v2822
        %v2991 = vunpack.c.l.b16 %v2823
        %v2992 = vunpack.c.l.b16 %v2824
        %v2993 = vpack.c.b16 %v2914, %v2913
        %v2994 = vpack.c.b16 %v2916, %v2915
        %v2995 = vpack.c.b16 %v2918, %v2917
        %v2996 = vpack.c.b16 %v2920, %v2919
        %v2997 = vpack.c.b16 %v2922, %v2921
        %v2998 = vpack.c.b16 %v2924, %v2923
        %v2999 = vpack.c.b16 %v2926, %v2925
        %v3000 = vpack.c.b16 %v2928, %v2927
        %v3001 = vpack.c.b16 %v2930, %v2929
        %v3002 = vpack.c.b16 %v2932, %v2931
        %v3003 = vpack.c.b16 %v2934, %v2933
        %v3004 = vpack.c.b16 %v2936, %v2935
        %v3005 = vpack.c.b16 %v2938, %v2937
        %v3006 = vpack.c.b16 %v2940, %v2939
        %v3007 = vpack.c.b16 %v2942, %v2941
        %v3008 = vpack.c.b16 %v2944, %v2943
        %v3009 = vpack.c.b16 %v2946, %v2945
        %v3010 = vpack.c.b16 %v2948, %v2947
        %v3011 = vpack.c.b16 %v2950, %v2949
        %v3012 = vpack.c.b16 %v2952, %v2951
        %v3013 = vpack.c.b16 %v2954, %v2953
        %v3014 = vpack.c.b16 %v2956, %v2955
        %v3015 = vpack.c.b16 %v2958, %v2957
        %v3016 = vpack.c.b16 %v2960, %v2959
        %v3017 = vpack.c.b16 %v2962, %v2961
        %v3018 = vpack.c.b16 %v2964, %v2963
        %v3019 = vpack.c.b16 %v2966, %v2965
        %v3020 = vpack.c.b16 %v2968, %v2967
        %v3021 = vpack.c.b16 %v2970, %v2969
        %v3022 = vpack.c.b16 %v2972, %v2971
        %v3023 = vpack.c.b16 %v2974, %v2973
        %v3024 = vpack.c.b16 %v2976, %v2975
        %v3025 = vpack.c.b16 %v2978, %v2977
        %v3026 = vpack.c.b16 %v2980, %v2979
        %v3027 = vpack.c.b16 %v2982, %v2981
        %v3028 = vpack.c.b16 %v2984, %v2983
        %v3029 = vpack.c.b16 %v2986, %v2985
        %v3030 = vpack.c.b16 %v2988, %v2987
        %v3031 = vpack.c.b16 %v2990, %v2989
        %v3032 = vpack.c.b16 %v2992, %v2991
        %3073 = vmatprep.subr.bf16.mxu0 0
        %3074 = vmatpush1.bf16.msra.mxu0 %v2993
        %3075 = vmatprep.subr.bf16.mxu0 0
        %3076 = vmatpush1.bf16.msra.mxu0 %v2994
        %3077 = vmatprep.subr.bf16.mxu0 0
        %3078 = vmatpush1.bf16.msra.mxu0 %v2995
        %3079 = vmatprep.subr.bf16.mxu0 0
        %3080 = vmatpush1.bf16.msra.mxu0 %v2996
        %3081 = vmatprep.subr.bf16.mxu0 0
        %3082 = vmatpush1.bf16.msra.mxu0 %v2997
        %3083 = vmatprep.subr.bf16.mxu0 0
        %3084 = vmatpush1.bf16.msra.mxu0 %v2998
        %3085 = vmatprep.subr.bf16.mxu0 0
        %3086 = vmatpush1.bf16.msra.mxu0 %v2999
        %3087 = vmatprep.subr.bf16.mxu0 0
        %3088 = vmatpush1.bf16.msra.mxu0 %v3000
        %3089 = vmatprep.subr.bf16.mxu0 0
        %3090 = vmatpush1.bf16.msra.mxu0 %v3001
        %3091 = vmatprep.subr.bf16.mxu0 0
        %3092 = vmatpush1.bf16.msra.mxu0 %v3002
        %3093 = vmatprep.subr.bf16.mxu0 0
        %3094 = vmatpush1.bf16.msra.mxu0 %v3003
        %3095 = vmatprep.subr.bf16.mxu0 0
        %3096 = vmatpush1.bf16.msra.mxu0 %v3004
        %3097 = vmatprep.subr.bf16.mxu0 0
        %3098 = vmatpush1.bf16.msra.mxu0 %v3005
        %3099 = vmatprep.subr.bf16.mxu0 0
        %3100 = vmatpush1.bf16.msra.mxu0 %v3006
        %3101 = vmatprep.subr.bf16.mxu0 0
        %3102 = vmatpush1.bf16.msra.mxu0 %v3007
        %3103 = vmatprep.subr.bf16.mxu0 0
        %3104 = vmatpush1.bf16.msra.mxu0 %v3008
        %3105 = vmatprep.mubr.bf16.mxu0 %v2663
        %3106 = vmatmul.mubr.bf16.gmra.mrb[0].mxu0 %v2662
        %v3107 = vpop.f32.mrb[0].mxu0
        %v3108 = vadd.f32 %v2831, %v3107
        %v3109 = vpop.f32.mrb[0].mxu0
        %v3110 = vpop.f32.mrb[0].mxu0
        %v3111 = vadd.f32 %v2831, %v3110
        %v3112 = vpop.f32.mrb[0].mxu0
        %3113 = vmatprep.mubr.bf16.mxu0 %v2668
        %3114 = vmatmul.mubr.bf16.gmra.mrb[0].mxu0 %v2667
        %v3115 = vpop.f32.mrb[0].mxu0
        %v3116 = vadd.f32 %v2831, %v3115
        %v3117 = vpop.f32.mrb[0].mxu0
        %v3118 = vpop.f32.mrb[0].mxu0
        %v3119 = vadd.f32 %v2831, %v3118
        %v3120 = vpop.f32.mrb[0].mxu0
        %3121 = vmatprep.mubr.bf16.mxu0 %v2673
        %3122 = vmatmul.mubr.bf16.gmra.mrb[0].mxu0 %v2672
        %v3123 = vpop.f32.mrb[0].mxu0
        %v3124 = vadd.f32 %v2831, %v3123
        %v3125 = vpop.f32.mrb[0].mxu0
        %v3126 = vpop.f32.mrb[0].mxu0
        %v3127 = vadd.f32 %v2831, %v3126
        %v3128 = vpop.f32.mrb[0].mxu0
        %3129 = vmatprep.mubr.bf16.mxu0 %v2678
        %3130 = vmatmul.mubr.bf16.gmra.mrb[0].mxu0 %v2677
        %v3131 = vpop.f32.mrb[0].mxu0
        %v3132 = vadd.f32 %v2831, %v3131
        %v3133 = vpop.f32.mrb[0].mxu0
        %v3134 = vpop.f32.mrb[0].mxu0
        %v3135 = vadd.f32 %v2831, %v3134
        %v3136 = vpop.f32.mrb[0].mxu0
        %3137 = vmatprep.mubr.bf16.mxu0 %v2683
        %3138 = vmatmul.mubr.bf16.gmra.mrb[0].mxu0 %v2682
        %v3139 = vpop.f32.mrb[0].mxu0
        %v3140 = vadd.f32 %v2831, %v3139
        %v3141 = vpop.f32.mrb[0].mxu0
        %v3142 = vpop.f32.mrb[0].mxu0
        %v3143 = vadd.f32 %v2831, %v3142
        %v3144 = vpop.f32.mrb[0].mxu0
        %3145 = vmatprep.mubr.bf16.mxu0 %v2688
        %3146 = vmatmul.mubr.bf16.gmra.mrb[0].mxu0 %v2687
        %v3147 = vpop.f32.mrb[0].mxu0
        %v3148 = vadd.f32 %v2831, %v3147
        %v3149 = vpop.f32.mrb[0].mxu0
        %v3150 = vpop.f32.mrb[0].mxu0
        %v3151 = vadd.f32 %v2831, %v3150
        %v3152 = vpop.f32.mrb[0].mxu0
        %3153 = vmatprep.mubr.bf16.mxu0 %v2693
        %3154 = vmatmul.mubr.bf16.gmra.mrb[0].mxu0 %v2692
        %v3155 = vpop.f32.mrb[0].mxu0
        %v3156 = vadd.f32 %v2831, %v3155
        %v3157 = vpop.f32.mrb[0].mxu0
        %v3158 = vpop.f32.mrb[0].mxu0
        %v3159 = vadd.f32 %v2831, %v3158
        %v3160 = vpop.f32.mrb[0].mxu0
        %3161 = vmatprep.mubr.bf16.mxu0 %v2698
        %3162 = vmatmul.mubr.bf16.gmra.mrb[0].mxu0 %v2697
        %v3163 = vpop.f32.mrb[0].mxu0
        %v3164 = vadd.f32 %v2831, %v3163
        %v3165 = vpop.f32.mrb[0].mxu0
        %v3166 = vpop.f32.mrb[0].mxu0
        %v3167 = vadd.f32 %v2831, %v3166
        %v3168 = vpop.f32.mrb[0].mxu0
        %3169 = vmatprep.mubr.bf16.mxu0 %v2703
        %3170 = vmatmul.mubr.bf16.gmra.mrb[0].mxu0 %v2702
        %v3171 = vpop.f32.mrb[0].mxu0
        %v3172 = vadd.f32 %v2831, %v3171
        %v3173 = vpop.f32.mrb[0].mxu0
        %v3174 = vpop.f32.mrb[0].mxu0
        %v3175 = vadd.f32 %v2831, %v3174
        %v3176 = vpop.f32.mrb[0].mxu0
        %3177 = vmatprep.mubr.bf16.mxu0 %v2708
        %3178 = vmatmul.mubr.bf16.gmra.mrb[0].mxu0 %v2707
        %v3179 = vpop.f32.mrb[0].mxu0
        %v3180 = vadd.f32 %v2831, %v3179
        %v3181 = vpop.f32.mrb[0].mxu0
        %v3182 = vpop.f32.mrb[0].mxu0
        %v3183 = vadd.f32 %v2831, %v3182
        %v3184 = vpop.f32.mrb[0].mxu0
        %3185 = vmatprep.mubr.bf16.mxu0 %v2713
        %3186 = vmatmul.mubr.bf16.gmra.mrb[0].mxu0 %v2712
        %v3187 = vpop.f32.mrb[0].mxu0
        %v3188 = vadd.f32 %v2831, %v3187
        %v3189 = vpop.f32.mrb[0].mxu0
        %v3190 = vpop.f32.mrb[0].mxu0
        %v3191 = vadd.f32 %v2831, %v3190
        %v3192 = vpop.f32.mrb[0].mxu0
        %3193 = vmatprep.mubr.bf16.mxu0 %v2718
        %3194 = vmatmul.mubr.bf16.gmra.mrb[0].mxu0 %v2717
        %v3195 = vpop.f32.mrb[0].mxu0
        %v3196 = vadd.f32 %v2831, %v3195
        %v3197 = vpop.f32.mrb[0].mxu0
        %v3198 = vpop.f32.mrb[0].mxu0
        %v3199 = vadd.f32 %v2831, %v3198
        %v3200 = vpop.f32.mrb[0].mxu0
        %3201 = vmatprep.mubr.bf16.mxu0 %v2723
        %3202 = vmatmul.mubr.bf16.gmra.mrb[0].mxu0 %v2722
        %v3203 = vpop.f32.mrb[0].mxu0
        %v3204 = vadd.f32 %v2831, %v3203
        %v3205 = vpop.f32.mrb[0].mxu0
        %v3206 = vpop.f32.mrb[0].mxu0
        %v3207 = vadd.f32 %v2831, %v3206
        %v3208 = vpop.f32.mrb[0].mxu0
        %3209 = vmatprep.mubr.bf16.mxu0 %v2728
        %3210 = vmatmul.mubr.bf16.gmra.mrb[0].mxu0 %v2727
        %v3211 = vpop.f32.mrb[0].mxu0
        %v3212 = vadd.f32 %v2831, %v3211
        %v3213 = vpop.f32.mrb[0].mxu0
        %v3214 = vpop.f32.mrb[0].mxu0
        %v3215 = vadd.f32 %v2831, %v3214
        %v3216 = vpop.f32.mrb[0].mxu0
        %3217 = vmatprep.mubr.bf16.mxu0 %v2733
        %3218 = vmatmul.mubr.bf16.gmra.mrb[0].mxu0 %v2732
        %v3219 = vpop.f32.mrb[0].mxu0
        %v3220 = vadd.f32 %v2831, %v3219
        %v3221 = vpop.f32.mrb[0].mxu0
        %v3222 = vpop.f32.mrb[0].mxu0
        %v3223 = vadd.f32 %v2831, %v3222
        %v3224 = vpop.f32.mrb[0].mxu0
        %3225 = vmatprep.mubr.bf16.mxu0 %v2738
        %3226 = vmatmul.mubr.bf16.gmra.mrb[0].mxu0 %v2737
        %v3227 = vpop.f32.mrb[0].mxu0
        %v3228 = vadd.f32 %v2831, %v3227
        %v3229 = vpop.f32.mrb[0].mxu0
        %v3230 = vpop.f32.mrb[0].mxu0
        %v3231 = vadd.f32 %v2831, %v3230
        %v3232 = vpop.f32.mrb[0].mxu0
        %3233 = vdwg.mxu0
        %3234 = vmatprep.subr.bf16.mxu0 0
        %3235 = vmatpush1.bf16.msra.mxu0 %v3009
        %3236 = vmatprep.subr.bf16.mxu0 0
        %3237 = vmatpush1.bf16.msra.mxu0 %v3010
        %3238 = vmatprep.subr.bf16.mxu0 0
        %3239 = vmatpush1.bf16.msra.mxu0 %v3011
        %3240 = vmatprep.subr.bf16.mxu0 0
        %3241 = vmatpush1.bf16.msra.mxu0 %v3012
        %3242 = vmatprep.subr.bf16.mxu0 0
        %3243 = vmatpush1.bf16.msra.mxu0 %v3013
        %3244 = vmatprep.subr.bf16.mxu0 0
        %3245 = vmatpush1.bf16.msra.mxu0 %v3014
        %3246 = vmatprep.subr.bf16.mxu0 0
        %3247 = vmatpush1.bf16.msra.mxu0 %v3015
        %3248 = vmatprep.subr.bf16.mxu0 0
        %3249 = vmatpush1.bf16.msra.mxu0 %v3016
        %3250 = vmatprep.subr.bf16.mxu0 0
        %3251 = vmatpush1.bf16.msra.mxu0 %v3017
        %3252 = vmatprep.subr.bf16.mxu0 0
        %3253 = vmatpush1.bf16.msra.mxu0 %v3018
        %3254 = vmatprep.subr.bf16.mxu0 0
        %3255 = vmatpush1.bf16.msra.mxu0 %v3019
        %3256 = vmatprep.subr.bf16.mxu0 0
        %3257 = vmatpush1.bf16.msra.mxu0 %v3020
        %3258 = vmatprep.subr.bf16.mxu0 0
        %3259 = vmatpush1.bf16.msra.mxu0 %v3021
        %3260 = vmatprep.subr.bf16.mxu0 0
        %3261 = vmatpush1.bf16.msra.mxu0 %v3022
        %3262 = vmatprep.subr.bf16.mxu0 0
        %3263 = vmatpush1.bf16.msra.mxu0 %v3023
        %3264 = vmatprep.subr.bf16.mxu0 0
        %3265 = vmatpush1.bf16.msra.mxu0 %v3024
        %3266 = vmatprep.mubr.bf16.mxu0 %v2665
        %3267 = vmatmul.mubr.bf16.gmra.mrb[0].mxu0 %v2664
        %v3268 = vpop.f32.mrb[0].mxu0
        %v3269 = vadd.f32 %v3108, %v3268
        %v3270 = vpop.f32.mrb[0].mxu0
        %v3271 = vpop.f32.mrb[0].mxu0
        %v3272 = vadd.f32 %v3111, %v3271
        %v3273 = vpop.f32.mrb[0].mxu0
        %3274 = vmatprep.mubr.bf16.mxu0 %v2670
        %3275 = vmatmul.mubr.bf16.gmra.mrb[0].mxu0 %v2669
        %v3276 = vpop.f32.mrb[0].mxu0
        %v3277 = vadd.f32 %v3116, %v3276
        %v3278 = vpop.f32.mrb[0].mxu0
        %v3279 = vpop.f32.mrb[0].mxu0
        %v3280 = vadd.f32 %v3119, %v3279
        %v3281 = vpop.f32.mrb[0].mxu0
        %3282 = vmatprep.mubr.bf16.mxu0 %v2675
        %3283 = vmatmul.mubr.bf16.gmra.mrb[0].mxu0 %v2674
        %v3284 = vpop.f32.mrb[0].mxu0
        %v3285 = vadd.f32 %v3124, %v3284
        %v3286 = vpop.f32.mrb[0].mxu0
        %v3287 = vpop.f32.mrb[0].mxu0
        %v3288 = vadd.f32 %v3127, %v3287
        %v3289 = vpop.f32.mrb[0].mxu0
        %3290 = vmatprep.mubr.bf16.mxu0 %v2680
        %3291 = vmatmul.mubr.bf16.gmra.mrb[0].mxu0 %v2679
        %v3292 = vpop.f32.mrb[0].mxu0
        %v3293 = vadd.f32 %v3132, %v3292
        %v3294 = vpop.f32.mrb[0].mxu0
        %v3295 = vpop.f32.mrb[0].mxu0
        %v3296 = vadd.f32 %v3135, %v3295
        %v3297 = vpop.f32.mrb[0].mxu0
        %3298 = vmatprep.mubr.bf16.mxu0 %v2685
        %3299 = vmatmul.mubr.bf16.gmra.mrb[0].mxu0 %v2684
        %v3300 = vpop.f32.mrb[0].mxu0
        %v3301 = vadd.f32 %v3140, %v3300
        %v3302 = vpop.f32.mrb[0].mxu0
        %v3303 = vpop.f32.mrb[0].mxu0
        %v3304 = vadd.f32 %v3143, %v3303
        %v3305 = vpop.f32.mrb[0].mxu0
        %3306 = vmatprep.mubr.bf16.mxu0 %v2690
        %3307 = vmatmul.mubr.bf16.gmra.mrb[0].mxu0 %v2689
        %v3308 = vpop.f32.mrb[0].mxu0
        %v3309 = vadd.f32 %v3148, %v3308
        %v3310 = vpop.f32.mrb[0].mxu0
        %v3311 = vpop.f32.mrb[0].mxu0
        %v3312 = vadd.f32 %v3151, %v3311
        %v3313 = vpop.f32.mrb[0].mxu0
        %3314 = vmatprep.mubr.bf16.mxu0 %v2695
        %3315 = vmatmul.mubr.bf16.gmra.mrb[0].mxu0 %v2694
        %v3316 = vpop.f32.mrb[0].mxu0
        %v3317 = vadd.f32 %v3156, %v3316
        %v3318 = vpop.f32.mrb[0].mxu0
        %v3319 = vpop.f32.mrb[0].mxu0
        %v3320 = vadd.f32 %v3159, %v3319
        %v3321 = vpop.f32.mrb[0].mxu0
        %3322 = vmatprep.mubr.bf16.mxu0 %v2700
        %3323 = vmatmul.mubr.bf16.gmra.mrb[0].mxu0 %v2699
        %v3324 = vpop.f32.mrb[0].mxu0
        %v3325 = vadd.f32 %v3164, %v3324
        %v3326 = vpop.f32.mrb[0].mxu0
        %v3327 = vpop.f32.mrb[0].mxu0
        %v3328 = vadd.f32 %v3167, %v3327
        %v3329 = vpop.f32.mrb[0].mxu0
        %3330 = vmatprep.mubr.bf16.mxu0 %v2705
        %3331 = vmatmul.mubr.bf16.gmra.mrb[0].mxu0 %v2704
        %v3332 = vpop.f32.mrb[0].mxu0
        %v3333 = vadd.f32 %v3172, %v3332
        %v3334 = vpop.f32.mrb[0].mxu0
        %v3335 = vpop.f32.mrb[0].mxu0
        %v3336 = vadd.f32 %v3175, %v3335
        %v3337 = vpop.f32.mrb[0].mxu0
        %3338 = vmatprep.mubr.bf16.mxu0 %v2710
        %3339 = vmatmul.mubr.bf16.gmra.mrb[0].mxu0 %v2709
        %v3340 = vpop.f32.mrb[0].mxu0
        %v3341 = vadd.f32 %v3180, %v3340
        %v3342 = vpop.f32.mrb[0].mxu0
        %v3343 = vpop.f32.mrb[0].mxu0
        %v3344 = vadd.f32 %v3183, %v3343
        %v3345 = vpop.f32.mrb[0].mxu0
        %3346 = vmatprep.mubr.bf16.mxu0 %v2715
        %3347 = vmatmul.mubr.bf16.gmra.mrb[0].mxu0 %v2714
        %v3348 = vpop.f32.mrb[0].mxu0
        %v3349 = vadd.f32 %v3188, %v3348
        %v3350 = vpop.f32.mrb[0].mxu0
        %v3351 = vpop.f32.mrb[0].mxu0
        %v3352 = vadd.f32 %v3191, %v3351
        %v3353 = vpop.f32.mrb[0].mxu0
        %3354 = vmatprep.mubr.bf16.mxu0 %v2720
        %3355 = vmatmul.mubr.bf16.gmra.mrb[0].mxu0 %v2719
        %v3356 = vpop.f32.mrb[0].mxu0
        %v3357 = vadd.f32 %v3196, %v3356
        %v3358 = vpop.f32.mrb[0].mxu0
        %v3359 = vpop.f32.mrb[0].mxu0
        %v3360 = vadd.f32 %v3199, %v3359
        %v3361 = vpop.f32.mrb[0].mxu0
        %3362 = vmatprep.mubr.bf16.mxu0 %v2725
        %3363 = vmatmul.mubr.bf16.gmra.mrb[0].mxu0 %v2724
        %v3364 = vpop.f32.mrb[0].mxu0
        %v3365 = vadd.f32 %v3204, %v3364
        %v3366 = vpop.f32.mrb[0].mxu0
        %v3367 = vpop.f32.mrb[0].mxu0
        %v3368 = vadd.f32 %v3207, %v3367
        %v3369 = vpop.f32.mrb[0].mxu0
        %3370 = vmatprep.mubr.bf16.mxu0 %v2730
        %3371 = vmatmul.mubr.bf16.gmra.mrb[0].mxu0 %v2729
        %v3372 = vpop.f32.mrb[0].mxu0
        %v3373 = vadd.f32 %v3212, %v3372
        %v3374 = vpop.f32.mrb[0].mxu0
        %v3375 = vpop.f32.mrb[0].mxu0
        %v3376 = vadd.f32 %v3215, %v3375
        %v3377 = vpop.f32.mrb[0].mxu0
        %3378 = vmatprep.mubr.bf16.mxu0 %v2735
        %3379 = vmatmul.mubr.bf16.gmra.mrb[0].mxu0 %v2734
        %v3380 = vpop.f32.mrb[0].mxu0
        %v3381 = vadd.f32 %v3220, %v3380
        %v3382 = vpop.f32.mrb[0].mxu0
        %v3383 = vpop.f32.mrb[0].mxu0
        %v3384 = vadd.f32 %v3223, %v3383
        %v3385 = vpop.f32.mrb[0].mxu0
        %3386 = vmatprep.mubr.bf16.mxu0 %v2740
        %3387 = vmatmul.mubr.bf16.gmra.mrb[0].mxu0 %v2739
        %v3388 = vpop.f32.mrb[0].mxu0
        %v3389 = vadd.f32 %v3228, %v3388
        %v3390 = vpop.f32.mrb[0].mxu0
        %v3391 = vpop.f32.mrb[0].mxu0
        %v3392 = vadd.f32 %v3231, %v3391
        %v3393 = vpop.f32.mrb[0].mxu0
        %3394 = vdwg.mxu0
        %3395 = vmatprep.subr.bf16.mxu0 0
        %3396 = vmatpush1.bf16.msra.mxu0 %v3025
        %3397 = vmatprep.subr.bf16.mxu0 0
        %3398 = vmatpush1.bf16.msra.mxu0 %v3026
        %3399 = vmatprep.subr.bf16.mxu0 0
        %3400 = vmatpush1.bf16.msra.mxu0 %v3027
        %3401 = vmatprep.subr.bf16.mxu0 0
        %3402 = vmatpush1.bf16.msra.mxu0 %v3028
        %3403 = vmatprep.subr.bf16.mxu0 0
        %3404 = vmatpush1.bf16.msra.mxu0 %v3029
        %3405 = vmatprep.subr.bf16.mxu0 0
        %3406 = vmatpush1.bf16.msra.mxu0 %v3030
        %3407 = vmatprep.subr.bf16.mxu0 0
        %3408 = vmatpush1.bf16.msra.mxu0 %v3031
        %3409 = vmatprep.subr.bf16.mxu0 0
        %3410 = vmatpush1.bf16.msra.mxu0 %v3032
        %3411 = vmatprep.subr.bf16.mxu0 0
        %3412 = vmatpush1.bf16.msra.mxu0 0
        %3413 = vmatprep.subr.bf16.mxu0 0
        %3414 = vmatpush1.bf16.msra.mxu0 0
        %3415 = vmatprep.subr.bf16.mxu0 0
        %3416 = vmatpush1.bf16.msra.mxu0 0
        %3417 = vmatprep.subr.bf16.mxu0 0
        %3418 = vmatpush1.bf16.msra.mxu0 0
        %3419 = vmatprep.subr.bf16.mxu0 0
        %3420 = vmatpush1.bf16.msra.mxu0 0
        %3421 = vmatprep.subr.bf16.mxu0 0
        %3422 = vmatpush1.bf16.msra.mxu0 0
        %3423 = vmatprep.subr.bf16.mxu0 0
        %3424 = vmatpush1.bf16.msra.mxu0 0
        %3425 = vmatprep.subr.bf16.mxu0 0
        %3426 = vmatpush1.bf16.msra.mxu0 0
        %3427 = vmatprep.mubr.bf16.mxu0 0
        %3428 = vmatmul.mubr.bf16.gmra.mrb[0].mxu0 %v2666
        %v3429 = vpop.f32.mrb[0].mxu0
        %v3430 = vadd.f32 %v3269, %v3429
        %v3431 = vpop.f32.mrb[0].mxu0
        %v3432 = vpop.f32.mrb[0].mxu0
        %v3433 = vadd.f32 %v3272, %v3432
        %v3434 = vpop.f32.mrb[0].mxu0
        %3435 = vmatprep.mubr.bf16.mxu0 0
        %3436 = vmatmul.mubr.bf16.gmra.mrb[0].mxu0 %v2671
        %v3437 = vpop.f32.mrb[0].mxu0
        %v3438 = vadd.f32 %v3277, %v3437
        %v3439 = vpop.f32.mrb[0].mxu0
        %v3440 = vpop.f32.mrb[0].mxu0
        %v3441 = vadd.f32 %v3280, %v3440
        %v3442 = vpop.f32.mrb[0].mxu0
        %3443 = vmatprep.mubr.bf16.mxu0 0
        %3444 = vmatmul.mubr.bf16.gmra.mrb[0].mxu0 %v2676
        %v3445 = vpop.f32.mrb[0].mxu0
        %v3446 = vadd.f32 %v3285, %v3445
        %v3447 = vpop.f32.mrb[0].mxu0
        %v3448 = vpop.f32.mrb[0].mxu0
        %v3449 = vadd.f32 %v3288, %v3448
        %v3450 = vpop.f32.mrb[0].mxu0
        %3451 = vmatprep.mubr.bf16.mxu0 0
        %3452 = vmatmul.mubr.bf16.gmra.mrb[0].mxu0 %v2681
        %v3453 = vpop.f32.mrb[0].mxu0
        %v3454 = vadd.f32 %v3293, %v3453
        %v3455 = vpop.f32.mrb[0].mxu0
        %v3456 = vpop.f32.mrb[0].mxu0
        %v3457 = vadd.f32 %v3296, %v3456
        %v3458 = vpop.f32.mrb[0].mxu0
        %3459 = vmatprep.mubr.bf16.mxu0 0
        %3460 = vmatmul.mubr.bf16.gmra.mrb[0].mxu0 %v2686
        %v3461 = vpop.f32.mrb[0].mxu0
        %v3462 = vadd.f32 %v3301, %v3461
        %v3463 = vpop.f32.mrb[0].mxu0
        %v3464 = vpop.f32.mrb[0].mxu0
        %v3465 = vadd.f32 %v3304, %v3464
        %v3466 = vpop.f32.mrb[0].mxu0
        %3467 = vmatprep.mubr.bf16.mxu0 0
        %3468 = vmatmul.mubr.bf16.gmra.mrb[0].mxu0 %v2691
        %v3469 = vpop.f32.mrb[0].mxu0
        %v3470 = vadd.f32 %v3309, %v3469
        %v3471 = vpop.f32.mrb[0].mxu0
        %v3472 = vpop.f32.mrb[0].mxu0
        %v3473 = vadd.f32 %v3312, %v3472
        %v3474 = vpop.f32.mrb[0].mxu0
        %3475 = vmatprep.mubr.bf16.mxu0 0
        %3476 = vmatmul.mubr.bf16.gmra.mrb[0].mxu0 %v2696
        %v3477 = vpop.f32.mrb[0].mxu0
        %v3478 = vadd.f32 %v3317, %v3477
        %v3479 = vpop.f32.mrb[0].mxu0
        %v3480 = vpop.f32.mrb[0].mxu0
        %v3481 = vadd.f32 %v3320, %v3480
        %v3482 = vpop.f32.mrb[0].mxu0
        %3483 = vmatprep.mubr.bf16.mxu0 0
        %3484 = vmatmul.mubr.bf16.gmra.mrb[0].mxu0 %v2701
        %v3485 = vpop.f32.mrb[0].mxu0
        %v3486 = vadd.f32 %v3325, %v3485
        %v3487 = vpop.f32.mrb[0].mxu0
        %v3488 = vpop.f32.mrb[0].mxu0
        %v3489 = vadd.f32 %v3328, %v3488
        %v3490 = vpop.f32.mrb[0].mxu0
        %3491 = vmatprep.mubr.bf16.mxu0 0
        %3492 = vmatmul.mubr.bf16.gmra.mrb[0].mxu0 %v2706
        %v3493 = vpop.f32.mrb[0].mxu0
        %v3494 = vadd.f32 %v3333, %v3493
        %v3495 = vpop.f32.mrb[0].mxu0
        %v3496 = vpop.f32.mrb[0].mxu0
        %v3497 = vadd.f32 %v3336, %v3496
        %v3498 = vpop.f32.mrb[0].mxu0
        %3499 = vmatprep.mubr.bf16.mxu0 0
        %3500 = vmatmul.mubr.bf16.gmra.mrb[0].mxu0 %v2711
        %v3501 = vpop.f32.mrb[0].mxu0
        %v3502 = vadd.f32 %v3341, %v3501
        %v3503 = vpop.f32.mrb[0].mxu0
        %v3504 = vpop.f32.mrb[0].mxu0
        %v3505 = vadd.f32 %v3344, %v3504
        %v3506 = vpop.f32.mrb[0].mxu0
        %3507 = vmatprep.mubr.bf16.mxu0 0
        %3508 = vmatmul.mubr.bf16.gmra.mrb[0].mxu0 %v2716
        %v3509 = vpop.f32.mrb[0].mxu0
        %v3510 = vadd.f32 %v3349, %v3509
        %v3511 = vpop.f32.mrb[0].mxu0
        %v3512 = vpop.f32.mrb[0].mxu0
        %v3513 = vadd.f32 %v3352, %v3512
        %v3514 = vpop.f32.mrb[0].mxu0
        %3515 = vmatprep.mubr.bf16.mxu0 0
        %3516 = vmatmul.mubr.bf16.gmra.mrb[0].mxu0 %v2721
        %v3517 = vpop.f32.mrb[0].mxu0
        %v3518 = vadd.f32 %v3357, %v3517
        %v3519 = vpop.f32.mrb[0].mxu0
        %v3520 = vpop.f32.mrb[0].mxu0
        %v3521 = vadd.f32 %v3360, %v3520
        %v3522 = vpop.f32.mrb[0].mxu0
        %3523 = vmatprep.mubr.bf16.mxu0 0
        %3524 = vmatmul.mubr.bf16.gmra.mrb[0].mxu0 %v2726
        %v3525 = vpop.f32.mrb[0].mxu0
        %v3526 = vadd.f32 %v3365, %v3525
        %v3527 = vpop.f32.mrb[0].mxu0
        %v3528 = vpop.f32.mrb[0].mxu0
        %v3529 = vadd.f32 %v3368, %v3528
        %v3530 = vpop.f32.mrb[0].mxu0
        %3531 = vmatprep.mubr.bf16.mxu0 0
        %3532 = vmatmul.mubr.bf16.gmra.mrb[0].mxu0 %v2731
        %v3533 = vpop.f32.mrb[0].mxu0
        %v3534 = vadd.f32 %v3373, %v3533
        %v3535 = vpop.f32.mrb[0].mxu0
        %v3536 = vpop.f32.mrb[0].mxu0
        %v3537 = vadd.f32 %v3376, %v3536
        %v3538 = vpop.f32.mrb[0].mxu0
        %3539 = vmatprep.mubr.bf16.mxu0 0
        %3540 = vmatmul.mubr.bf16.gmra.mrb[0].mxu0 %v2736
        %v3541 = vpop.f32.mrb[0].mxu0
        %v3542 = vadd.f32 %v3381, %v3541
        %v3543 = vpop.f32.mrb[0].mxu0
        %v3544 = vpop.f32.mrb[0].mxu0
        %v3545 = vadd.f32 %v3384, %v3544
        %v3546 = vpop.f32.mrb[0].mxu0
        %3547 = vmatprep.mubr.bf16.mxu0 0
        %3548 = vmatmul.mubr.bf16.gmra.mrb[0].mxu0 %v2741
        %v3549 = vpop.f32.mrb[0].mxu0
        %v3550 = vadd.f32 %v3389, %v3549
        %v3551 = vpop.f32.mrb[0].mxu0
        %v3552 = vpop.f32.mrb[0].mxu0
        %v3553 = vadd.f32 %v3392, %v3552
        %v3554 = vpop.f32.mrb[0].mxu0
        %3555 = vdwg.mxu0
        %s3556 = smul.u32 %s26, 256
        %s3557 = scalar_lea.vmem [#allocation3], %s3556
        %v3558 = vld [vmem:[%s3557] sm:$0xff]
        %v3559 = vld [vmem:[%s3557 + $0x8] sm:$0xff]
        %v3560 = vld [vmem:[%s3557 + $0x10] sm:$0xff]
        %v3561 = vld [vmem:[%s3557 + $0x18] sm:$0xff]
        %v3562 = vld [vmem:[%s3557 + $0x20] sm:$0xff]
        %v3563 = vld [vmem:[%s3557 + $0x28] sm:$0xff]
        %v3564 = vld [vmem:[%s3557 + $0x30] sm:$0xff]
        %v3565 = vld [vmem:[%s3557 + $0x38] sm:$0xff]
        %v3566 = vld [vmem:[%s3557 + $0x40] sm:$0xff]
        %v3567 = vld [vmem:[%s3557 + $0x48] sm:$0xff]
        %v3568 = vld [vmem:[%s3557 + $0x50] sm:$0xff]
        %v3569 = vld [vmem:[%s3557 + $0x58] sm:$0xff]
        %v3570 = vld [vmem:[%s3557 + $0x60] sm:$0xff]
        %v3571 = vld [vmem:[%s3557 + $0x68] sm:$0xff]
        %v3572 = vld [vmem:[%s3557 + $0x70] sm:$0xff]
        %v3573 = vld [vmem:[%s3557 + $0x78] sm:$0xff]
        %v3574 = vld [vmem:[%s3557 + $0x80] sm:$0xff]
        %v3575 = vld [vmem:[%s3557 + $0x88] sm:$0xff]
        %v3576 = vld [vmem:[%s3557 + $0x90] sm:$0xff]
        %v3577 = vld [vmem:[%s3557 + $0x98] sm:$0xff]
        %v3578 = vld [vmem:[%s3557 + $0xa0] sm:$0xff]
        %v3579 = vld [vmem:[%s3557 + $0xa8] sm:$0xff]
        %v3580 = vld [vmem:[%s3557 + $0xb0] sm:$0xff]
        %v3581 = vld [vmem:[%s3557 + $0xb8] sm:$0xff]
        %v3582 = vld [vmem:[%s3557 + $0xc0] sm:$0xff]
        %v3583 = vld [vmem:[%s3557 + $0xc8] sm:$0xff]
        %v3584 = vld [vmem:[%s3557 + $0xd0] sm:$0xff]
        %v3585 = vld [vmem:[%s3557 + $0xd8] sm:$0xff]
        %v3586 = vld [vmem:[%s3557 + $0xe0] sm:$0xff]
        %v3587 = vld [vmem:[%s3557 + $0xe8] sm:$0xff]
        %v3588 = vld [vmem:[%s3557 + $0xf0] sm:$0xff]
        %v3589 = vld [vmem:[%s3557 + $0xf8] sm:$0xff]
        %v3590 = vxor.u32 %v3430, 2147483648
        %v3591 = vxor.u32 %v3433, 2147483648
        %v3592 = vxor.u32 %v3438, 2147483648
        %v3593 = vxor.u32 %v3441, 2147483648
        %v3594 = vxor.u32 %v3446, 2147483648
        %v3595 = vxor.u32 %v3449, 2147483648
        %v3596 = vxor.u32 %v3454, 2147483648
        %v3597 = vxor.u32 %v3457, 2147483648
        %v3598 = vxor.u32 %v3462, 2147483648
        %v3599 = vxor.u32 %v3465, 2147483648
        %v3600 = vxor.u32 %v3470, 2147483648
        %v3601 = vxor.u32 %v3473, 2147483648
        %v3602 = vxor.u32 %v3478, 2147483648
        %v3603 = vxor.u32 %v3481, 2147483648
        %v3604 = vxor.u32 %v3486, 2147483648
        %v3605 = vxor.u32 %v3489, 2147483648
        %v3606 = vxor.u32 %v3494, 2147483648
        %v3607 = vxor.u32 %v3497, 2147483648
        %v3608 = vxor.u32 %v3502, 2147483648
        %v3609 = vxor.u32 %v3505, 2147483648
        %v3610 = vxor.u32 %v3510, 2147483648
        %v3611 = vxor.u32 %v3513, 2147483648
        %v3612 = vxor.u32 %v3518, 2147483648
        %v3613 = vxor.u32 %v3521, 2147483648
        %v3614 = vxor.u32 %v3526, 2147483648
        %v3615 = vxor.u32 %v3529, 2147483648
        %v3616 = vxor.u32 %v3534, 2147483648
        %v3617 = vxor.u32 %v3537, 2147483648
        %v3618 = vxor.u32 %v3542, 2147483648
        %v3619 = vxor.u32 %v3545, 2147483648
        %v3620 = vxor.u32 %v3550, 2147483648
        %v3621 = vxor.u32 %v3553, 2147483648
        %v3622 = vmul.f32 %v3590, 1.442695
        %v3623 = vpow.pop %v3622
        %v3624 = vmul.f32 %v3591, 1.442695
        %v3625 = vpow.pop %v3624
        %v3626 = vmul.f32 %v3592, 1.442695
        %v3627 = vpow.pop %v3626
        %v3628 = vmul.f32 %v3593, 1.442695
        %v3629 = vpow.pop %v3628
        %v3630 = vmul.f32 %v3594, 1.442695
        %v3631 = vpow.pop %v3630
        %v3632 = vmul.f32 %v3595, 1.442695
        %v3633 = vpow.pop %v3632
        %v3634 = vmul.f32 %v3596, 1.442695
        %v3635 = vpow.pop %v3634
        %v3636 = vmul.f32 %v3597, 1.442695
        %v3637 = vpow.pop %v3636
        %v3638 = vmul.f32 %v3598, 1.442695
        %v3639 = vpow.pop %v3638
        %v3640 = vmul.f32 %v3599, 1.442695
        %v3641 = vpow.pop %v3640
        %v3642 = vmul.f32 %v3600, 1.442695
        %v3643 = vpow.pop %v3642
        %v3644 = vmul.f32 %v3601, 1.442695
        %v3645 = vpow.pop %v3644
        %v3646 = vmul.f32 %v3602, 1.442695
        %v3647 = vpow.pop %v3646
        %v3648 = vmul.f32 %v3603, 1.442695
        %v3649 = vpow.pop %v3648
        %v3650 = vmul.f32 %v3604, 1.442695
        %v3651 = vpow.pop %v3650
        %v3652 = vmul.f32 %v3605, 1.442695
        %v3653 = vpow.pop %v3652
        %v3654 = vmul.f32 %v3606, 1.442695
        %v3655 = vpow.pop %v3654
        %v3656 = vmul.f32 %v3607, 1.442695
        %v3657 = vpow.pop %v3656
        %v3658 = vmul.f32 %v3608, 1.442695
        %v3659 = vpow.pop %v3658
        %v3660 = vmul.f32 %v3609, 1.442695
        %v3661 = vpow.pop %v3660
        %v3662 = vmul.f32 %v3610, 1.442695
        %v3663 = vpow.pop %v3662
        %v3664 = vmul.f32 %v3611, 1.442695
        %v3665 = vpow.pop %v3664
        %v3666 = vmul.f32 %v3612, 1.442695
        %v3667 = vpow.pop %v3666
        %v3668 = vmul.f32 %v3613, 1.442695
        %v3669 = vpow.pop %v3668
        %v3670 = vmul.f32 %v3614, 1.442695
        %v3671 = vpow.pop %v3670
        %v3672 = vmul.f32 %v3615, 1.442695
        %v3673 = vpow.pop %v3672
        %v3674 = vmul.f32 %v3616, 1.442695
        %v3675 = vpow.pop %v3674
        %v3676 = vmul.f32 %v3617, 1.442695
        %v3677 = vpow.pop %v3676
        %v3678 = vmul.f32 %v3618, 1.442695
        %v3679 = vpow.pop %v3678
        %v3680 = vmul.f32 %v3619, 1.442695
        %v3681 = vpow.pop %v3680
        %v3682 = vmul.f32 %v3620, 1.442695
        %v3683 = vpow.pop %v3682
        %v3684 = vmul.f32 %v3621, 1.442695
        %v3685 = vpow.pop %v3684
        %v3686 = vadd.f32 %v3623, 1.0
        %v3687 = vadd.f32 %v3625, 1.0
        %v3688 = vadd.f32 %v3627, 1.0
        %v3689 = vadd.f32 %v3629, 1.0
        %v3690 = vadd.f32 %v3631, 1.0
        %v3691 = vadd.f32 %v3633, 1.0
        %v3692 = vadd.f32 %v3635, 1.0
        %v3693 = vadd.f32 %v3637, 1.0
        %v3694 = vadd.f32 %v3639, 1.0
        %v3695 = vadd.f32 %v3641, 1.0
        %v3696 = vadd.f32 %v3643, 1.0
        %v3697 = vadd.f32 %v3645, 1.0
        %v3698 = vadd.f32 %v3647, 1.0
        %v3699 = vadd.f32 %v3649, 1.0
        %v3700 = vadd.f32 %v3651, 1.0
        %v3701 = vadd.f32 %v3653, 1.0
        %v3702 = vadd.f32 %v3655, 1.0
        %v3703 = vadd.f32 %v3657, 1.0
        %v3704 = vadd.f32 %v3659, 1.0
        %v3705 = vadd.f32 %v3661, 1.0
        %v3706 = vadd.f32 %v3663, 1.0
        %v3707 = vadd.f32 %v3665, 1.0
        %v3708 = vadd.f32 %v3667, 1.0
        %v3709 = vadd.f32 %v3669, 1.0
        %v3710 = vadd.f32 %v3671, 1.0
        %v3711 = vadd.f32 %v3673, 1.0
        %v3712 = vadd.f32 %v3675, 1.0
        %v3713 = vadd.f32 %v3677, 1.0
        %v3714 = vadd.f32 %v3679, 1.0
        %v3715 = vadd.f32 %v3681, 1.0
        %v3716 = vadd.f32 %v3683, 1.0
        %v3717 = vadd.f32 %v3685, 1.0
        %v3718 = vrcp.pop %v3686
        %v3719 = vmul.f32 1.0, %v3718
        %v3720 = vrcp.pop %v3687
        %v3721 = vmul.f32 1.0, %v3720
        %v3722 = vrcp.pop %v3688
        %v3723 = vmul.f32 1.0, %v3722
        %v3724 = vrcp.pop %v3689
        %v3725 = vmul.f32 1.0, %v3724
        %v3726 = vrcp.pop %v3690
        %v3727 = vmul.f32 1.0, %v3726
        %v3728 = vrcp.pop %v3691
        %v3729 = vmul.f32 1.0, %v3728
        %v3730 = vrcp.pop %v3692
        %v3731 = vmul.f32 1.0, %v3730
        %v3732 = vrcp.pop %v3693
        %v3733 = vmul.f32 1.0, %v3732
        %v3734 = vrcp.pop %v3694
        %v3735 = vmul.f32 1.0, %v3734
        %v3736 = vrcp.pop %v3695
        %v3737 = vmul.f32 1.0, %v3736
        %v3738 = vrcp.pop %v3696
        %v3739 = vmul.f32 1.0, %v3738
        %v3740 = vrcp.pop %v3697
        %v3741 = vmul.f32 1.0, %v3740
        %v3742 = vrcp.pop %v3698
        %v3743 = vmul.f32 1.0, %v3742
        %v3744 = vrcp.pop %v3699
        %v3745 = vmul.f32 1.0, %v3744
        %v3746 = vrcp.pop %v3700
        %v3747 = vmul.f32 1.0, %v3746
        %v3748 = vrcp.pop %v3701
        %v3749 = vmul.f32 1.0, %v3748
        %v3750 = vrcp.pop %v3702
        %v3751 = vmul.f32 1.0, %v3750
        %v3752 = vrcp.pop %v3703
        %v3753 = vmul.f32 1.0, %v3752
        %v3754 = vrcp.pop %v3704
        %v3755 = vmul.f32 1.0, %v3754
        %v3756 = vrcp.pop %v3705
        %v3757 = vmul.f32 1.0, %v3756
        %v3758 = vrcp.pop %v3706
        %v3759 = vmul.f32 1.0, %v3758
        %v3760 = vrcp.pop %v3707
        %v3761 = vmul.f32 1.0, %v3760
        %v3762 = vrcp.pop %v3708
        %v3763 = vmul.f32 1.0, %v3762
        %v3764 = vrcp.pop %v3709
        %v3765 = vmul.f32 1.0, %v3764
        %v3766 = vrcp.pop %v3710
        %v3767 = vmul.f32 1.0, %v3766
        %v3768 = vrcp.pop %v3711
        %v3769 = vmul.f32 1.0, %v3768
        %v3770 = vrcp.pop %v3712
        %v3771 = vmul.f32 1.0, %v3770
        %v3772 = vrcp.pop %v3713
        %v3773 = vmul.f32 1.0, %v3772
        %v3774 = vrcp.pop %v3714
        %v3775 = vmul.f32 1.0, %v3774
        %v3776 = vrcp.pop %v3715
        %v3777 = vmul.f32 1.0, %v3776
        %v3778 = vrcp.pop %v3716
        %v3779 = vmul.f32 1.0, %v3778
        %v3780 = vrcp.pop %v3717
        %v3781 = vmul.f32 1.0, %v3780
        %3814 = vrot.lane.b32.xlu0 %v3558, 32
        %v3815 = vpop.permute.xlu0 %3814
        %3816 = vrot.lane.b32.xlu0 %v3559, 32
        %v3817 = vpop.permute.xlu0 %3816
        %3818 = vrot.lane.b32.xlu0 %v3560, 32
        %v3819 = vpop.permute.xlu0 %3818
        %3820 = vrot.lane.b32.xlu0 %v3561, 32
        %v3821 = vpop.permute.xlu0 %3820
        %3822 = vrot.lane.b32.xlu0 %v3562, 32
        %v3823 = vpop.permute.xlu0 %3822
        %3824 = vrot.lane.b32.xlu0 %v3563, 32
        %v3825 = vpop.permute.xlu0 %3824
        %3826 = vrot.lane.b32.xlu0 %v3564, 32
        %v3827 = vpop.permute.xlu0 %3826
        %3828 = vrot.lane.b32.xlu0 %v3565, 32
        %v3829 = vpop.permute.xlu0 %3828
        %3830 = vrot.lane.b32.xlu0 %v3566, 32
        %v3831 = vpop.permute.xlu0 %3830
        %3832 = vrot.lane.b32.xlu0 %v3567, 32
        %v3833 = vpop.permute.xlu0 %3832
        %3834 = vrot.lane.b32.xlu0 %v3568, 32
        %v3835 = vpop.permute.xlu0 %3834
        %3836 = vrot.lane.b32.xlu0 %v3569, 32
        %v3837 = vpop.permute.xlu0 %3836
        %3838 = vrot.lane.b32.xlu0 %v3570, 32
        %v3839 = vpop.permute.xlu0 %3838
        %3840 = vrot.lane.b32.xlu0 %v3571, 32
        %v3841 = vpop.permute.xlu0 %3840
        %3842 = vrot.lane.b32.xlu0 %v3572, 32
        %v3843 = vpop.permute.xlu0 %3842
        %3844 = vrot.lane.b32.xlu0 %v3573, 32
        %v3845 = vpop.permute.xlu0 %3844
        %3846 = vrot.lane.b32.xlu0 %v3574, 32
        %v3847 = vpop.permute.xlu0 %3846
        %3848 = vrot.lane.b32.xlu0 %v3575, 32
        %v3849 = vpop.permute.xlu0 %3848
        %3850 = vrot.lane.b32.xlu0 %v3576, 32
        %v3851 = vpop.permute.xlu0 %3850
        %3852 = vrot.lane.b32.xlu0 %v3577, 32
        %v3853 = vpop.permute.xlu0 %3852
        %3854 = vrot.lane.b32.xlu0 %v3578, 32
        %v3855 = vpop.permute.xlu0 %3854
        %3856 = vrot.lane.b32.xlu0 %v3579, 32
        %v3857 = vpop.permute.xlu0 %3856
        %3858 = vrot.lane.b32.xlu0 %v3580, 32
        %v3859 = vpop.permute.xlu0 %3858
        %3860 = vrot.lane.b32.xlu0 %v3581, 32
        %v3861 = vpop.permute.xlu0 %3860
        %3862 = vrot.lane.b32.xlu0 %v3582, 32
        %v3863 = vpop.permute.xlu0 %3862
        %3864 = vrot.lane.b32.xlu0 %v3583, 32
        %v3865 = vpop.permute.xlu0 %3864
        %3866 = vrot.lane.b32.xlu0 %v3584, 32
        %v3867 = vpop.permute.xlu0 %3866
        %3868 = vrot.lane.b32.xlu0 %v3585, 32
        %v3869 = vpop.permute.xlu0 %3868
        %3870 = vrot.lane.b32.xlu0 %v3586, 32
        %v3871 = vpop.permute.xlu0 %3870
        %3872 = vrot.lane.b32.xlu0 %v3587, 32
        %v3873 = vpop.permute.xlu0 %3872
        %3874 = vrot.lane.b32.xlu0 %v3588, 32
        %v3875 = vpop.permute.xlu0 %3874
        %3876 = vrot.lane.b32.xlu0 %v3589, 32
        %v3877 = vpop.permute.xlu0 %3876
        %v3910 = vmul.f32 %v3719, %v3815
        %v3911 = vmul.f32 %v3721, %v3817
        %v3912 = vmul.f32 %v3723, %v3819
        %v3913 = vmul.f32 %v3725, %v3821
        %v3914 = vmul.f32 %v3727, %v3823
        %v3915 = vmul.f32 %v3729, %v3825
        %v3916 = vmul.f32 %v3731, %v3827
        %v3917 = vmul.f32 %v3733, %v3829
        %v3918 = vmul.f32 %v3735, %v3831
        %v3919 = vmul.f32 %v3737, %v3833
        %v3920 = vmul.f32 %v3739, %v3835
        %v3921 = vmul.f32 %v3741, %v3837
        %v3922 = vmul.f32 %v3743, %v3839
        %v3923 = vmul.f32 %v3745, %v3841
        %v3924 = vmul.f32 %v3747, %v3843
        %v3925 = vmul.f32 %v3749, %v3845
        %v3926 = vmul.f32 %v3751, %v3847
        %v3927 = vmul.f32 %v3753, %v3849
        %v3928 = vmul.f32 %v3755, %v3851
        %v3929 = vmul.f32 %v3757, %v3853
        %v3930 = vmul.f32 %v3759, %v3855
        %v3931 = vmul.f32 %v3761, %v3857
        %v3932 = vmul.f32 %v3763, %v3859
        %v3933 = vmul.f32 %v3765, %v3861
        %v3934 = vmul.f32 %v3767, %v3863
        %v3935 = vmul.f32 %v3769, %v3865
        %v3936 = vmul.f32 %v3771, %v3867
        %v3937 = vmul.f32 %v3773, %v3869
        %v3938 = vmul.f32 %v3775, %v3871
        %v3939 = vmul.f32 %v3777, %v3873
        %v3940 = vmul.f32 %v3779, %v3875
        %v3941 = vmul.f32 %v3781, %v3877
        %v3942 = vtanh.pop %v3430
        %v3943 = vtanh.pop %v3433
        %v3944 = vtanh.pop %v3438
        %v3945 = vtanh.pop %v3441
        %v3946 = vtanh.pop %v3446
        %v3947 = vtanh.pop %v3449
        %v3948 = vtanh.pop %v3454
        %v3949 = vtanh.pop %v3457
        %v3950 = vtanh.pop %v3462
        %v3951 = vtanh.pop %v3465
        %v3952 = vtanh.pop %v3470
        %v3953 = vtanh.pop %v3473
        %v3954 = vtanh.pop %v3478
        %v3955 = vtanh.pop %v3481
        %v3956 = vtanh.pop %v3486
        %v3957 = vtanh.pop %v3489
        %v3958 = vtanh.pop %v3494
        %v3959 = vtanh.pop %v3497
        %v3960 = vtanh.pop %v3502
        %v3961 = vtanh.pop %v3505
        %v3962 = vtanh.pop %v3510
        %v3963 = vtanh.pop %v3513
        %v3964 = vtanh.pop %v3518
        %v3965 = vtanh.pop %v3521
        %v3966 = vtanh.pop %v3526
        %v3967 = vtanh.pop %v3529
        %v3968 = vtanh.pop %v3534
        %v3969 = vtanh.pop %v3537
        %v3970 = vtanh.pop %v3542
        %v3971 = vtanh.pop %v3545
        %v3972 = vtanh.pop %v3550
        %v3973 = vtanh.pop %v3553
        %4006 = vrot.lane.b32.xlu0 %v3942, 64
        %v4007 = vpop.permute.xlu0 %4006
        %4008 = vrot.lane.b32.xlu0 %v3943, 64
        %v4009 = vpop.permute.xlu0 %4008
        %4010 = vrot.lane.b32.xlu0 %v3944, 64
        %v4011 = vpop.permute.xlu0 %4010
        %4012 = vrot.lane.b32.xlu0 %v3945, 64
        %v4013 = vpop.permute.xlu0 %4012
        %4014 = vrot.lane.b32.xlu0 %v3946, 64
        %v4015 = vpop.permute.xlu0 %4014
        %4016 = vrot.lane.b32.xlu0 %v3947, 64
        %v4017 = vpop.permute.xlu0 %4016
        %4018 = vrot.lane.b32.xlu0 %v3948, 64
        %v4019 = vpop.permute.xlu0 %4018
        %4020 = vrot.lane.b32.xlu0 %v3949, 64
        %v4021 = vpop.permute.xlu0 %4020
        %4022 = vrot.lane.b32.xlu0 %v3950, 64
        %v4023 = vpop.permute.xlu0 %4022
        %4024 = vrot.lane.b32.xlu0 %v3951, 64
        %v4025 = vpop.permute.xlu0 %4024
        %4026 = vrot.lane.b32.xlu0 %v3952, 64
        %v4027 = vpop.permute.xlu0 %4026
        %4028 = vrot.lane.b32.xlu0 %v3953, 64
        %v4029 = vpop.permute.xlu0 %4028
        %4030 = vrot.lane.b32.xlu0 %v3954, 64
        %v4031 = vpop.permute.xlu0 %4030
        %4032 = vrot.lane.b32.xlu0 %v3955, 64
        %v4033 = vpop.permute.xlu0 %4032
        %4034 = vrot.lane.b32.xlu0 %v3956, 64
        %v4035 = vpop.permute.xlu0 %4034
        %4036 = vrot.lane.b32.xlu0 %v3957, 64
        %v4037 = vpop.permute.xlu0 %4036
        %4038 = vrot.lane.b32.xlu0 %v3958, 64
        %v4039 = vpop.permute.xlu0 %4038
        %4040 = vrot.lane.b32.xlu0 %v3959, 64
        %v4041 = vpop.permute.xlu0 %4040
        %4042 = vrot.lane.b32.xlu0 %v3960, 64
        %v4043 = vpop.permute.xlu0 %4042
        %4044 = vrot.lane.b32.xlu0 %v3961, 64
        %v4045 = vpop.permute.xlu0 %4044
        %4046 = vrot.lane.b32.xlu0 %v3962, 64
        %v4047 = vpop.permute.xlu0 %4046
        %4048 = vrot.lane.b32.xlu0 %v3963, 64
        %v4049 = vpop.permute.xlu0 %4048
        %4050 = vrot.lane.b32.xlu0 %v3964, 64
        %v4051 = vpop.permute.xlu0 %4050
        %4052 = vrot.lane.b32.xlu0 %v3965, 64
        %v4053 = vpop.permute.xlu0 %4052
        %4054 = vrot.lane.b32.xlu0 %v3966, 64
        %v4055 = vpop.permute.xlu0 %4054
        %4056 = vrot.lane.b32.xlu0 %v3967, 64
        %v4057 = vpop.permute.xlu0 %4056
        %4058 = vrot.lane.b32.xlu0 %v3968, 64
        %v4059 = vpop.permute.xlu0 %4058
        %4060 = vrot.lane.b32.xlu0 %v3969, 64
        %v4061 = vpop.permute.xlu0 %4060
        %4062 = vrot.lane.b32.xlu0 %v3970, 64
        %v4063 = vpop.permute.xlu0 %4062
        %4064 = vrot.lane.b32.xlu0 %v3971, 64
        %v4065 = vpop.permute.xlu0 %4064
        %4066 = vrot.lane.b32.xlu0 %v3972, 64
        %v4067 = vpop.permute.xlu0 %4066
        %4068 = vrot.lane.b32.xlu0 %v3973, 64
        %v4069 = vpop.permute.xlu0 %4068
        %v4102 = vmul.f32 %v3719, %v4007
        %v4103 = vmul.f32 %v3721, %v4009
        %v4104 = vmul.f32 %v3723, %v4011
        %v4105 = vmul.f32 %v3725, %v4013
        %v4106 = vmul.f32 %v3727, %v4015
        %v4107 = vmul.f32 %v3729, %v4017
        %v4108 = vmul.f32 %v3731, %v4019
        %v4109 = vmul.f32 %v3733, %v4021
        %v4110 = vmul.f32 %v3735, %v4023
        %v4111 = vmul.f32 %v3737, %v4025
        %v4112 = vmul.f32 %v3739, %v4027
        %v4113 = vmul.f32 %v3741, %v4029
        %v4114 = vmul.f32 %v3743, %v4031
        %v4115 = vmul.f32 %v3745, %v4033
        %v4116 = vmul.f32 %v3747, %v4035
        %v4117 = vmul.f32 %v3749, %v4037
        %v4118 = vmul.f32 %v3751, %v4039
        %v4119 = vmul.f32 %v3753, %v4041
        %v4120 = vmul.f32 %v3755, %v4043
        %v4121 = vmul.f32 %v3757, %v4045
        %v4122 = vmul.f32 %v3759, %v4047
        %v4123 = vmul.f32 %v3761, %v4049
        %v4124 = vmul.f32 %v3763, %v4051
        %v4125 = vmul.f32 %v3765, %v4053
        %v4126 = vmul.f32 %v3767, %v4055
        %v4127 = vmul.f32 %v3769, %v4057
        %v4128 = vmul.f32 %v3771, %v4059
        %v4129 = vmul.f32 %v3773, %v4061
        %v4130 = vmul.f32 %v3775, %v4063
        %v4131 = vmul.f32 %v3777, %v4065
        %v4132 = vmul.f32 %v3779, %v4067
        %v4133 = vmul.f32 %v3781, %v4069
        %4166 = vrot.lane.b32.xlu0 %v4102, 32
        %v4167 = vpop.permute.xlu0 %4166
        %4168 = vrot.lane.b32.xlu0 %v4103, 32
        %v4169 = vpop.permute.xlu0 %4168
        %4170 = vrot.lane.b32.xlu0 %v4104, 32
        %v4171 = vpop.permute.xlu0 %4170
        %4172 = vrot.lane.b32.xlu0 %v4105, 32
        %v4173 = vpop.permute.xlu0 %4172
        %4174 = vrot.lane.b32.xlu0 %v4106, 32
        %v4175 = vpop.permute.xlu0 %4174
        %4176 = vrot.lane.b32.xlu0 %v4107, 32
        %v4177 = vpop.permute.xlu0 %4176
        %4178 = vrot.lane.b32.xlu0 %v4108, 32
        %v4179 = vpop.permute.xlu0 %4178
        %4180 = vrot.lane.b32.xlu0 %v4109, 32
        %v4181 = vpop.permute.xlu0 %4180
        %4182 = vrot.lane.b32.xlu0 %v4110, 32
        %v4183 = vpop.permute.xlu0 %4182
        %4184 = vrot.lane.b32.xlu0 %v4111, 32
        %v4185 = vpop.permute.xlu0 %4184
        %4186 = vrot.lane.b32.xlu0 %v4112, 32
        %v4187 = vpop.permute.xlu0 %4186
        %4188 = vrot.lane.b32.xlu0 %v4113, 32
        %v4189 = vpop.permute.xlu0 %4188
        %4190 = vrot.lane.b32.xlu0 %v4114, 32
        %v4191 = vpop.permute.xlu0 %4190
        %4192 = vrot.lane.b32.xlu0 %v4115, 32
        %v4193 = vpop.permute.xlu0 %4192
        %4194 = vrot.lane.b32.xlu0 %v4116, 32
        %v4195 = vpop.permute.xlu0 %4194
        %4196 = vrot.lane.b32.xlu0 %v4117, 32
        %v4197 = vpop.permute.xlu0 %4196
        %4198 = vrot.lane.b32.xlu0 %v4118, 32
        %v4199 = vpop.permute.xlu0 %4198
        %4200 = vrot.lane.b32.xlu0 %v4119, 32
        %v4201 = vpop.permute.xlu0 %4200
        %4202 = vrot.lane.b32.xlu0 %v4120, 32
        %v4203 = vpop.permute.xlu0 %4202
        %4204 = vrot.lane.b32.xlu0 %v4121, 32
        %v4205 = vpop.permute.xlu0 %4204
        %4206 = vrot.lane.b32.xlu0 %v4122, 32
        %v4207 = vpop.permute.xlu0 %4206
        %4208 = vrot.lane.b32.xlu0 %v4123, 32
        %v4209 = vpop.permute.xlu0 %4208
        %4210 = vrot.lane.b32.xlu0 %v4124, 32
        %v4211 = vpop.permute.xlu0 %4210
        %4212 = vrot.lane.b32.xlu0 %v4125, 32
        %v4213 = vpop.permute.xlu0 %4212
        %4214 = vrot.lane.b32.xlu0 %v4126, 32
        %v4215 = vpop.permute.xlu0 %4214
        %4216 = vrot.lane.b32.xlu0 %v4127, 32
        %v4217 = vpop.permute.xlu0 %4216
        %4218 = vrot.lane.b32.xlu0 %v4128, 32
        %v4219 = vpop.permute.xlu0 %4218
        %4220 = vrot.lane.b32.xlu0 %v4129, 32
        %v4221 = vpop.permute.xlu0 %4220
        %4222 = vrot.lane.b32.xlu0 %v4130, 32
        %v4223 = vpop.permute.xlu0 %4222
        %4224 = vrot.lane.b32.xlu0 %v4131, 32
        %v4225 = vpop.permute.xlu0 %4224
        %4226 = vrot.lane.b32.xlu0 %v4132, 32
        %v4227 = vpop.permute.xlu0 %4226
        %4228 = vrot.lane.b32.xlu0 %v4133, 32
        %v4229 = vpop.permute.xlu0 %4228
        %v4262 = vadd.f32 %v3910, %v4167
        %v4263 = vadd.f32 %v3911, %v4169
        %v4264 = vadd.f32 %v3912, %v4171
        %v4265 = vadd.f32 %v3913, %v4173
        %v4266 = vadd.f32 %v3914, %v4175
        %v4267 = vadd.f32 %v3915, %v4177
        %v4268 = vadd.f32 %v3916, %v4179
        %v4269 = vadd.f32 %v3917, %v4181
        %v4270 = vadd.f32 %v3918, %v4183
        %v4271 = vadd.f32 %v3919, %v4185
        %v4272 = vadd.f32 %v3920, %v4187
        %v4273 = vadd.f32 %v3921, %v4189
        %v4274 = vadd.f32 %v3922, %v4191
        %v4275 = vadd.f32 %v3923, %v4193
        %v4276 = vadd.f32 %v3924, %v4195
        %v4277 = vadd.f32 %v3925, %v4197
        %v4278 = vadd.f32 %v3926, %v4199
        %v4279 = vadd.f32 %v3927, %v4201
        %v4280 = vadd.f32 %v3928, %v4203
        %v4281 = vadd.f32 %v3929, %v4205
        %v4282 = vadd.f32 %v3930, %v4207
        %v4283 = vadd.f32 %v3931, %v4209
        %v4284 = vadd.f32 %v3932, %v4211
        %v4285 = vadd.f32 %v3933, %v4213
        %v4286 = vadd.f32 %v3934, %v4215
        %v4287 = vadd.f32 %v3935, %v4217
        %v4288 = vadd.f32 %v3936, %v4219
        %v4289 = vadd.f32 %v3937, %v4221
        %v4290 = vadd.f32 %v3938, %v4223
        %v4291 = vadd.f32 %v3939, %v4225
        %v4292 = vadd.f32 %v3940, %v4227
        %v4293 = vadd.f32 %v3941, %v4229
        %v4294 = vtanh.pop %v4262
        %v4295 = vtanh.pop %v4263
        %v4296 = vtanh.pop %v4264
        %v4297 = vtanh.pop %v4265
        %v4298 = vtanh.pop %v4266
        %v4299 = vtanh.pop %v4267
        %v4300 = vtanh.pop %v4268
        %v4301 = vtanh.pop %v4269
        %v4302 = vtanh.pop %v4270
        %v4303 = vtanh.pop %v4271
        %v4304 = vtanh.pop %v4272
        %v4305 = vtanh.pop %v4273
        %v4306 = vtanh.pop %v4274
        %v4307 = vtanh.pop %v4275
        %v4308 = vtanh.pop %v4276
        %v4309 = vtanh.pop %v4277
        %v4310 = vtanh.pop %v4278
        %v4311 = vtanh.pop %v4279
        %v4312 = vtanh.pop %v4280
        %v4313 = vtanh.pop %v4281
        %v4314 = vtanh.pop %v4282
        %v4315 = vtanh.pop %v4283
        %v4316 = vtanh.pop %v4284
        %v4317 = vtanh.pop %v4285
        %v4318 = vtanh.pop %v4286
        %v4319 = vtanh.pop %v4287
        %v4320 = vtanh.pop %v4288
        %v4321 = vtanh.pop %v4289
        %v4322 = vtanh.pop %v4290
        %v4323 = vtanh.pop %v4291
        %v4324 = vtanh.pop %v4292
        %v4325 = vtanh.pop %v4293
        %4358 = vrot.lane.b32.xlu0 %v4294, 64
        %v4359 = vpop.permute.xlu0 %4358
        %4360 = vrot.lane.b32.xlu0 %v4295, 64
        %v4361 = vpop.permute.xlu0 %4360
        %4362 = vrot.lane.b32.xlu0 %v4296, 64
        %v4363 = vpop.permute.xlu0 %4362
        %4364 = vrot.lane.b32.xlu0 %v4297, 64
        %v4365 = vpop.permute.xlu0 %4364
        %4366 = vrot.lane.b32.xlu0 %v4298, 64
        %v4367 = vpop.permute.xlu0 %4366
        %4368 = vrot.lane.b32.xlu0 %v4299, 64
        %v4369 = vpop.permute.xlu0 %4368
        %4370 = vrot.lane.b32.xlu0 %v4300, 64
        %v4371 = vpop.permute.xlu0 %4370
        %4372 = vrot.lane.b32.xlu0 %v4301, 64
        %v4373 = vpop.permute.xlu0 %4372
        %4374 = vrot.lane.b32.xlu0 %v4302, 64
        %v4375 = vpop.permute.xlu0 %4374
        %4376 = vrot.lane.b32.xlu0 %v4303, 64
        %v4377 = vpop.permute.xlu0 %4376
        %4378 = vrot.lane.b32.xlu0 %v4304, 64
        %v4379 = vpop.permute.xlu0 %4378
        %4380 = vrot.lane.b32.xlu0 %v4305, 64
        %v4381 = vpop.permute.xlu0 %4380
        %4382 = vrot.lane.b32.xlu0 %v4306, 64
        %v4383 = vpop.permute.xlu0 %4382
        %4384 = vrot.lane.b32.xlu0 %v4307, 64
        %v4385 = vpop.permute.xlu0 %4384
        %4386 = vrot.lane.b32.xlu0 %v4308, 64
        %v4387 = vpop.permute.xlu0 %4386
        %4388 = vrot.lane.b32.xlu0 %v4309, 64
        %v4389 = vpop.permute.xlu0 %4388
        %4390 = vrot.lane.b32.xlu0 %v4310, 64
        %v4391 = vpop.permute.xlu0 %4390
        %4392 = vrot.lane.b32.xlu0 %v4311, 64
        %v4393 = vpop.permute.xlu0 %4392
        %4394 = vrot.lane.b32.xlu0 %v4312, 64
        %v4395 = vpop.permute.xlu0 %4394
        %4396 = vrot.lane.b32.xlu0 %v4313, 64
        %v4397 = vpop.permute.xlu0 %4396
        %4398 = vrot.lane.b32.xlu0 %v4314, 64
        %v4399 = vpop.permute.xlu0 %4398
        %4400 = vrot.lane.b32.xlu0 %v4315, 64
        %v4401 = vpop.permute.xlu0 %4400
        %4402 = vrot.lane.b32.xlu0 %v4316, 64
        %v4403 = vpop.permute.xlu0 %4402
        %4404 = vrot.lane.b32.xlu0 %v4317, 64
        %v4405 = vpop.permute.xlu0 %4404
        %4406 = vrot.lane.b32.xlu0 %v4318, 64
        %v4407 = vpop.permute.xlu0 %4406
        %4408 = vrot.lane.b32.xlu0 %v4319, 64
        %v4409 = vpop.permute.xlu0 %4408
        %4410 = vrot.lane.b32.xlu0 %v4320, 64
        %v4411 = vpop.permute.xlu0 %4410
        %4412 = vrot.lane.b32.xlu0 %v4321, 64
        %v4413 = vpop.permute.xlu0 %4412
        %4414 = vrot.lane.b32.xlu0 %v4322, 64
        %v4415 = vpop.permute.xlu0 %4414
        %4416 = vrot.lane.b32.xlu0 %v4323, 64
        %v4417 = vpop.permute.xlu0 %4416
        %4418 = vrot.lane.b32.xlu0 %v4324, 64
        %v4419 = vpop.permute.xlu0 %4418
        %4420 = vrot.lane.b32.xlu0 %v4325, 64
        %v4421 = vpop.permute.xlu0 %4420
        %v4454 = vmul.f32 %v3719, %v4359
        %v4455 = vmul.f32 %v3721, %v4361
        %v4456 = vmul.f32 %v3723, %v4363
        %v4457 = vmul.f32 %v3725, %v4365
        %v4458 = vmul.f32 %v3727, %v4367
        %v4459 = vmul.f32 %v3729, %v4369
        %v4460 = vmul.f32 %v3731, %v4371
        %v4461 = vmul.f32 %v3733, %v4373
        %v4462 = vmul.f32 %v3735, %v4375
        %v4463 = vmul.f32 %v3737, %v4377
        %v4464 = vmul.f32 %v3739, %v4379
        %v4465 = vmul.f32 %v3741, %v4381
        %v4466 = vmul.f32 %v3743, %v4383
        %v4467 = vmul.f32 %v3745, %v4385
        %v4468 = vmul.f32 %v3747, %v4387
        %v4469 = vmul.f32 %v3749, %v4389
        %v4470 = vmul.f32 %v3751, %v4391
        %v4471 = vmul.f32 %v3753, %v4393
        %v4472 = vmul.f32 %v3755, %v4395
        %v4473 = vmul.f32 %v3757, %v4397
        %v4474 = vmul.f32 %v3759, %v4399
        %v4475 = vmul.f32 %v3761, %v4401
        %v4476 = vmul.f32 %v3763, %v4403
        %v4477 = vmul.f32 %v3765, %v4405
        %v4478 = vmul.f32 %v3767, %v4407
        %v4479 = vmul.f32 %v3769, %v4409
        %v4480 = vmul.f32 %v3771, %v4411
        %v4481 = vmul.f32 %v3773, %v4413
        %v4482 = vmul.f32 %v3775, %v4415
        %v4483 = vmul.f32 %v3777, %v4417
        %v4484 = vmul.f32 %v3779, %v4419
        %v4485 = vmul.f32 %v3781, %v4421
        %4518 = vrot.lane.b32.xlu0 %v4262, 96
        %v4519 = vpop.permute.xlu0 %4518
        %4520 = vrot.lane.b32.xlu0 %v4263, 96
        %v4521 = vpop.permute.xlu0 %4520
        %4522 = vrot.lane.b32.xlu0 %v4264, 96
        %v4523 = vpop.permute.xlu0 %4522
        %4524 = vrot.lane.b32.xlu0 %v4265, 96
        %v4525 = vpop.permute.xlu0 %4524
        %4526 = vrot.lane.b32.xlu0 %v4266, 96
        %v4527 = vpop.permute.xlu0 %4526
        %4528 = vrot.lane.b32.xlu0 %v4267, 96
        %v4529 = vpop.permute.xlu0 %4528
        %4530 = vrot.lane.b32.xlu0 %v4268, 96
        %v4531 = vpop.permute.xlu0 %4530
        %4532 = vrot.lane.b32.xlu0 %v4269, 96
        %v4533 = vpop.permute.xlu0 %4532
        %4534 = vrot.lane.b32.xlu0 %v4270, 96
        %v4535 = vpop.permute.xlu0 %4534
        %4536 = vrot.lane.b32.xlu0 %v4271, 96
        %v4537 = vpop.permute.xlu0 %4536
        %4538 = vrot.lane.b32.xlu0 %v4272, 96
        %v4539 = vpop.permute.xlu0 %4538
        %4540 = vrot.lane.b32.xlu0 %v4273, 96
        %v4541 = vpop.permute.xlu0 %4540
        %4542 = vrot.lane.b32.xlu0 %v4274, 96
        %v4543 = vpop.permute.xlu0 %4542
        %4544 = vrot.lane.b32.xlu0 %v4275, 96
        %v4545 = vpop.permute.xlu0 %4544
        %4546 = vrot.lane.b32.xlu0 %v4276, 96
        %v4547 = vpop.permute.xlu0 %4546
        %4548 = vrot.lane.b32.xlu0 %v4277, 96
        %v4549 = vpop.permute.xlu0 %4548
        %4550 = vrot.lane.b32.xlu0 %v4278, 96
        %v4551 = vpop.permute.xlu0 %4550
        %4552 = vrot.lane.b32.xlu0 %v4279, 96
        %v4553 = vpop.permute.xlu0 %4552
        %4554 = vrot.lane.b32.xlu0 %v4280, 96
        %v4555 = vpop.permute.xlu0 %4554
        %4556 = vrot.lane.b32.xlu0 %v4281, 96
        %v4557 = vpop.permute.xlu0 %4556
        %4558 = vrot.lane.b32.xlu0 %v4282, 96
        %v4559 = vpop.permute.xlu0 %4558
        %4560 = vrot.lane.b32.xlu0 %v4283, 96
        %v4561 = vpop.permute.xlu0 %4560
        %4562 = vrot.lane.b32.xlu0 %v4284, 96
        %v4563 = vpop.permute.xlu0 %4562
        %4564 = vrot.lane.b32.xlu0 %v4285, 96
        %v4565 = vpop.permute.xlu0 %4564
        %4566 = vrot.lane.b32.xlu0 %v4286, 96
        %v4567 = vpop.permute.xlu0 %4566
        %4568 = vrot.lane.b32.xlu0 %v4287, 96
        %v4569 = vpop.permute.xlu0 %4568
        %4570 = vrot.lane.b32.xlu0 %v4288, 96
        %v4571 = vpop.permute.xlu0 %4570
        %4572 = vrot.lane.b32.xlu0 %v4289, 96
        %v4573 = vpop.permute.xlu0 %4572
        %4574 = vrot.lane.b32.xlu0 %v4290, 96
        %v4575 = vpop.permute.xlu0 %4574
        %4576 = vrot.lane.b32.xlu0 %v4291, 96
        %v4577 = vpop.permute.xlu0 %4576
        %4578 = vrot.lane.b32.xlu0 %v4292, 96
        %v4579 = vpop.permute.xlu0 %4578
        %4580 = vrot.lane.b32.xlu0 %v4293, 96
        %v4581 = vpop.permute.xlu0 %4580
        %4614 = vst.msk [vmem:[%s3557] sm:$0xff] %vm712, %v4519
        %4615 = vst.msk [vmem:[%s3557 + $0x8] sm:$0xff] %vm712, %v4521
        %4616 = vst.msk [vmem:[%s3557 + $0x10] sm:$0xff] %vm712, %v4523
        %4617 = vst.msk [vmem:[%s3557 + $0x18] sm:$0xff] %vm712, %v4525
        %4618 = vst.msk [vmem:[%s3557 + $0x20] sm:$0xff] %vm712, %v4527
        %4619 = vst.msk [vmem:[%s3557 + $0x28] sm:$0xff] %vm712, %v4529
        %4620 = vst.msk [vmem:[%s3557 + $0x30] sm:$0xff] %vm712, %v4531
        %4621 = vst.msk [vmem:[%s3557 + $0x38] sm:$0xff] %vm712, %v4533
        %4622 = vst.msk [vmem:[%s3557 + $0x40] sm:$0xff] %vm712, %v4535
        %4623 = vst.msk [vmem:[%s3557 + $0x48] sm:$0xff] %vm712, %v4537
        %4624 = vst.msk [vmem:[%s3557 + $0x50] sm:$0xff] %vm712, %v4539
        %4625 = vst.msk [vmem:[%s3557 + $0x58] sm:$0xff] %vm712, %v4541
        %4626 = vst.msk [vmem:[%s3557 + $0x60] sm:$0xff] %vm712, %v4543
        %4627 = vst.msk [vmem:[%s3557 + $0x68] sm:$0xff] %vm712, %v4545
        %4628 = vst.msk [vmem:[%s3557 + $0x70] sm:$0xff] %vm712, %v4547
        %4629 = vst.msk [vmem:[%s3557 + $0x78] sm:$0xff] %vm712, %v4549
        %4630 = vst.msk [vmem:[%s3557 + $0x80] sm:$0xff] %vm712, %v4551
        %4631 = vst.msk [vmem:[%s3557 + $0x88] sm:$0xff] %vm712, %v4553
        %4632 = vst.msk [vmem:[%s3557 + $0x90] sm:$0xff] %vm712, %v4555
        %4633 = vst.msk [vmem:[%s3557 + $0x98] sm:$0xff] %vm712, %v4557
        %4634 = vst.msk [vmem:[%s3557 + $0xa0] sm:$0xff] %vm712, %v4559
        %4635 = vst.msk [vmem:[%s3557 + $0xa8] sm:$0xff] %vm712, %v4561
        %4636 = vst.msk [vmem:[%s3557 + $0xb0] sm:$0xff] %vm712, %v4563
        %4637 = vst.msk [vmem:[%s3557 + $0xb8] sm:$0xff] %vm712, %v4565
        %4638 = vst.msk [vmem:[%s3557 + $0xc0] sm:$0xff] %vm712, %v4567
        %4639 = vst.msk [vmem:[%s3557 + $0xc8] sm:$0xff] %vm712, %v4569
        %4640 = vst.msk [vmem:[%s3557 + $0xd0] sm:$0xff] %vm712, %v4571
        %4641 = vst.msk [vmem:[%s3557 + $0xd8] sm:$0xff] %vm712, %v4573
        %4642 = vst.msk [vmem:[%s3557 + $0xe0] sm:$0xff] %vm712, %v4575
        %4643 = vst.msk [vmem:[%s3557 + $0xe8] sm:$0xff] %vm712, %v4577
        %4644 = vst.msk [vmem:[%s3557 + $0xf0] sm:$0xff] %vm712, %v4579
        %4645 = vst.msk [vmem:[%s3557 + $0xf8] sm:$0xff] %vm712, %v4581
        %4678 = vrot.lane.b32.xlu0 %v4454, 32
        %v4679 = vpop.permute.xlu0 %4678
        %4680 = vrot.lane.b32.xlu0 %v4455, 32
        %v4681 = vpop.permute.xlu0 %4680
        %4682 = vrot.lane.b32.xlu0 %v4456, 32
        %v4683 = vpop.permute.xlu0 %4682
        %4684 = vrot.lane.b32.xlu0 %v4457, 32
        %v4685 = vpop.permute.xlu0 %4684
        %4686 = vrot.lane.b32.xlu0 %v4458, 32
        %v4687 = vpop.permute.xlu0 %4686
        %4688 = vrot.lane.b32.xlu0 %v4459, 32
        %v4689 = vpop.permute.xlu0 %4688
        %4690 = vrot.lane.b32.xlu0 %v4460, 32
        %v4691 = vpop.permute.xlu0 %4690
        %4692 = vrot.lane.b32.xlu0 %v4461, 32
        %v4693 = vpop.permute.xlu0 %4692
        %4694 = vrot.lane.b32.xlu0 %v4462, 32
        %v4695 = vpop.permute.xlu0 %4694
        %4696 = vrot.lane.b32.xlu0 %v4463, 32
        %v4697 = vpop.permute.xlu0 %4696
        %4698 = vrot.lane.b32.xlu0 %v4464, 32
        %v4699 = vpop.permute.xlu0 %4698
        %4700 = vrot.lane.b32.xlu0 %v4465, 32
        %v4701 = vpop.permute.xlu0 %4700
        %4702 = vrot.lane.b32.xlu0 %v4466, 32
        %v4703 = vpop.permute.xlu0 %4702
        %4704 = vrot.lane.b32.xlu0 %v4467, 32
        %v4705 = vpop.permute.xlu0 %4704
        %4706 = vrot.lane.b32.xlu0 %v4468, 32
        %v4707 = vpop.permute.xlu0 %4706
        %4708 = vrot.lane.b32.xlu0 %v4469, 32
        %v4709 = vpop.permute.xlu0 %4708
        %4710 = vrot.lane.b32.xlu0 %v4470, 32
        %v4711 = vpop.permute.xlu0 %4710
        %4712 = vrot.lane.b32.xlu0 %v4471, 32
        %v4713 = vpop.permute.xlu0 %4712
        %4714 = vrot.lane.b32.xlu0 %v4472, 32
        %v4715 = vpop.permute.xlu0 %4714
        %4716 = vrot.lane.b32.xlu0 %v4473, 32
        %v4717 = vpop.permute.xlu0 %4716
        %4718 = vrot.lane.b32.xlu0 %v4474, 32
        %v4719 = vpop.permute.xlu0 %4718
        %4720 = vrot.lane.b32.xlu0 %v4475, 32
        %v4721 = vpop.permute.xlu0 %4720
        %4722 = vrot.lane.b32.xlu0 %v4476, 32
        %v4723 = vpop.permute.xlu0 %4722
        %4724 = vrot.lane.b32.xlu0 %v4477, 32
        %v4725 = vpop.permute.xlu0 %4724
        %4726 = vrot.lane.b32.xlu0 %v4478, 32
        %v4727 = vpop.permute.xlu0 %4726
        %4728 = vrot.lane.b32.xlu0 %v4479, 32
        %v4729 = vpop.permute.xlu0 %4728
        %4730 = vrot.lane.b32.xlu0 %v4480, 32
        %v4731 = vpop.permute.xlu0 %4730
        %4732 = vrot.lane.b32.xlu0 %v4481, 32
        %v4733 = vpop.permute.xlu0 %4732
        %4734 = vrot.lane.b32.xlu0 %v4482, 32
        %v4735 = vpop.permute.xlu0 %4734
        %4736 = vrot.lane.b32.xlu0 %v4483, 32
        %v4737 = vpop.permute.xlu0 %4736
        %4738 = vrot.lane.b32.xlu0 %v4484, 32
        %v4739 = vpop.permute.xlu0 %4738
        %4740 = vrot.lane.b32.xlu0 %v4485, 32
        %v4741 = vpop.permute.xlu0 %4740
        %4774 = vst.msk [vmem:[%s2019 + $0x1] sm:$0xff] %vm712, %v4679
        %4775 = vst.msk [vmem:[%s2019 + $0x9] sm:$0xff] %vm712, %v4681
        %4776 = vst.msk [vmem:[%s2019 + $0x19] sm:$0xff] %vm712, %v4683
        %4777 = vst.msk [vmem:[%s2019 + $0x21] sm:$0xff] %vm712, %v4685
        %4778 = vst.msk [vmem:[%s2019 + $0x31] sm:$0xff] %vm712, %v4687
        %4779 = vst.msk [vmem:[%s2019 + $0x39] sm:$0xff] %vm712, %v4689
        %4780 = vst.msk [vmem:[%s2019 + $0x49] sm:$0xff] %vm712, %v4691
        %4781 = vst.msk [vmem:[%s2019 + $0x51] sm:$0xff] %vm712, %v4693
        %4782 = vst.msk [vmem:[%s2019 + $0x61] sm:$0xff] %vm712, %v4695
        %4783 = vst.msk [vmem:[%s2019 + $0x69] sm:$0xff] %vm712, %v4697
        %4784 = vst.msk [vmem:[%s2019 + $0x79] sm:$0xff] %vm712, %v4699
        %4785 = vst.msk [vmem:[%s2019 + $0x81] sm:$0xff] %vm712, %v4701
        %4786 = vst.msk [vmem:[%s2019 + $0x91] sm:$0xff] %vm712, %v4703
        %4787 = vst.msk [vmem:[%s2019 + $0x99] sm:$0xff] %vm712, %v4705
        %4788 = vst.msk [vmem:[%s2019 + $0xa9] sm:$0xff] %vm712, %v4707
        %4789 = vst.msk [vmem:[%s2019 + $0xb1] sm:$0xff] %vm712, %v4709
        %4790 = vst.msk [vmem:[%s2019 + $0xc1] sm:$0xff] %vm712, %v4711
        %4791 = vst.msk [vmem:[%s2019 + $0xc9] sm:$0xff] %vm712, %v4713
        %4792 = vst.msk [vmem:[%s2019 + $0xd9] sm:$0xff] %vm712, %v4715
        %4793 = vst.msk [vmem:[%s2019 + $0xe1] sm:$0xff] %vm712, %v4717
        %4794 = vst.msk [vmem:[%s2019 + $0xf1] sm:$0xff] %vm712, %v4719
        %4795 = vst.msk [vmem:[%s2019 + $0xf9] sm:$0xff] %vm712, %v4721
        %4796 = vst.msk [vmem:[%s2019 + $0x109] sm:$0xff] %vm712, %v4723
        %4797 = vst.msk [vmem:[%s2019 + $0x111] sm:$0xff] %vm712, %v4725
        %4798 = vst.msk [vmem:[%s2019 + $0x121] sm:$0xff] %vm712, %v4727
        %4799 = vst.msk [vmem:[%s2019 + $0x129] sm:$0xff] %vm712, %v4729
        %4800 = vst.msk [vmem:[%s2019 + $0x139] sm:$0xff] %vm712, %v4731
        %4801 = vst.msk [vmem:[%s2019 + $0x141] sm:$0xff] %vm712, %v4733
        %4802 = vst.msk [vmem:[%s2019 + $0x151] sm:$0xff] %vm712, %v4735
        %4803 = vst.msk [vmem:[%s2019 + $0x159] sm:$0xff] %vm712, %v4737
        %4804 = vst.msk [vmem:[%s2019 + $0x169] sm:$0xff] %vm712, %v4739
        %4805 = vst.msk [vmem:[%s2019 + $0x171] sm:$0xff] %vm712, %v4741
        %p4806 = scmp.eq.s32.totalorder %s26, 1
        // Predicated region
        $region37: #{convlstm_forward.1} parent=31 // pred_check
          %p4807 = pneg %p4806
        $region38: #{convlstm_forward.1} parent=31 // pred_check_branch
          %4809 = sbr.rel (%p4807) target = $region40
        $region39: #{convlstm_forward.1} parent=31 // pred_region
          %4810 = vst.msk [vmem:[%s235] sm:$0xff] %vm712, %v4679
          %4811 = vst.msk [vmem:[%s235 + $0x8] sm:$0xff] %vm712, %v4681
          %4812 = vst.msk [vmem:[%s235 + $0x10] sm:$0xff] %vm712, %v4683
          %4813 = vst.msk [vmem:[%s235 + $0x18] sm:$0xff] %vm712, %v4685
          %4814 = vst.msk [vmem:[%s235 + $0x20] sm:$0xff] %vm712, %v4687
          %4815 = vst.msk [vmem:[%s235 + $0x28] sm:$0xff] %vm712, %v4689
          %4816 = vst.msk [vmem:[%s235 + $0x30] sm:$0xff] %vm712, %v4691
          %4817 = vst.msk [vmem:[%s235 + $0x38] sm:$0xff] %vm712, %v4693
          %4818 = vst.msk [vmem:[%s235 + $0x40] sm:$0xff] %vm712, %v4695
          %4819 = vst.msk [vmem:[%s235 + $0x48] sm:$0xff] %vm712, %v4697
          %4820 = vst.msk [vmem:[%s235 + $0x50] sm:$0xff] %vm712, %v4699
          %4821 = vst.msk [vmem:[%s235 + $0x58] sm:$0xff] %vm712, %v4701
          %4822 = vst.msk [vmem:[%s235 + $0x60] sm:$0xff] %vm712, %v4703
          %4823 = vst.msk [vmem:[%s235 + $0x68] sm:$0xff] %vm712, %v4705
          %4824 = vst.msk [vmem:[%s235 + $0x70] sm:$0xff] %vm712, %v4707
          %4825 = vst.msk [vmem:[%s235 + $0x78] sm:$0xff] %vm712, %v4709
          %4826 = vst.msk [vmem:[%s235 + $0x80] sm:$0xff] %vm712, %v4711
          %4827 = vst.msk [vmem:[%s235 + $0x88] sm:$0xff] %vm712, %v4713
          %4828 = vst.msk [vmem:[%s235 + $0x90] sm:$0xff] %vm712, %v4715
          %4829 = vst.msk [vmem:[%s235 + $0x98] sm:$0xff] %vm712, %v4717
          %4830 = vst.msk [vmem:[%s235 + $0xa0] sm:$0xff] %vm712, %v4719
          %4831 = vst.msk [vmem:[%s235 + $0xa8] sm:$0xff] %vm712, %v4721
          %4832 = vst.msk [vmem:[%s235 + $0xb0] sm:$0xff] %vm712, %v4723
          %4833 = vst.msk [vmem:[%s235 + $0xb8] sm:$0xff] %vm712, %v4725
          %4834 = vst.msk [vmem:[%s235 + $0xc0] sm:$0xff] %vm712, %v4727
          %4835 = vst.msk [vmem:[%s235 + $0xc8] sm:$0xff] %vm712, %v4729
          %4836 = vst.msk [vmem:[%s235 + $0xd0] sm:$0xff] %vm712, %v4731
          %4837 = vst.msk [vmem:[%s235 + $0xd8] sm:$0xff] %vm712, %v4733
          %4838 = vst.msk [vmem:[%s235 + $0xe0] sm:$0xff] %vm712, %v4735
          %4839 = vst.msk [vmem:[%s235 + $0xe8] sm:$0xff] %vm712, %v4737
          %4840 = vst.msk [vmem:[%s235 + $0xf0] sm:$0xff] %vm712, %v4739
          %4841 = vst.msk [vmem:[%s235 + $0xf8] sm:$0xff] %vm712, %v4741
          %4842 = vst.msk [vmem:[%s223] sm:$0xff] %vm712, %v4519
          %4843 = vst.msk [vmem:[%s223 + $0x8] sm:$0xff] %vm712, %v4521
          %4844 = vst.msk [vmem:[%s223 + $0x10] sm:$0xff] %vm712, %v4523
          %4845 = vst.msk [vmem:[%s223 + $0x18] sm:$0xff] %vm712, %v4525
          %4846 = vst.msk [vmem:[%s223 + $0x20] sm:$0xff] %vm712, %v4527
          %4847 = vst.msk [vmem:[%s223 + $0x28] sm:$0xff] %vm712, %v4529
          %4848 = vst.msk [vmem:[%s223 + $0x30] sm:$0xff] %vm712, %v4531
          %4849 = vst.msk [vmem:[%s223 + $0x38] sm:$0xff] %vm712, %v4533
          %4850 = vst.msk [vmem:[%s223 + $0x40] sm:$0xff] %vm712, %v4535
          %4851 = vst.msk [vmem:[%s223 + $0x48] sm:$0xff] %vm712, %v4537
          %4852 = vst.msk [vmem:[%s223 + $0x50] sm:$0xff] %vm712, %v4539
          %4853 = vst.msk [vmem:[%s223 + $0x58] sm:$0xff] %vm712, %v4541
          %4854 = vst.msk [vmem:[%s223 + $0x60] sm:$0xff] %vm712, %v4543
          %4855 = vst.msk [vmem:[%s223 + $0x68] sm:$0xff] %vm712, %v4545
          %4856 = vst.msk [vmem:[%s223 + $0x70] sm:$0xff] %vm712, %v4547
          %4857 = vst.msk [vmem:[%s223 + $0x78] sm:$0xff] %vm712, %v4549
          %4858 = vst.msk [vmem:[%s223 + $0x80] sm:$0xff] %vm712, %v4551
          %4859 = vst.msk [vmem:[%s223 + $0x88] sm:$0xff] %vm712, %v4553
          %4860 = vst.msk [vmem:[%s223 + $0x90] sm:$0xff] %vm712, %v4555
          %4861 = vst.msk [vmem:[%s223 + $0x98] sm:$0xff] %vm712, %v4557
          %4862 = vst.msk [vmem:[%s223 + $0xa0] sm:$0xff] %vm712, %v4559
          %4863 = vst.msk [vmem:[%s223 + $0xa8] sm:$0xff] %vm712, %v4561
          %4864 = vst.msk [vmem:[%s223 + $0xb0] sm:$0xff] %vm712, %v4563
          %4865 = vst.msk [vmem:[%s223 + $0xb8] sm:$0xff] %vm712, %v4565
          %4866 = vst.msk [vmem:[%s223 + $0xc0] sm:$0xff] %vm712, %v4567
          %4867 = vst.msk [vmem:[%s223 + $0xc8] sm:$0xff] %vm712, %v4569
          %4868 = vst.msk [vmem:[%s223 + $0xd0] sm:$0xff] %vm712, %v4571
          %4869 = vst.msk [vmem:[%s223 + $0xd8] sm:$0xff] %vm712, %v4573
          %4870 = vst.msk [vmem:[%s223 + $0xe0] sm:$0xff] %vm712, %v4575
          %4871 = vst.msk [vmem:[%s223 + $0xe8] sm:$0xff] %vm712, %v4577
          %4872 = vst.msk [vmem:[%s223 + $0xf0] sm:$0xff] %vm712, %v4579
          %4873 = vst.msk [vmem:[%s223 + $0xf8] sm:$0xff] %vm712, %v4581
        $region40: #{convlstm_forward.1} parent=31 // pred_fallthru
          _
        %s4874 = smul.u32 %s25, 2
        %s4875 = sadd.s32 %s4874, %s24
        %p4876 = scmp.lt.s32.totalorder %s4875, 3
        %s4877 = scalar_select %p4876, %s4875, 3
        %s4878 = smul.addr %s4877, 32
        %s4879 = smul.addr %s4878, 8
        %s4880 = scalar_lea.vmem %s3, %s4879
        %s4881 = sand.u32 %s144, 1
        %s4882 = scalar_lea.sflag [#allocation6], %s4881
        %s4883 = sand.u32 %s144, 1
        %s4884 = smul.addr %s4883, 256
        %s4885 = scalar_lea.vmem [#allocation5], %s4884
        // Predicated region
        $region41: #{convlstm_forward.1} parent=31 // pred_check
          %p4886 = pneg %p128
        $region42: #{convlstm_forward.1} parent=31 // pred_check_branch
          %4888 = sbr.rel (%p4886) target = $region44
        $region43: #{convlstm_forward.1} parent=31 // pred_region
          %s4889 = smul.u32 %s25, 2
          %s4890 = sadd.s32 %s4889, %s24
        $region44: #{convlstm_forward.1} parent=31 // pred_fallthru
          _
        // Predicated region
        $region45: #{convlstm_forward.1} parent=31 // pred_check
          %p4891 = pneg %p154
        $region46: #{convlstm_forward.1} parent=31 // pred_check_branch
          %4893 = sbr.rel (%p4891) target = $region48
        $region47: #{convlstm_forward.1} parent=31 // pred_region
          %s4895 = ssub.s32 4096, 4096
          %4896 = vsyncadd %s4882, %s4895
          %s4897 = smul.addr %s24, 32
          %s4898 = smul.addr %s4897, 128
          %s4899 = scalar_lea.hbm %s4, %s4898
          %s4900 = sshll.u32 %s4885, 4
          %s4901 = int_to_ptr.vmem [resolvable:$true] %s4900
          %4906 = dma.vmem_to_hbm [thread:$0]  %s4901, 4096, %s4899, %s4882, 128, 128, 8
        $region48: #{convlstm_forward.1} parent=31 // pred_fallthru
          _
      $region32: #{convlstm_forward.1} parent=5 // pred_fallthru
        _
      %p4907 = scmp.le.s32.totalorder 2, %s14
      // Predicated region
      $region49: #{convlstm_forward.1} parent=5 // pred_check
        %p4908 = pneg %p4907
      $region50: #{convlstm_forward.1} parent=5 // pred_check_branch
        %4910 = sbr.rel (%p4908) target = $region52
      $region51: #{convlstm_forward.1} parent=5 // pred_region
        %s4911 = ssub.s32 %s14, 2
        // Predicated region
        $region53: #{convlstm_forward.1} parent=51 // pred_check
          %p4912 = pneg %p134
        $region54: #{convlstm_forward.1} parent=51 // pred_check_branch
          %4914 = sbr.rel (%p4912) target = $region56
        $region55: #{convlstm_forward.1} parent=51 // pred_region
          %s4915 = smul.u32 %s28, 2
          %s4916 = sadd.s32 %s4915, %s27
          %p4917 = scmp.lt.s32.totalorder %s4916, 3
          %s4918 = scalar_select %p4917, %s4916, 3
          %s4919 = smul.addr %s4918, 32
          %s4920 = smul.addr %s4919, 8
          %s4921 = scalar_lea.vmem %s3, %s4920
        $region56: #{convlstm_forward.1} parent=51 // pred_fallthru
          _
        // Predicated region
        $region57: #{convlstm_forward.1} parent=51 // pred_check
          %p4922 = pneg %p160
        $region58: #{convlstm_forward.1} parent=51 // pred_check_branch
          %4924 = sbr.rel (%p4922) target = $region60
        $region59: #{convlstm_forward.1} parent=51 // pred_region
          %s4925 = sand.u32 %s145, 1
          %s4926 = scalar_lea.sflag [#allocation6], %s4925
          %s4927 = sand.u32 %s145, 1
          %s4928 = smul.addr %s4927, 256
          %s4929 = scalar_lea.vmem [#allocation5], %s4928
          %4930 = dma.done %s4926, 4096
        $region60: #{convlstm_forward.1} parent=51 // pred_fallthru
          _
      $region52: #{convlstm_forward.1} parent=5 // pred_fallthru
        _
    $region6: #{convlstm_forward.1} parent=1 // loop_footer
      %s18 = sadd.s32 1, %s14
    $region7: #{convlstm_forward.1} parent=1 // loop_footer_branch
      %13 = sbr.rel target = $region3
    $region8: #{convlstm_forward.1} parent=1 // loop_exit
      _
    %4931 = vsyncpa [#allocation6], 1
    %s4932 = scalar_lea.sflag [#allocation6], 1
    %4933 = vsyncpa %s4932, 1

</llo_original>
